<compile_context>
chip_gen: v7x
topology: tpu7x:2x2x1
jax: 0.10.0
libtpu: 0.0.40
codegen_flags: <defaults>
</compile_context>

<pallas_src>
import functools
import math

import jax
import jax.numpy as jnp
from jax.experimental import pallas as pl
from jax.experimental.pallas import tpu as pltpu


def _layernorm(v, w, b, eps=1e-5):
    mu = jnp.mean(v, axis=-1, keepdims=True)
    var = jnp.mean((v - mu) ** 2, axis=-1, keepdims=True)
    return (v - mu) * jax.lax.rsqrt(var + eps) * w + b


def _stable_mish(h):
    # Mish(x) = x * tanh(softplus(x)), with an overflow-safe softplus.
    sp = jnp.where(h > 20.0, h,
                   jnp.log(1.0 + jnp.exp(jnp.where(h > 20.0, 0.0, h))))
    return h * jnp.tanh(sp)


def encoder_block_kernel(
    x_ref, pad_ref,
    ln1w_ref, ln1b_ref,
    wqkv_ref, bqkv_ref, wo_ref, bo_ref,
    ln2w_ref, ln2b_ref,
    w1_ref, b1_ref, w2_ref, b2_ref,
    o_ref,
    *, heads: int, dk: int, compute_dtype, approx_recip: bool,
):
    f32 = jnp.float32
    cdt = compute_dtype
    S, D = x_ref.shape

    x = x_ref[...]                                   # (S, D) f32

    # Additive attention bias from the pad mask, computed ONCE (hoisted out of
    # the per-head loop) and broadcast to (S, S) a single time.
    keep = pad_ref[...] == 0                         # (1, S)
    bias = jnp.broadcast_to(jnp.where(keep, 0.0, -1e30).astype(f32), (S, S))

    # ---- residual[0]: x + MHA(LN(x)) --------------------------------------
    xn = _layernorm(x, ln1w_ref[...], ln1b_ref[...])

    # Fused QKV projection: one MXU op with N = 3D, f32 accumulation.
    qkv = jnp.dot(xn.astype(cdt), wqkv_ref[...].astype(cdt),
                  preferred_element_type=f32) + bqkv_ref[...]
    scale = 1.0 / math.sqrt(dk)
    q = (qkv[:, :D] * scale).astype(cdt)             # fold 1/sqrt(dk) into q
    k = qkv[:, D:2 * D].astype(cdt)
    v = qkv[:, 2 * D:].astype(cdt)
    wo = wo_ref[...].astype(cdt)

    # Accumulate each head's contribution through its slice of wo directly into
    # the residual stream -> no concat / lane relayout.
    x1 = x + bo_ref[...]
    for h in range(heads):                           # static unroll, heads small
        sl = slice(h * dk, (h + 1) * dk)
        s = jax.lax.dot_general(q[:, sl], k[:, sl], (((1,), (1,)), ((), ())),
                                preferred_element_type=f32) + bias     # (S, S)
        m = jnp.max(s, axis=-1, keepdims=True)
        p = jnp.exp(s - m)
        inv_l = pl.reciprocal(jnp.sum(p, axis=-1, keepdims=True),
                              approx=approx_recip)
        ctx = jnp.dot(p.astype(cdt), v[:, sl], preferred_element_type=f32) * inv_l
        x1 = x1 + jnp.dot(ctx.astype(cdt), wo[sl, :], preferred_element_type=f32)

    # ---- residual[1]: x1 + FFN(LN(x1)) -------------------------------------
    xn2 = _layernorm(x1, ln2w_ref[...], ln2b_ref[...])
    h1 = jnp.dot(xn2.astype(cdt), w1_ref[...].astype(cdt),
                 preferred_element_type=f32) + b1_ref[...]
    h1 = _stable_mish(h1)
    ff = jnp.dot(h1.astype(cdt), w2_ref[...].astype(cdt),
                 preferred_element_type=f32) + b2_ref[...]

    o_ref[...] = (x1 + ff).astype(o_ref.dtype)


def encoder_block(x, pad_mask, params, *, heads, fast_math=True):
    B, S, D = x.shape
    dk = D // heads
    pad3 = pad_mask.astype(jnp.int32).reshape(B, 1, S)

    # Fuse q/k/v projection weights once at the call boundary.
    wqkv = jnp.concatenate([params["wq"], params["wk"], params["wv"]], axis=1)
    bqkv = jnp.concatenate([params["bq"], params["bk"], params["bv"]], axis=1)

    # Whole-array VMEM operands: constant across the grid -> single-buffered.
    def vmem():
        return pl.BlockSpec(memory_space=pltpu.MemorySpace.VMEM)

    kernel = functools.partial(
        encoder_block_kernel, heads=heads, dk=dk,
        compute_dtype=jnp.bfloat16 if fast_math else jnp.float32,
        approx_recip=fast_math)

    return pl.pallas_call(
        kernel,
        out_shape=jax.ShapeDtypeStruct((B, S, D), jnp.float32),
        grid=(B,),
        in_specs=[
            pl.BlockSpec((pl.Squeezed(), S, D), lambda b: (b, 0, 0)),  # x
            pl.BlockSpec((pl.Squeezed(), 1, S), lambda b: (b, 0, 0)),  # pad mask
            vmem(), vmem(),          # ln1 w, b
            vmem(), vmem(),          # wqkv, bqkv
            vmem(), vmem(),          # wo, bo
            vmem(), vmem(),          # ln2 w, b
            vmem(), vmem(),          # lin1 w, b
            vmem(), vmem(),          # lin2 w, b
        ],
        out_specs=pl.BlockSpec((pl.Squeezed(), S, D), lambda b: (b, 0, 0)),
        compiler_params=pltpu.CompilerParams(
            dimension_semantics=("parallel",)),
    )(
        x, pad3,
        params["ln1_w"], params["ln1_b"],
        wqkv, bqkv, params["wo"], params["bo"],
        params["ln2_w"], params["ln2_b"],
        params["w1"], params["b1"], params["w2"], params["b2"],
    )


# ---------------- pure-JAX reference (mirrors the PyTorch forward) ----------
def reference(x, pad_mask, params, *, heads):
    B, S, D = x.shape
    dk = D // heads

    def ln(v, w, b):
        mu = v.mean(-1, keepdims=True)
        var = ((v - mu) ** 2).mean(-1, keepdims=True)
        return (v - mu) / jnp.sqrt(var + 1e-5) * w + b

    keep = (~pad_mask)[:, None, None, :]                       # (B,1,1,S)

    xn = ln(x, params["ln1_w"], params["ln1_b"])
    q = xn @ params["wq"] + params["bq"]
    k = xn @ params["wk"] + params["bk"]
    v = xn @ params["wv"] + params["bv"]
    q = q.reshape(B, S, heads, dk).transpose(0, 2, 1, 3)
    k = k.reshape(B, S, heads, dk).transpose(0, 2, 1, 3)
    v = v.reshape(B, S, heads, dk).transpose(0, 2, 1, 3)
    s = q @ k.transpose(0, 1, 3, 2) / math.sqrt(dk)
    s = jnp.where(keep, s, jnp.finfo(jnp.float32).min)
    p = jax.nn.softmax(s, axis=-1)
    a = (p @ v).transpose(0, 2, 1, 3).reshape(B, S, D)
    a = a @ params["wo"] + params["bo"]
    x1 = x + a

    xn2 = ln(x1, params["ln2_w"], params["ln2_b"])
    h1 = xn2 @ params["w1"] + params["b1"]
    h1 = h1 * jnp.tanh(jax.nn.softplus(h1))
    ff = h1 @ params["w2"] + params["b2"]
    return x1 + ff


if __name__ == "__main__":
    # Lane-dense shapes: S, D, HID are multiples of 128 (feedback item on layout).
    B, S, D, HEADS, HID = 2, 128, 128, 4, 256

    key = jax.random.PRNGKey(0)
    ks = jax.random.split(key, 16)

    def w(k_, shape, scale=0.05):
        return (scale * jax.random.normal(k_, shape)).astype(jnp.float32)

    params = {
        "ln1_w": jnp.ones((1, D), jnp.float32), "ln1_b": jnp.zeros((1, D), jnp.float32),
        "wq": w(ks[0], (D, D)), "bq": w(ks[1], (1, D)),
        "wk": w(ks[2], (D, D)), "bk": w(ks[3], (1, D)),
        "wv": w(ks[4], (D, D)), "bv": w(ks[5], (1, D)),
        "wo": w(ks[6], (D, D)), "bo": w(ks[7], (1, D)),
        "ln2_w": jnp.ones((1, D), jnp.float32), "ln2_b": jnp.zeros((1, D), jnp.float32),
        "w1": w(ks[8], (D, HID)), "b1": w(ks[9], (1, HID)),
        "w2": w(ks[10], (HID, D)), "b2": w(ks[11], (1, D)),
    }

    x = jax.random.normal(ks[12], (B, S, D), dtype=jnp.float32)
    # padMask: True where token is padding.  Batch 0 has no padding, batch 1
    # pads its last 40 positions.
    valid_len = jnp.array([S, S - 40])
    pad_mask = jnp.arange(S)[None, :] >= valid_len[:, None]    # (B, S) bool

    ref = reference(x, pad_mask, params, heads=HEADS)

    # f32 (exact) mode: strict agreement with the f32 reference.
    out_f32 = jax.block_until_ready(
        encoder_block(x, pad_mask, params, heads=HEADS, fast_math=False))
    assert jnp.allclose(out_f32, ref, atol=2e-3, rtol=2e-3), (
        "f32 mode mismatch", float(jnp.max(jnp.abs(out_f32 - ref))))

    # bf16 fast-math mode (MXU-native operands, f32 accumulation): loose tolerance.
    out_bf16 = jax.block_until_ready(
        encoder_block(x, pad_mask, params, heads=HEADS, fast_math=True))
    assert jnp.allclose(out_bf16, ref, atol=2e-2, rtol=2e-2), (
        "bf16 fast-math mode mismatch", float(jnp.max(jnp.abs(out_bf16 - ref))))

    print("KERNEL_OK")
</pallas_src>

<mosaic_0001>
module attributes {stable_mosaic.version = 11 : i64} {
  func.func @encoder_block_kernel(%arg0: i32, %arg1: memref<1x128x128xf32, #tpu.memory_space<vmem>>, %arg2: memref<1x1x128xi32, #tpu.memory_space<vmem>>, %arg3: memref<1x128xf32, #tpu.memory_space<vmem>>, %arg4: memref<1x128xf32, #tpu.memory_space<vmem>>, %arg5: memref<128x384xf32, #tpu.memory_space<vmem>>, %arg6: memref<1x384xf32, #tpu.memory_space<vmem>>, %arg7: memref<128x128xf32, #tpu.memory_space<vmem>>, %arg8: memref<1x128xf32, #tpu.memory_space<vmem>>, %arg9: memref<1x128xf32, #tpu.memory_space<vmem>>, %arg10: memref<1x128xf32, #tpu.memory_space<vmem>>, %arg11: memref<128x256xf32, #tpu.memory_space<vmem>>, %arg12: memref<1x256xf32, #tpu.memory_space<vmem>>, %arg13: memref<256x128xf32, #tpu.memory_space<vmem>>, %arg14: memref<1x128xf32, #tpu.memory_space<vmem>>, %arg15: memref<1x128x128xf32, #tpu.memory_space<vmem>>) attributes {dimension_semantics = [#tpu.dimension_semantics<parallel>], iteration_bounds = array<i64: 2>, scalar_prefetch = 0 : i64, scratch_operands = 0 : i64, tpu.core_type = #tpu.core_type<tc>, window_params = [{transform_indices = @transform_0, window_bounds = array<i64: 1, 128, 128>}, {transform_indices = @transform_1, window_bounds = array<i64: 1, 1, 128>}, {pipeline_mode = #tpu.pipeline_mode<synchronous>, transform_indices = @transform_2, window_bounds = array<i64: 1, 128>}, {pipeline_mode = #tpu.pipeline_mode<synchronous>, transform_indices = @transform_3, window_bounds = array<i64: 1, 128>}, {pipeline_mode = #tpu.pipeline_mode<synchronous>, transform_indices = @transform_4, window_bounds = array<i64: 128, 384>}, {pipeline_mode = #tpu.pipeline_mode<synchronous>, transform_indices = @transform_5, window_bounds = array<i64: 1, 384>}, {pipeline_mode = #tpu.pipeline_mode<synchronous>, transform_indices = @transform_6, window_bounds = array<i64: 128, 128>}, {pipeline_mode = #tpu.pipeline_mode<synchronous>, transform_indices = @transform_7, window_bounds = array<i64: 1, 128>}, {pipeline_mode = #tpu.pipeline_mode<synchronous>, transform_indices = @transform_8, window_bounds = array<i64: 1, 128>}, {pipeline_mode = #tpu.pipeline_mode<synchronous>, transform_indices = @transform_9, window_bounds = array<i64: 1, 128>}, {pipeline_mode = #tpu.pipeline_mode<synchronous>, transform_indices = @transform_10, window_bounds = array<i64: 128, 256>}, {pipeline_mode = #tpu.pipeline_mode<synchronous>, transform_indices = @transform_11, window_bounds = array<i64: 1, 256>}, {pipeline_mode = #tpu.pipeline_mode<synchronous>, transform_indices = @transform_12, window_bounds = array<i64: 256, 128>}, {pipeline_mode = #tpu.pipeline_mode<synchronous>, transform_indices = @transform_13, window_bounds = array<i64: 1, 128>}, {transform_indices = @transform_14, window_bounds = array<i64: 1, 128, 128>}]} {
    %c0 = arith.constant 0 : index
    %c0_0 = arith.constant 0 : index
    %c0_1 = arith.constant 0 : index
    %0 = vector.load %arg1[%c0, %c0_0, %c0_1] : memref<1x128x128xf32, #tpu.memory_space<vmem>>, vector<1x128x128xf32>
    %1 = vector.shape_cast %0 : vector<1x128x128xf32> to vector<128x128xf32>
    %c0_2 = arith.constant 0 : index
    %c0_3 = arith.constant 0 : index
    %c0_4 = arith.constant 0 : index
    %2 = vector.load %arg2[%c0_2, %c0_3, %c0_4] : memref<1x1x128xi32, #tpu.memory_space<vmem>>, vector<1x1x128xi32>
    %3 = vector.shape_cast %2 : vector<1x1x128xi32> to vector<1x128xi32>
    %c0_i32 = arith.constant 0 : i32
    %4 = vector.broadcast %c0_i32 : i32 to vector<1x128xi32>
    %5 = arith.cmpi eq, %3, %4 : vector<1x128xi32>
    %cst = arith.constant 0.000000e+00 : f32
    %cst_5 = arith.constant -1.000000e+30 : f32
    %6 = vector.broadcast %cst : f32 to vector<1x128xf32>
    %7 = vector.broadcast %cst_5 : f32 to vector<1x128xf32>
    %8 = arith.select %5, %6, %7 : vector<1x128xi1>, vector<1x128xf32>
    %9 = vector.shape_cast %8 : vector<1x128xf32> to vector<1x128xf32>
    %10 = vector.broadcast %9 : vector<1x128xf32> to vector<128x128xf32>
    %c0_6 = arith.constant 0 : index
    %c0_7 = arith.constant 0 : index
    %11 = vector.load %arg3[%c0_6, %c0_7] : memref<1x128xf32, #tpu.memory_space<vmem>>, vector<1x128xf32>
    %c0_8 = arith.constant 0 : index
    %c0_9 = arith.constant 0 : index
    %12 = vector.load %arg4[%c0_8, %c0_9] : memref<1x128xf32, #tpu.memory_space<vmem>>, vector<1x128xf32>
    %cst_10 = arith.constant dense<0.000000e+00> : vector<128xf32>
    %13 = vector.multi_reduction <add>, %1, %cst_10 [1] : vector<128x128xf32> to vector<128xf32>
    %14 = vector.shape_cast %13 : vector<128xf32> to vector<128x1xf32>
    %cst_11 = arith.constant 1.280000e+02 : f32
    %15 = vector.broadcast %cst_11 : f32 to vector<128x1xf32>
    %16 = arith.divf %14, %15 : vector<128x1xf32>
    %17 = vector.broadcast %16 : vector<128x1xf32> to vector<128x128xf32>
    %18 = arith.subf %1, %17 : vector<128x128xf32>
    %19 = arith.mulf %18, %18 : vector<128x128xf32>
    %cst_12 = arith.constant dense<0.000000e+00> : vector<128xf32>
    %20 = vector.multi_reduction <add>, %19, %cst_12 [1] : vector<128x128xf32> to vector<128xf32>
    %21 = vector.shape_cast %20 : vector<128xf32> to vector<128x1xf32>
    %cst_13 = arith.constant 1.280000e+02 : f32
    %22 = vector.broadcast %cst_13 : f32 to vector<128x1xf32>
    %23 = arith.divf %21, %22 : vector<128x1xf32>
    %24 = vector.broadcast %16 : vector<128x1xf32> to vector<128x128xf32>
    %25 = arith.subf %1, %24 : vector<128x128xf32>
    %cst_14 = arith.constant 9.99999974E-6 : f32
    %26 = vector.broadcast %cst_14 : f32 to vector<128x1xf32>
    %27 = arith.addf %23, %26 : vector<128x1xf32>
    %28 = math.rsqrt %27 : vector<128x1xf32>
    %29 = vector.broadcast %28 : vector<128x1xf32> to vector<128x128xf32>
    %30 = arith.mulf %25, %29 : vector<128x128xf32>
    %31 = vector.broadcast %11 : vector<1x128xf32> to vector<128x128xf32>
    %32 = arith.mulf %30, %31 : vector<128x128xf32>
    %33 = vector.broadcast %12 : vector<1x128xf32> to vector<128x128xf32>
    %34 = arith.addf %32, %33 : vector<128x128xf32>
    %c0_15 = arith.constant 0 : index
    %c0_16 = arith.constant 0 : index
    %35 = vector.load %arg5[%c0_15, %c0_16] : memref<128x384xf32, #tpu.memory_space<vmem>>, vector<128x384xf32>
    %cst_17 = arith.constant dense<0.000000e+00> : vector<128x384xf32>
    %36 = tpu.matmul %34, %35, %cst_17 {dimension_numbers = #tpu.dot_dimension_numbers<[1], [0], [0], [1], [0, 0, 1, 1], [], []>} : vector<128x128xf32>, vector<128x384xf32>, vector<128x384xf32> -> vector<128x384xf32>
    %c0_18 = arith.constant 0 : index
    %c0_19 = arith.constant 0 : index
    %37 = vector.load %arg6[%c0_18, %c0_19] : memref<1x384xf32, #tpu.memory_space<vmem>>, vector<1x384xf32>
    %38 = vector.broadcast %37 : vector<1x384xf32> to vector<128x384xf32>
    %39 = arith.addf %36, %38 : vector<128x384xf32>
    %40 = vector.extract_strided_slice %39 {offsets = [0, 0], sizes = [128, 128], strides = [1, 1]} : vector<128x384xf32> to vector<128x128xf32>
    %cst_20 = arith.constant 0.176776692 : f32
    %41 = vector.broadcast %cst_20 : f32 to vector<128x128xf32>
    %42 = arith.mulf %40, %41 : vector<128x128xf32>
    %43 = vector.extract_strided_slice %39 {offsets = [0, 128], sizes = [128, 128], strides = [1, 1]} : vector<128x384xf32> to vector<128x128xf32>
    %44 = vector.extract_strided_slice %39 {offsets = [0, 256], sizes = [128, 128], strides = [1, 1]} : vector<128x384xf32> to vector<128x128xf32>
    %c0_21 = arith.constant 0 : index
    %c0_22 = arith.constant 0 : index
    %45 = vector.load %arg7[%c0_21, %c0_22] : memref<128x128xf32, #tpu.memory_space<vmem>>, vector<128x128xf32>
    %c0_23 = arith.constant 0 : index
    %c0_24 = arith.constant 0 : index
    %46 = vector.load %arg8[%c0_23, %c0_24] : memref<1x128xf32, #tpu.memory_space<vmem>>, vector<1x128xf32>
    %47 = vector.broadcast %46 : vector<1x128xf32> to vector<128x128xf32>
    %48 = arith.addf %1, %47 : vector<128x128xf32>
    %49 = vector.extract_strided_slice %42 {offsets = [0, 0], sizes = [128, 32], strides = [1, 1]} : vector<128x128xf32> to vector<128x32xf32>
    %50 = vector.extract_strided_slice %43 {offsets = [0, 0], sizes = [128, 32], strides = [1, 1]} : vector<128x128xf32> to vector<128x32xf32>
    %cst_25 = arith.constant dense<0.000000e+00> : vector<128x128xf32>
    %51 = tpu.matmul %49, %50, %cst_25 {dimension_numbers = #tpu.dot_dimension_numbers<[1], [1], [0], [0], [0, 0, 1, 0], [], []>} : vector<128x32xf32>, vector<128x32xf32>, vector<128x128xf32> -> vector<128x128xf32>
    %52 = arith.addf %51, %10 : vector<128x128xf32>
    %cst_26 = arith.constant dense<0xFF800000> : vector<128xf32>
    %53 = vector.multi_reduction <maximumf>, %52, %cst_26 [1] : vector<128x128xf32> to vector<128xf32>
    %54 = vector.shape_cast %53 : vector<128xf32> to vector<128x1xf32>
    %55 = vector.broadcast %54 : vector<128x1xf32> to vector<128x128xf32>
    %56 = arith.subf %52, %55 : vector<128x128xf32>
    %57 = math.exp %56 : vector<128x128xf32>
    %cst_27 = arith.constant dense<0.000000e+00> : vector<128xf32>
    %58 = vector.multi_reduction <add>, %57, %cst_27 [1] : vector<128x128xf32> to vector<128xf32>
    %59 = vector.shape_cast %58 : vector<128xf32> to vector<128x1xf32>
    %60 = tpu.reciprocal %59 : vector<128x1xf32> -> vector<128x1xf32>
    %61 = vector.extract_strided_slice %44 {offsets = [0, 0], sizes = [128, 32], strides = [1, 1]} : vector<128x128xf32> to vector<128x32xf32>
    %cst_28 = arith.constant dense<0.000000e+00> : vector<128x32xf32>
    %62 = tpu.matmul %57, %61, %cst_28 {dimension_numbers = #tpu.dot_dimension_numbers<[1], [0], [0], [1], [0, 0, 1, 1], [], []>} : vector<128x128xf32>, vector<128x32xf32>, vector<128x32xf32> -> vector<128x32xf32>
    %63 = vector.broadcast %60 : vector<128x1xf32> to vector<128x32xf32>
    %64 = arith.mulf %62, %63 : vector<128x32xf32>
    %65 = vector.extract_strided_slice %45 {offsets = [0, 0], sizes = [32, 128], strides = [1, 1]} : vector<128x128xf32> to vector<32x128xf32>
    %cst_29 = arith.constant dense<0.000000e+00> : vector<128x128xf32>
    %66 = tpu.matmul %64, %65, %cst_29 {dimension_numbers = #tpu.dot_dimension_numbers<[1], [0], [0], [1], [0, 0, 1, 1], [], []>} : vector<128x32xf32>, vector<32x128xf32>, vector<128x128xf32> -> vector<128x128xf32>
    %67 = arith.addf %48, %66 : vector<128x128xf32>
    %68 = vector.extract_strided_slice %42 {offsets = [0, 32], sizes = [128, 32], strides = [1, 1]} : vector<128x128xf32> to vector<128x32xf32>
    %69 = vector.extract_strided_slice %43 {offsets = [0, 32], sizes = [128, 32], strides = [1, 1]} : vector<128x128xf32> to vector<128x32xf32>
    %cst_30 = arith.constant dense<0.000000e+00> : vector<128x128xf32>
    %70 = tpu.matmul %68, %69, %cst_30 {dimension_numbers = #tpu.dot_dimension_numbers<[1], [1], [0], [0], [0, 0, 1, 0], [], []>} : vector<128x32xf32>, vector<128x32xf32>, vector<128x128xf32> -> vector<128x128xf32>
    %71 = arith.addf %70, %10 : vector<128x128xf32>
    %cst_31 = arith.constant dense<0xFF800000> : vector<128xf32>
    %72 = vector.multi_reduction <maximumf>, %71, %cst_31 [1] : vector<128x128xf32> to vector<128xf32>
    %73 = vector.shape_cast %72 : vector<128xf32> to vector<128x1xf32>
    %74 = vector.broadcast %73 : vector<128x1xf32> to vector<128x128xf32>
    %75 = arith.subf %71, %74 : vector<128x128xf32>
    %76 = math.exp %75 : vector<128x128xf32>
    %cst_32 = arith.constant dense<0.000000e+00> : vector<128xf32>
    %77 = vector.multi_reduction <add>, %76, %cst_32 [1] : vector<128x128xf32> to vector<128xf32>
    %78 = vector.shape_cast %77 : vector<128xf32> to vector<128x1xf32>
    %79 = tpu.reciprocal %78 : vector<128x1xf32> -> vector<128x1xf32>
    %80 = vector.extract_strided_slice %44 {offsets = [0, 32], sizes = [128, 32], strides = [1, 1]} : vector<128x128xf32> to vector<128x32xf32>
    %cst_33 = arith.constant dense<0.000000e+00> : vector<128x32xf32>
    %81 = tpu.matmul %76, %80, %cst_33 {dimension_numbers = #tpu.dot_dimension_numbers<[1], [0], [0], [1], [0, 0, 1, 1], [], []>} : vector<128x128xf32>, vector<128x32xf32>, vector<128x32xf32> -> vector<128x32xf32>
    %82 = vector.broadcast %79 : vector<128x1xf32> to vector<128x32xf32>
    %83 = arith.mulf %81, %82 : vector<128x32xf32>
    %84 = vector.extract_strided_slice %45 {offsets = [32, 0], sizes = [32, 128], strides = [1, 1]} : vector<128x128xf32> to vector<32x128xf32>
    %cst_34 = arith.constant dense<0.000000e+00> : vector<128x128xf32>
    %85 = tpu.matmul %83, %84, %cst_34 {dimension_numbers = #tpu.dot_dimension_numbers<[1], [0], [0], [1], [0, 0, 1, 1], [], []>} : vector<128x32xf32>, vector<32x128xf32>, vector<128x128xf32> -> vector<128x128xf32>
    %86 = arith.addf %67, %85 : vector<128x128xf32>
    %87 = vector.extract_strided_slice %42 {offsets = [0, 64], sizes = [128, 32], strides = [1, 1]} : vector<128x128xf32> to vector<128x32xf32>
    %88 = vector.extract_strided_slice %43 {offsets = [0, 64], sizes = [128, 32], strides = [1, 1]} : vector<128x128xf32> to vector<128x32xf32>
    %cst_35 = arith.constant dense<0.000000e+00> : vector<128x128xf32>
    %89 = tpu.matmul %87, %88, %cst_35 {dimension_numbers = #tpu.dot_dimension_numbers<[1], [1], [0], [0], [0, 0, 1, 0], [], []>} : vector<128x32xf32>, vector<128x32xf32>, vector<128x128xf32> -> vector<128x128xf32>
    %90 = arith.addf %89, %10 : vector<128x128xf32>
    %cst_36 = arith.constant dense<0xFF800000> : vector<128xf32>
    %91 = vector.multi_reduction <maximumf>, %90, %cst_36 [1] : vector<128x128xf32> to vector<128xf32>
    %92 = vector.shape_cast %91 : vector<128xf32> to vector<128x1xf32>
    %93 = vector.broadcast %92 : vector<128x1xf32> to vector<128x128xf32>
    %94 = arith.subf %90, %93 : vector<128x128xf32>
    %95 = math.exp %94 : vector<128x128xf32>
    %cst_37 = arith.constant dense<0.000000e+00> : vector<128xf32>
    %96 = vector.multi_reduction <add>, %95, %cst_37 [1] : vector<128x128xf32> to vector<128xf32>
    %97 = vector.shape_cast %96 : vector<128xf32> to vector<128x1xf32>
    %98 = tpu.reciprocal %97 : vector<128x1xf32> -> vector<128x1xf32>
    %99 = vector.extract_strided_slice %44 {offsets = [0, 64], sizes = [128, 32], strides = [1, 1]} : vector<128x128xf32> to vector<128x32xf32>
    %cst_38 = arith.constant dense<0.000000e+00> : vector<128x32xf32>
    %100 = tpu.matmul %95, %99, %cst_38 {dimension_numbers = #tpu.dot_dimension_numbers<[1], [0], [0], [1], [0, 0, 1, 1], [], []>} : vector<128x128xf32>, vector<128x32xf32>, vector<128x32xf32> -> vector<128x32xf32>
    %101 = vector.broadcast %98 : vector<128x1xf32> to vector<128x32xf32>
    %102 = arith.mulf %100, %101 : vector<128x32xf32>
    %103 = vector.extract_strided_slice %45 {offsets = [64, 0], sizes = [32, 128], strides = [1, 1]} : vector<128x128xf32> to vector<32x128xf32>
    %cst_39 = arith.constant dense<0.000000e+00> : vector<128x128xf32>
    %104 = tpu.matmul %102, %103, %cst_39 {dimension_numbers = #tpu.dot_dimension_numbers<[1], [0], [0], [1], [0, 0, 1, 1], [], []>} : vector<128x32xf32>, vector<32x128xf32>, vector<128x128xf32> -> vector<128x128xf32>
    %105 = arith.addf %86, %104 : vector<128x128xf32>
    %106 = vector.extract_strided_slice %42 {offsets = [0, 96], sizes = [128, 32], strides = [1, 1]} : vector<128x128xf32> to vector<128x32xf32>
    %107 = vector.extract_strided_slice %43 {offsets = [0, 96], sizes = [128, 32], strides = [1, 1]} : vector<128x128xf32> to vector<128x32xf32>
    %cst_40 = arith.constant dense<0.000000e+00> : vector<128x128xf32>
    %108 = tpu.matmul %106, %107, %cst_40 {dimension_numbers = #tpu.dot_dimension_numbers<[1], [1], [0], [0], [0, 0, 1, 0], [], []>} : vector<128x32xf32>, vector<128x32xf32>, vector<128x128xf32> -> vector<128x128xf32>
    %109 = arith.addf %108, %10 : vector<128x128xf32>
    %cst_41 = arith.constant dense<0xFF800000> : vector<128xf32>
    %110 = vector.multi_reduction <maximumf>, %109, %cst_41 [1] : vector<128x128xf32> to vector<128xf32>
    %111 = vector.shape_cast %110 : vector<128xf32> to vector<128x1xf32>
    %112 = vector.broadcast %111 : vector<128x1xf32> to vector<128x128xf32>
    %113 = arith.subf %109, %112 : vector<128x128xf32>
    %114 = math.exp %113 : vector<128x128xf32>
    %cst_42 = arith.constant dense<0.000000e+00> : vector<128xf32>
    %115 = vector.multi_reduction <add>, %114, %cst_42 [1] : vector<128x128xf32> to vector<128xf32>
    %116 = vector.shape_cast %115 : vector<128xf32> to vector<128x1xf32>
    %117 = tpu.reciprocal %116 : vector<128x1xf32> -> vector<128x1xf32>
    %118 = vector.extract_strided_slice %44 {offsets = [0, 96], sizes = [128, 32], strides = [1, 1]} : vector<128x128xf32> to vector<128x32xf32>
    %cst_43 = arith.constant dense<0.000000e+00> : vector<128x32xf32>
    %119 = tpu.matmul %114, %118, %cst_43 {dimension_numbers = #tpu.dot_dimension_numbers<[1], [0], [0], [1], [0, 0, 1, 1], [], []>} : vector<128x128xf32>, vector<128x32xf32>, vector<128x32xf32> -> vector<128x32xf32>
    %120 = vector.broadcast %117 : vector<128x1xf32> to vector<128x32xf32>
    %121 = arith.mulf %119, %120 : vector<128x32xf32>
    %122 = vector.extract_strided_slice %45 {offsets = [96, 0], sizes = [32, 128], strides = [1, 1]} : vector<128x128xf32> to vector<32x128xf32>
    %cst_44 = arith.constant dense<0.000000e+00> : vector<128x128xf32>
    %123 = tpu.matmul %121, %122, %cst_44 {dimension_numbers = #tpu.dot_dimension_numbers<[1], [0], [0], [1], [0, 0, 1, 1], [], []>} : vector<128x32xf32>, vector<32x128xf32>, vector<128x128xf32> -> vector<128x128xf32>
    %124 = arith.addf %105, %123 : vector<128x128xf32>
    %c0_45 = arith.constant 0 : index
    %c0_46 = arith.constant 0 : index
    %125 = vector.load %arg9[%c0_45, %c0_46] : memref<1x128xf32, #tpu.memory_space<vmem>>, vector<1x128xf32>
    %c0_47 = arith.constant 0 : index
    %c0_48 = arith.constant 0 : index
    %126 = vector.load %arg10[%c0_47, %c0_48] : memref<1x128xf32, #tpu.memory_space<vmem>>, vector<1x128xf32>
    %cst_49 = arith.constant dense<0.000000e+00> : vector<128xf32>
    %127 = vector.multi_reduction <add>, %124, %cst_49 [1] : vector<128x128xf32> to vector<128xf32>
    %128 = vector.shape_cast %127 : vector<128xf32> to vector<128x1xf32>
    %cst_50 = arith.constant 1.280000e+02 : f32
    %129 = vector.broadcast %cst_50 : f32 to vector<128x1xf32>
    %130 = arith.divf %128, %129 : vector<128x1xf32>
    %131 = vector.broadcast %130 : vector<128x1xf32> to vector<128x128xf32>
    %132 = arith.subf %124, %131 : vector<128x128xf32>
    %133 = arith.mulf %132, %132 : vector<128x128xf32>
    %cst_51 = arith.constant dense<0.000000e+00> : vector<128xf32>
    %134 = vector.multi_reduction <add>, %133, %cst_51 [1] : vector<128x128xf32> to vector<128xf32>
    %135 = vector.shape_cast %134 : vector<128xf32> to vector<128x1xf32>
    %cst_52 = arith.constant 1.280000e+02 : f32
    %136 = vector.broadcast %cst_52 : f32 to vector<128x1xf32>
    %137 = arith.divf %135, %136 : vector<128x1xf32>
    %138 = vector.broadcast %130 : vector<128x1xf32> to vector<128x128xf32>
    %139 = arith.subf %124, %138 : vector<128x128xf32>
    %cst_53 = arith.constant 9.99999974E-6 : f32
    %140 = vector.broadcast %cst_53 : f32 to vector<128x1xf32>
    %141 = arith.addf %137, %140 : vector<128x1xf32>
    %142 = math.rsqrt %141 : vector<128x1xf32>
    %143 = vector.broadcast %142 : vector<128x1xf32> to vector<128x128xf32>
    %144 = arith.mulf %139, %143 : vector<128x128xf32>
    %145 = vector.broadcast %125 : vector<1x128xf32> to vector<128x128xf32>
    %146 = arith.mulf %144, %145 : vector<128x128xf32>
    %147 = vector.broadcast %126 : vector<1x128xf32> to vector<128x128xf32>
    %148 = arith.addf %146, %147 : vector<128x128xf32>
    %c0_54 = arith.constant 0 : index
    %c0_55 = arith.constant 0 : index
    %149 = vector.load %arg11[%c0_54, %c0_55] : memref<128x256xf32, #tpu.memory_space<vmem>>, vector<128x256xf32>
    %cst_56 = arith.constant dense<0.000000e+00> : vector<128x256xf32>
    %150 = tpu.matmul %148, %149, %cst_56 {dimension_numbers = #tpu.dot_dimension_numbers<[1], [0], [0], [1], [0, 0, 1, 1], [], []>} : vector<128x128xf32>, vector<128x256xf32>, vector<128x256xf32> -> vector<128x256xf32>
    %c0_57 = arith.constant 0 : index
    %c0_58 = arith.constant 0 : index
    %151 = vector.load %arg12[%c0_57, %c0_58] : memref<1x256xf32, #tpu.memory_space<vmem>>, vector<1x256xf32>
    %152 = vector.broadcast %151 : vector<1x256xf32> to vector<128x256xf32>
    %153 = arith.addf %150, %152 : vector<128x256xf32>
    %cst_59 = arith.constant 2.000000e+01 : f32
    %154 = vector.broadcast %cst_59 : f32 to vector<128x256xf32>
    %155 = arith.cmpf ogt, %153, %154 : vector<128x256xf32>
    %cst_60 = arith.constant 2.000000e+01 : f32
    %156 = vector.broadcast %cst_60 : f32 to vector<128x256xf32>
    %157 = arith.cmpf ogt, %153, %156 : vector<128x256xf32>
    %cst_61 = arith.constant 0.000000e+00 : f32
    %158 = vector.broadcast %cst_61 : f32 to vector<128x256xf32>
    %159 = arith.select %157, %158, %153 : vector<128x256xi1>, vector<128x256xf32>
    %160 = math.exp %159 : vector<128x256xf32>
    %cst_62 = arith.constant 1.000000e+00 : f32
    %161 = vector.broadcast %cst_62 : f32 to vector<128x256xf32>
    %162 = arith.addf %161, %160 : vector<128x256xf32>
    %163 = math.log %162 : vector<128x256xf32>
    %164 = arith.select %155, %153, %163 : vector<128x256xi1>, vector<128x256xf32>
    %165 = math.tanh %164 : vector<128x256xf32>
    %166 = arith.mulf %153, %165 : vector<128x256xf32>
    %c0_63 = arith.constant 0 : index
    %c0_64 = arith.constant 0 : index
    %167 = vector.load %arg13[%c0_63, %c0_64] : memref<256x128xf32, #tpu.memory_space<vmem>>, vector<256x128xf32>
    %cst_65 = arith.constant dense<0.000000e+00> : vector<128x128xf32>
    %168 = tpu.matmul %166, %167, %cst_65 {dimension_numbers = #tpu.dot_dimension_numbers<[1], [0], [0], [1], [0, 0, 1, 1], [], []>} : vector<128x256xf32>, vector<256x128xf32>, vector<128x128xf32> -> vector<128x128xf32>
    %c0_66 = arith.constant 0 : index
    %c0_67 = arith.constant 0 : index
    %169 = vector.load %arg14[%c0_66, %c0_67] : memref<1x128xf32, #tpu.memory_space<vmem>>, vector<1x128xf32>
    %170 = vector.broadcast %169 : vector<1x128xf32> to vector<128x128xf32>
    %171 = arith.addf %168, %170 : vector<128x128xf32>
    %172 = arith.addf %124, %171 : vector<128x128xf32>
    %c0_68 = arith.constant 0 : index
    %c0_69 = arith.constant 0 : index
    %c0_70 = arith.constant 0 : index
    %173 = vector.load %arg15[%c0_68, %c0_69, %c0_70] : memref<1x128x128xf32, #tpu.memory_space<vmem>>, vector<1x128x128xf32>
    %174 = vector.shape_cast %173 : vector<1x128x128xf32> to vector<128x128xf32>
    %175 = vector.shape_cast %172 : vector<128x128xf32> to vector<1x128x128xf32>
    tpu.vector_store %arg15[%c0_68, %c0_69, %c0_70], %175 {strides = array<i32>} : memref<1x128x128xf32, #tpu.memory_space<vmem>>, vector<1x128x128xf32>,
    return
  }
  func.func @transform_0(%arg0: i32) -> (i32, i32, i32) {
    %c0_i32 = arith.constant 0 : i32
    %c0_i32_0 = arith.constant 0 : i32
    %c0_i32_1 = arith.constant 0 : i32
    return %arg0, %c0_i32, %c0_i32_0 : i32, i32, i32
  }
  func.func @transform_1(%arg0: i32) -> (i32, i32, i32) {
    %c0_i32 = arith.constant 0 : i32
    %c0_i32_0 = arith.constant 0 : i32
    %c0_i32_1 = arith.constant 0 : i32
    return %arg0, %c0_i32, %c0_i32_0 : i32, i32, i32
  }
  func.func @transform_2(%arg0: i32) -> (i32, i32) {
    %c0_i32 = arith.constant 0 : i32
    %c0_i32_0 = arith.constant 0 : i32
    %c0_i32_1 = arith.constant 0 : i32
    return %c0_i32, %c0_i32_0 : i32, i32
  }
  func.func @transform_3(%arg0: i32) -> (i32, i32) {
    %c0_i32 = arith.constant 0 : i32
    %c0_i32_0 = arith.constant 0 : i32
    %c0_i32_1 = arith.constant 0 : i32
    return %c0_i32, %c0_i32_0 : i32, i32
  }
  func.func @transform_4(%arg0: i32) -> (i32, i32) {
    %c0_i32 = arith.constant 0 : i32
    %c0_i32_0 = arith.constant 0 : i32
    %c0_i32_1 = arith.constant 0 : i32
    return %c0_i32, %c0_i32_0 : i32, i32
  }
  func.func @transform_5(%arg0: i32) -> (i32, i32) {
    %c0_i32 = arith.constant 0 : i32
    %c0_i32_0 = arith.constant 0 : i32
    %c0_i32_1 = arith.constant 0 : i32
    return %c0_i32, %c0_i32_0 : i32, i32
  }
  func.func @transform_6(%arg0: i32) -> (i32, i32) {
    %c0_i32 = arith.constant 0 : i32
    %c0_i32_0 = arith.constant 0 : i32
    %c0_i32_1 = arith.constant 0 : i32
    return %c0_i32, %c0_i32_0 : i32, i32
  }
  func.func @transform_7(%arg0: i32) -> (i32, i32) {
    %c0_i32 = arith.constant 0 : i32
    %c0_i32_0 = arith.constant 0 : i32
    %c0_i32_1 = arith.constant 0 : i32
    return %c0_i32, %c0_i32_0 : i32, i32
  }
  func.func @transform_8(%arg0: i32) -> (i32, i32) {
    %c0_i32 = arith.constant 0 : i32
    %c0_i32_0 = arith.constant 0 : i32
    %c0_i32_1 = arith.constant 0 : i32
    return %c0_i32, %c0_i32_0 : i32, i32
  }
  func.func @transform_9(%arg0: i32) -> (i32, i32) {
    %c0_i32 = arith.constant 0 : i32
    %c0_i32_0 = arith.constant 0 : i32
    %c0_i32_1 = arith.constant 0 : i32
    return %c0_i32, %c0_i32_0 : i32, i32
  }
  func.func @transform_10(%arg0: i32) -> (i32, i32) {
    %c0_i32 = arith.constant 0 : i32
    %c0_i32_0 = arith.constant 0 : i32
    %c0_i32_1 = arith.constant 0 : i32
    return %c0_i32, %c0_i32_0 : i32, i32
  }
  func.func @transform_11(%arg0: i32) -> (i32, i32) {
    %c0_i32 = arith.constant 0 : i32
    %c0_i32_0 = arith.constant 0 : i32
    %c0_i32_1 = arith.constant 0 : i32
    return %c0_i32, %c0_i32_0 : i32, i32
  }
  func.func @transform_12(%arg0: i32) -> (i32, i32) {
    %c0_i32 = arith.constant 0 : i32
    %c0_i32_0 = arith.constant 0 : i32
    %c0_i32_1 = arith.constant 0 : i32
    return %c0_i32, %c0_i32_0 : i32, i32
  }
  func.func @transform_13(%arg0: i32) -> (i32, i32) {
    %c0_i32 = arith.constant 0 : i32
    %c0_i32_0 = arith.constant 0 : i32
    %c0_i32_1 = arith.constant 0 : i32
    return %c0_i32, %c0_i32_0 : i32, i32
  }
  func.func @transform_14(%arg0: i32) -> (i32, i32, i32) {
    %c0_i32 = arith.constant 0 : i32
    %c0_i32_0 = arith.constant 0 : i32
    %c0_i32_1 = arith.constant 0 : i32
    return %arg0, %c0_i32, %c0_i32_0 : i32, i32, i32
  }
}

</mosaic_0001>

<llo_original>
// kernel: tpu_custom_call.1
$region0: #{tpu_custom_call.1}
  #allocation0 [shape = 'u32[]', space=smem, size = 0x4, offset = 0x4, fixed_abs, tag = 'smem constant byte address 0x4 - core index']
  #allocation1 [shape = 'u32[144,128]{1,0:T(1,128)}', space=vmem, size = 0x12000, scoped, tag = 'internal scratch']
  %s0 = inlined_call_operand.hbm [shape: f32[2,128,128], index: 0, kind: input, shape index: {}]
  %s1 = inlined_call_operand.vmem [shape: s32[2,1,128], index: 1, kind: input, shape index: {}]
  %s2 = inlined_call_operand.hbm [shape: f32[1,128], index: 2, kind: input, shape index: {}]
  %s3 = inlined_call_operand.vmem [shape: f32[1,128], index: 3, kind: input, shape index: {}]
  %s4 = inlined_call_operand.hbm [shape: f32[128,384], index: 4, kind: input, shape index: {}]
  %s5 = inlined_call_operand.vmem [shape: f32[1,384], index: 5, kind: input, shape index: {}]
  %s6 = inlined_call_operand.hbm [shape: f32[128,128], index: 6, kind: input, shape index: {}]
  %s7 = inlined_call_operand.vmem [shape: f32[1,128], index: 7, kind: input, shape index: {}]
  %s8 = inlined_call_operand.vmem [shape: f32[1,128], index: 8, kind: input, shape index: {}]
  %s9 = inlined_call_operand.vmem [shape: f32[1,128], index: 9, kind: input, shape index: {}]
  %s10 = inlined_call_operand.hbm [shape: f32[128,256], index: 10, kind: input, shape index: {}]
  %s11 = inlined_call_operand.vmem [shape: f32[1,256], index: 11, kind: input, shape index: {}]
  %s12 = inlined_call_operand.hbm [shape: f32[256,128], index: 12, kind: input, shape index: {}]
  %s13 = inlined_call_operand.vmem [shape: f32[1,128], index: 13, kind: input, shape index: {}]
  %s14 = inlined_call_operand.hbm [shape: f32[2,128,128], index: 14, kind: output, shape index: {}]
  %s15 = sld [smem:[#allocation0]]
  $region113: #{tpu_custom_call.1} parent=0
    _
  %s17 = ssub.s32 1, %s15
  %s18 = scalar_select 0, %s17, %s15
  $region1: #{tpu_custom_call.1} parent=0
    #allocation2 [shape = 'u8[131072]{0}', space=vmem, size = 0x20000, scoped, tag = 'input window, operand 0']
    #allocation3 [shape = 's32[2]{0}', space=sflag, size = 0x8, scoped, tag = 'scoped memory for tpu_custom_call.1']
    #allocation4 [shape = 's32[2]{0}', space=sflag, size = 0x8, scoped, tag = 'scoped memory for tpu_custom_call.1']
    #allocation5 [shape = 'u8[512]{0}', space=vmem, size = 0x400, scoped, tag = 'input window, operand 2, single buffered']
    #allocation6 [shape = 's32[1]{0}', space=sflag, size = 0x4, scoped, tag = 'scoped memory for tpu_custom_call.1']
    #allocation7 [shape = 'u8[196608]{0}', space=vmem, size = 0x30000, scoped, tag = 'input window, operand 4, single buffered']
    #allocation8 [shape = 'u8[65536]{0}', space=vmem, size = 0x10000, scoped, tag = 'input window, operand 6, single buffered']
    #allocation9 [shape = 's32[1]{0}', space=sflag, size = 0x4, scoped, tag = 'scoped memory for tpu_custom_call.1']
    #allocation10 [shape = 'u8[131072]{0}', space=vmem, size = 0x20000, scoped, tag = 'input window, operand 10, single buffered']
    #allocation11 [shape = 'u8[131072]{0}', space=vmem, size = 0x20000, scoped, tag = 'input window, operand 12, single buffered']
    #allocation12 [shape = 's32[1]{0}', space=sflag, size = 0x4, scoped, tag = 'scoped memory for tpu_custom_call.1']
    #allocation13 [shape = 'u8[131072]{0}', space=vmem, size = 0x20000, scoped, tag = 'output window, operand 0']
    %19 = vsyncpa [#allocation3], 0
    %s20 = scalar_lea.sflag [#allocation3], 1
    %21 = vsyncpa %s20, 0
    %22 = vsyncpa [#allocation6], 0
    %23 = vsyncpa [#allocation9], 0
    %24 = vsyncpa [#allocation12], 0
    %25 = vsyncpa [#allocation4], 0
    %s26 = scalar_lea.sflag [#allocation4], 1
    %27 = vsyncpa %s26, 0
    loop: start=0, step=1, limit=4
    $region2: #{tpu_custom_call.1} parent=1 // loop_pre_header
      _
    $region3: #{tpu_custom_call.1} parent=1 // loop_header
      %s29 = sphi 0, %s33
      %p30 = scmp.ge.s32.totalorder %s29, 4
      %s39 = sphi 0, %s41
      %s42 = sphi 0, %s39
      %s43 = sphi 0, %s42
      %s59 = sphi 0, %s43
      %s65 = sphi 0, %s67
      %s68 = sphi 0, %s65
      %s69 = sphi 0, %s68
      %s85 = sphi 0, %s69
      %s89 = sphi 0, %s89
      %s91 = sphi 0, %s89
      %s92 = sphi 0, %s91
      %s106 = sphi 0, %s92
      %s110 = sphi 0, %s110
      %s112 = sphi 0, %s110
      %s113 = sphi 0, %s112
      %s127 = sphi 0, %s113
      %s131 = sphi 0, %s131
      %s133 = sphi 0, %s131
      %s134 = sphi 0, %s133
      %s148 = sphi 0, %s134
      %s152 = sphi 0, %s152
      %s154 = sphi 0, %s152
      %s155 = sphi 0, %s154
      %s169 = sphi 0, %s155
      %s173 = sphi 0, %s173
      %s175 = sphi 0, %s173
      %s176 = sphi 0, %s175
      %s190 = sphi 0, %s176
      %s194 = sphi 0, %s194
      %s196 = sphi 0, %s194
      %s197 = sphi 0, %s196
      %s211 = sphi 0, %s197
      %s215 = sphi 0, %s215
      %s217 = sphi 0, %s215
      %s218 = sphi 0, %s217
      %s232 = sphi 0, %s218
      %s236 = sphi 0, %s236
      %s238 = sphi 0, %s236
      %s239 = sphi 0, %s238
      %s253 = sphi 0, %s239
      %s257 = sphi 0, %s257
      %s259 = sphi 0, %s257
      %s260 = sphi 0, %s259
      %s274 = sphi 0, %s260
      %s278 = sphi 0, %s278
      %s280 = sphi 0, %s278
      %s281 = sphi 0, %s280
      %s295 = sphi 0, %s281
      %s299 = sphi 0, %s299
      %s301 = sphi 0, %s299
      %s302 = sphi 0, %s301
      %s316 = sphi 0, %s302
      %s320 = sphi 0, %s320
      %s322 = sphi 0, %s320
      %s323 = sphi 0, %s322
      %s337 = sphi 0, %s323
      %s343 = sphi 0, %s345
      %s346 = sphi 0, %s343
      %s347 = sphi 0, %s346
      %s363 = sphi 0, %s347
    $region4: #{tpu_custom_call.1} parent=1 // loop_header_branch
      %32 = sbr.rel (%p30) target = $region8
    $region5: #{tpu_custom_call.1} parent=1 // loop_body
      %s34 = ssub.s32 %s29, 1
      %s35 = ssub.s32 %s29, 2
      %s36 = sadd.s32 %s29, 1
      %s37 = ssub.s32 %s29, %s36
      %p38 = scmp.eq.s32.totalorder %s37, 0
      %s40 = sadd.s32 %s39, 1
      %s41 = scalar_select %p38, %s39, %s40
      %p44 = pneg %p38
      %p45 = scmp.eq.s32.totalorder %s29, 1
      %p46 = por %p44, %p45
      %p47 = scmp.ne.s32.totalorder %s39, %s42
      %p48 = scmp.eq.s32.totalorder %s29, 0
      %p49 = por %p47, %p48
      %p50 = scmp.ne.s32.totalorder %s39, %s42
      %p51 = scmp.eq.s32.totalorder %s34, 1
      %p52 = por %p50, %p51
      %p53 = scmp.ne.s32.totalorder %s42, %s43
      %p54 = scmp.eq.s32.totalorder %s34, 0
      %p55 = por %p53, %p54
      %p56 = scmp.ne.s32.totalorder %s42, %s43
      %p57 = scmp.eq.s32.totalorder %s35, 1
      %p58 = por %p56, %p57
      %p60 = scmp.ne.s32.totalorder %s43, %s59
      %p61 = scmp.eq.s32.totalorder %s35, 0
      %p62 = por %p60, %p61
      %s63 = ssub.s32 %s29, %s36
      %p64 = scmp.eq.s32.totalorder %s63, 0
      %s66 = sadd.s32 %s65, 1
      %s67 = scalar_select %p64, %s65, %s66
      %p70 = pneg %p64
      %p71 = scmp.eq.s32.totalorder %s29, 1
      %p72 = por %p70, %p71
      %p73 = scmp.ne.s32.totalorder %s65, %s68
      %p74 = scmp.eq.s32.totalorder %s29, 0
      %p75 = por %p73, %p74
      %p76 = scmp.ne.s32.totalorder %s65, %s68
      %p77 = scmp.eq.s32.totalorder %s34, 1
      %p78 = por %p76, %p77
      %p79 = scmp.ne.s32.totalorder %s68, %s69
      %p80 = scmp.eq.s32.totalorder %s34, 0
      %p81 = por %p79, %p80
      %p82 = scmp.ne.s32.totalorder %s68, %s69
      %p83 = scmp.eq.s32.totalorder %s35, 1
      %p84 = por %p82, %p83
      %p86 = scmp.ne.s32.totalorder %s69, %s85
      %p87 = scmp.eq.s32.totalorder %s35, 0
      %p88 = por %p86, %p87
      %s90 = sadd.s32 %s89, 1
      %p93 = scmp.eq.s32.totalorder %s29, 1
      %p94 = scmp.ne.s32.totalorder %s89, %s91
      %p95 = scmp.eq.s32.totalorder %s29, 0
      %p96 = por %p94, %p95
      %p97 = scmp.ne.s32.totalorder %s89, %s91
      %p98 = scmp.eq.s32.totalorder %s34, 1
      %p99 = por %p97, %p98
      %p100 = scmp.ne.s32.totalorder %s91, %s92
      %p101 = scmp.eq.s32.totalorder %s34, 0
      %p102 = por %p100, %p101
      %p103 = scmp.ne.s32.totalorder %s91, %s92
      %p104 = scmp.eq.s32.totalorder %s35, 1
      %p105 = por %p103, %p104
      %p107 = scmp.ne.s32.totalorder %s92, %s106
      %p108 = scmp.eq.s32.totalorder %s35, 0
      %p109 = por %p107, %p108
      %s111 = sadd.s32 %s110, 1
      %p114 = scmp.eq.s32.totalorder %s29, 1
      %p115 = scmp.ne.s32.totalorder %s110, %s112
      %p116 = scmp.eq.s32.totalorder %s29, 0
      %p117 = por %p115, %p116
      %p118 = scmp.ne.s32.totalorder %s110, %s112
      %p119 = scmp.eq.s32.totalorder %s34, 1
      %p120 = por %p118, %p119
      %p121 = scmp.ne.s32.totalorder %s112, %s113
      %p122 = scmp.eq.s32.totalorder %s34, 0
      %p123 = por %p121, %p122
      %p124 = scmp.ne.s32.totalorder %s112, %s113
      %p125 = scmp.eq.s32.totalorder %s35, 1
      %p126 = por %p124, %p125
      %p128 = scmp.ne.s32.totalorder %s113, %s127
      %p129 = scmp.eq.s32.totalorder %s35, 0
      %p130 = por %p128, %p129
      %s132 = sadd.s32 %s131, 1
      %p135 = scmp.eq.s32.totalorder %s29, 1
      %p136 = scmp.ne.s32.totalorder %s131, %s133
      %p137 = scmp.eq.s32.totalorder %s29, 0
      %p138 = por %p136, %p137
      %p139 = scmp.ne.s32.totalorder %s131, %s133
      %p140 = scmp.eq.s32.totalorder %s34, 1
      %p141 = por %p139, %p140
      %p142 = scmp.ne.s32.totalorder %s133, %s134
      %p143 = scmp.eq.s32.totalorder %s34, 0
      %p144 = por %p142, %p143
      %p145 = scmp.ne.s32.totalorder %s133, %s134
      %p146 = scmp.eq.s32.totalorder %s35, 1
      %p147 = por %p145, %p146
      %p149 = scmp.ne.s32.totalorder %s134, %s148
      %p150 = scmp.eq.s32.totalorder %s35, 0
      %p151 = por %p149, %p150
      %s153 = sadd.s32 %s152, 1
      %p156 = scmp.eq.s32.totalorder %s29, 1
      %p157 = scmp.ne.s32.totalorder %s152, %s154
      %p158 = scmp.eq.s32.totalorder %s29, 0
      %p159 = por %p157, %p158
      %p160 = scmp.ne.s32.totalorder %s152, %s154
      %p161 = scmp.eq.s32.totalorder %s34, 1
      %p162 = por %p160, %p161
      %p163 = scmp.ne.s32.totalorder %s154, %s155
      %p164 = scmp.eq.s32.totalorder %s34, 0
      %p165 = por %p163, %p164
      %p166 = scmp.ne.s32.totalorder %s154, %s155
      %p167 = scmp.eq.s32.totalorder %s35, 1
      %p168 = por %p166, %p167
      %p170 = scmp.ne.s32.totalorder %s155, %s169
      %p171 = scmp.eq.s32.totalorder %s35, 0
      %p172 = por %p170, %p171
      %s174 = sadd.s32 %s173, 1
      %p177 = scmp.eq.s32.totalorder %s29, 1
      %p178 = scmp.ne.s32.totalorder %s173, %s175
      %p179 = scmp.eq.s32.totalorder %s29, 0
      %p180 = por %p178, %p179
      %p181 = scmp.ne.s32.totalorder %s173, %s175
      %p182 = scmp.eq.s32.totalorder %s34, 1
      %p183 = por %p181, %p182
      %p184 = scmp.ne.s32.totalorder %s175, %s176
      %p185 = scmp.eq.s32.totalorder %s34, 0
      %p186 = por %p184, %p185
      %p187 = scmp.ne.s32.totalorder %s175, %s176
      %p188 = scmp.eq.s32.totalorder %s35, 1
      %p189 = por %p187, %p188
      %p191 = scmp.ne.s32.totalorder %s176, %s190
      %p192 = scmp.eq.s32.totalorder %s35, 0
      %p193 = por %p191, %p192
      %s195 = sadd.s32 %s194, 1
      %p198 = scmp.eq.s32.totalorder %s29, 1
      %p199 = scmp.ne.s32.totalorder %s194, %s196
      %p200 = scmp.eq.s32.totalorder %s29, 0
      %p201 = por %p199, %p200
      %p202 = scmp.ne.s32.totalorder %s194, %s196
      %p203 = scmp.eq.s32.totalorder %s34, 1
      %p204 = por %p202, %p203
      %p205 = scmp.ne.s32.totalorder %s196, %s197
      %p206 = scmp.eq.s32.totalorder %s34, 0
      %p207 = por %p205, %p206
      %p208 = scmp.ne.s32.totalorder %s196, %s197
      %p209 = scmp.eq.s32.totalorder %s35, 1
      %p210 = por %p208, %p209
      %p212 = scmp.ne.s32.totalorder %s197, %s211
      %p213 = scmp.eq.s32.totalorder %s35, 0
      %p214 = por %p212, %p213
      %s216 = sadd.s32 %s215, 1
      %p219 = scmp.eq.s32.totalorder %s29, 1
      %p220 = scmp.ne.s32.totalorder %s215, %s217
      %p221 = scmp.eq.s32.totalorder %s29, 0
      %p222 = por %p220, %p221
      %p223 = scmp.ne.s32.totalorder %s215, %s217
      %p224 = scmp.eq.s32.totalorder %s34, 1
      %p225 = por %p223, %p224
      %p226 = scmp.ne.s32.totalorder %s217, %s218
      %p227 = scmp.eq.s32.totalorder %s34, 0
      %p228 = por %p226, %p227
      %p229 = scmp.ne.s32.totalorder %s217, %s218
      %p230 = scmp.eq.s32.totalorder %s35, 1
      %p231 = por %p229, %p230
      %p233 = scmp.ne.s32.totalorder %s218, %s232
      %p234 = scmp.eq.s32.totalorder %s35, 0
      %p235 = por %p233, %p234
      %s237 = sadd.s32 %s236, 1
      %p240 = scmp.eq.s32.totalorder %s29, 1
      %p241 = scmp.ne.s32.totalorder %s236, %s238
      %p242 = scmp.eq.s32.totalorder %s29, 0
      %p243 = por %p241, %p242
      %p244 = scmp.ne.s32.totalorder %s236, %s238
      %p245 = scmp.eq.s32.totalorder %s34, 1
      %p246 = por %p244, %p245
      %p247 = scmp.ne.s32.totalorder %s238, %s239
      %p248 = scmp.eq.s32.totalorder %s34, 0
      %p249 = por %p247, %p248
      %p250 = scmp.ne.s32.totalorder %s238, %s239
      %p251 = scmp.eq.s32.totalorder %s35, 1
      %p252 = por %p250, %p251
      %p254 = scmp.ne.s32.totalorder %s239, %s253
      %p255 = scmp.eq.s32.totalorder %s35, 0
      %p256 = por %p254, %p255
      %s258 = sadd.s32 %s257, 1
      %p261 = scmp.eq.s32.totalorder %s29, 1
      %p262 = scmp.ne.s32.totalorder %s257, %s259
      %p263 = scmp.eq.s32.totalorder %s29, 0
      %p264 = por %p262, %p263
      %p265 = scmp.ne.s32.totalorder %s257, %s259
      %p266 = scmp.eq.s32.totalorder %s34, 1
      %p267 = por %p265, %p266
      %p268 = scmp.ne.s32.totalorder %s259, %s260
      %p269 = scmp.eq.s32.totalorder %s34, 0
      %p270 = por %p268, %p269
      %p271 = scmp.ne.s32.totalorder %s259, %s260
      %p272 = scmp.eq.s32.totalorder %s35, 1
      %p273 = por %p271, %p272
      %p275 = scmp.ne.s32.totalorder %s260, %s274
      %p276 = scmp.eq.s32.totalorder %s35, 0
      %p277 = por %p275, %p276
      %s279 = sadd.s32 %s278, 1
      %p282 = scmp.eq.s32.totalorder %s29, 1
      %p283 = scmp.ne.s32.totalorder %s278, %s280
      %p284 = scmp.eq.s32.totalorder %s29, 0
      %p285 = por %p283, %p284
      %p286 = scmp.ne.s32.totalorder %s278, %s280
      %p287 = scmp.eq.s32.totalorder %s34, 1
      %p288 = por %p286, %p287
      %p289 = scmp.ne.s32.totalorder %s280, %s281
      %p290 = scmp.eq.s32.totalorder %s34, 0
      %p291 = por %p289, %p290
      %p292 = scmp.ne.s32.totalorder %s280, %s281
      %p293 = scmp.eq.s32.totalorder %s35, 1
      %p294 = por %p292, %p293
      %p296 = scmp.ne.s32.totalorder %s281, %s295
      %p297 = scmp.eq.s32.totalorder %s35, 0
      %p298 = por %p296, %p297
      %s300 = sadd.s32 %s299, 1
      %p303 = scmp.eq.s32.totalorder %s29, 1
      %p304 = scmp.ne.s32.totalorder %s299, %s301
      %p305 = scmp.eq.s32.totalorder %s29, 0
      %p306 = por %p304, %p305
      %p307 = scmp.ne.s32.totalorder %s299, %s301
      %p308 = scmp.eq.s32.totalorder %s34, 1
      %p309 = por %p307, %p308
      %p310 = scmp.ne.s32.totalorder %s301, %s302
      %p311 = scmp.eq.s32.totalorder %s34, 0
      %p312 = por %p310, %p311
      %p313 = scmp.ne.s32.totalorder %s301, %s302
      %p314 = scmp.eq.s32.totalorder %s35, 1
      %p315 = por %p313, %p314
      %p317 = scmp.ne.s32.totalorder %s302, %s316
      %p318 = scmp.eq.s32.totalorder %s35, 0
      %p319 = por %p317, %p318
      %s321 = sadd.s32 %s320, 1
      %p324 = scmp.eq.s32.totalorder %s29, 1
      %p325 = scmp.ne.s32.totalorder %s320, %s322
      %p326 = scmp.eq.s32.totalorder %s29, 0
      %p327 = por %p325, %p326
      %p328 = scmp.ne.s32.totalorder %s320, %s322
      %p329 = scmp.eq.s32.totalorder %s34, 1
      %p330 = por %p328, %p329
      %p331 = scmp.ne.s32.totalorder %s322, %s323
      %p332 = scmp.eq.s32.totalorder %s34, 0
      %p333 = por %p331, %p332
      %p334 = scmp.ne.s32.totalorder %s322, %s323
      %p335 = scmp.eq.s32.totalorder %s35, 1
      %p336 = por %p334, %p335
      %p338 = scmp.ne.s32.totalorder %s323, %s337
      %p339 = scmp.eq.s32.totalorder %s35, 0
      %p340 = por %p338, %p339
      %s341 = ssub.s32 %s29, %s36
      %p342 = scmp.eq.s32.totalorder %s341, 0
      %s344 = sadd.s32 %s343, 1
      %s345 = scalar_select %p342, %s343, %s344
      %p348 = pneg %p342
      %p349 = scmp.eq.s32.totalorder %s29, 1
      %p350 = por %p348, %p349
      %p351 = scmp.ne.s32.totalorder %s343, %s346
      %p352 = scmp.eq.s32.totalorder %s29, 0
      %p353 = por %p351, %p352
      %p354 = scmp.ne.s32.totalorder %s343, %s346
      %p355 = scmp.eq.s32.totalorder %s34, 1
      %p356 = por %p354, %p355
      %p357 = scmp.ne.s32.totalorder %s346, %s347
      %p358 = scmp.eq.s32.totalorder %s34, 0
      %p359 = por %p357, %p358
      %p360 = scmp.ne.s32.totalorder %s346, %s347
      %p361 = scmp.eq.s32.totalorder %s35, 1
      %p362 = por %p360, %p361
      %p364 = scmp.ne.s32.totalorder %s347, %s363
      %p365 = scmp.eq.s32.totalorder %s35, 0
      %p366 = por %p364, %p365
      %p367 = scmp.le.s32.totalorder 1, %s29
      %p368 = scmp.lt.s32.totalorder %s29, 3
      %p369 = pnand %p367, %p368
      %p370 = pneg %p369
      // Predicated region
      $region9: #{tpu_custom_call.1} parent=5 // pred_check
        _
      $region10: #{tpu_custom_call.1} parent=5 // pred_check_branch
        %372 = sbr.rel (%p369) target = $region12
      $region11: #{tpu_custom_call.1} parent=5 // pred_region
        %s373 = ssub.s32 %s29, 1
        // Predicated region
        $region13: #{tpu_custom_call.1} parent=11 // pred_check
          %p374 = pneg %p102
        $region14: #{tpu_custom_call.1} parent=11 // pred_check_branch
          %376 = sbr.rel (%p374) target = $region16
        $region15: #{tpu_custom_call.1} parent=11 // pred_region
          %s378 = ssub.s32 16, 16
          %379 = vsyncadd [#allocation6], %s378
          %s381 = sshll.u32 [#allocation5], 4
          %s382 = int_to_ptr.vmem [resolvable:$true] %s381
          %384 = dma.hbm_to_vmem [thread:$0]  %s2, 16, %s382, [#allocation6]
        $region16: #{tpu_custom_call.1} parent=11 // pred_fallthru
          _
        // Predicated region
        $region17: #{tpu_custom_call.1} parent=11 // pred_check
          %p385 = pneg %p123
        $region18: #{tpu_custom_call.1} parent=11 // pred_check_branch
          %387 = sbr.rel (%p385) target = $region20
        $region19: #{tpu_custom_call.1} parent=11 // pred_region
          _
        $region20: #{tpu_custom_call.1} parent=11 // pred_fallthru
          _
        // Predicated region
        $region21: #{tpu_custom_call.1} parent=11 // pred_check
          %p388 = pneg %p144
        $region22: #{tpu_custom_call.1} parent=11 // pred_check_branch
          %390 = sbr.rel (%p388) target = $region24
        $region23: #{tpu_custom_call.1} parent=11 // pred_region
          %s392 = ssub.s32 6144, 6144
          %393 = vsyncadd [#allocation6], %s392
          %s394 = sshll.u32 [#allocation7], 4
          %s395 = int_to_ptr.vmem [resolvable:$true] %s394
          %400 = dma.hbm_to_vmem [thread:$0]  %s4, 6144, %s395, [#allocation6], 384, 384, 24
        $region24: #{tpu_custom_call.1} parent=11 // pred_fallthru
          _
        // Predicated region
        $region25: #{tpu_custom_call.1} parent=11 // pred_check
          %p401 = pneg %p165
        $region26: #{tpu_custom_call.1} parent=11 // pred_check_branch
          %403 = sbr.rel (%p401) target = $region28
        $region27: #{tpu_custom_call.1} parent=11 // pred_region
          _
        $region28: #{tpu_custom_call.1} parent=11 // pred_fallthru
          _
        // Predicated region
        $region29: #{tpu_custom_call.1} parent=11 // pred_check
          %p404 = pneg %p186
        $region30: #{tpu_custom_call.1} parent=11 // pred_check_branch
          %406 = sbr.rel (%p404) target = $region32
        $region31: #{tpu_custom_call.1} parent=11 // pred_region
          %s408 = ssub.s32 2048, 2048
          %409 = vsyncadd [#allocation9], %s408
          %s410 = sshll.u32 [#allocation8], 4
          %s411 = int_to_ptr.vmem [resolvable:$true] %s410
          %416 = dma.hbm_to_vmem [thread:$0]  %s6, 2048, %s411, [#allocation9], 128, 128, 8
        $region32: #{tpu_custom_call.1} parent=11 // pred_fallthru
          _
        // Predicated region
        $region33: #{tpu_custom_call.1} parent=11 // pred_check
          %p417 = pneg %p207
        $region34: #{tpu_custom_call.1} parent=11 // pred_check_branch
          %419 = sbr.rel (%p417) target = $region36
        $region35: #{tpu_custom_call.1} parent=11 // pred_region
          _
        $region36: #{tpu_custom_call.1} parent=11 // pred_fallthru
          _
        // Predicated region
        $region37: #{tpu_custom_call.1} parent=11 // pred_check
          %p420 = pneg %p228
        $region38: #{tpu_custom_call.1} parent=11 // pred_check_branch
          %422 = sbr.rel (%p420) target = $region40
        $region39: #{tpu_custom_call.1} parent=11 // pred_region
          _
        $region40: #{tpu_custom_call.1} parent=11 // pred_fallthru
          _
        // Predicated region
        $region41: #{tpu_custom_call.1} parent=11 // pred_check
          %p423 = pneg %p249
        $region42: #{tpu_custom_call.1} parent=11 // pred_check_branch
          %425 = sbr.rel (%p423) target = $region44
        $region43: #{tpu_custom_call.1} parent=11 // pred_region
          _
        $region44: #{tpu_custom_call.1} parent=11 // pred_fallthru
          _
        // Predicated region
        $region45: #{tpu_custom_call.1} parent=11 // pred_check
          %p426 = pneg %p270
        $region46: #{tpu_custom_call.1} parent=11 // pred_check_branch
          %428 = sbr.rel (%p426) target = $region48
        $region47: #{tpu_custom_call.1} parent=11 // pred_region
          %s430 = ssub.s32 4096, 4096
          %431 = vsyncadd [#allocation9], %s430
          %s432 = sshll.u32 [#allocation10], 4
          %s433 = int_to_ptr.vmem [resolvable:$true] %s432
          %438 = dma.hbm_to_vmem [thread:$0]  %s10, 4096, %s433, [#allocation9], 256, 256, 16
        $region48: #{tpu_custom_call.1} parent=11 // pred_fallthru
          _
        // Predicated region
        $region49: #{tpu_custom_call.1} parent=11 // pred_check
          %p439 = pneg %p291
        $region50: #{tpu_custom_call.1} parent=11 // pred_check_branch
          %441 = sbr.rel (%p439) target = $region52
        $region51: #{tpu_custom_call.1} parent=11 // pred_region
          _
        $region52: #{tpu_custom_call.1} parent=11 // pred_fallthru
          _
        // Predicated region
        $region53: #{tpu_custom_call.1} parent=11 // pred_check
          %p442 = pneg %p312
        $region54: #{tpu_custom_call.1} parent=11 // pred_check_branch
          %444 = sbr.rel (%p442) target = $region56
        $region55: #{tpu_custom_call.1} parent=11 // pred_region
          %s446 = ssub.s32 4096, 4096
          %447 = vsyncadd [#allocation12], %s446
          %s448 = sshll.u32 [#allocation11], 4
          %s449 = int_to_ptr.vmem [resolvable:$true] %s448
          %454 = dma.hbm_to_vmem [thread:$0]  %s12, 4096, %s449, [#allocation12], 128, 128, 8
        $region56: #{tpu_custom_call.1} parent=11 // pred_fallthru
          _
        // Predicated region
        $region57: #{tpu_custom_call.1} parent=11 // pred_check
          %p455 = pneg %p333
        $region58: #{tpu_custom_call.1} parent=11 // pred_check_branch
          %457 = sbr.rel (%p455) target = $region60
        $region59: #{tpu_custom_call.1} parent=11 // pred_region
          _
        $region60: #{tpu_custom_call.1} parent=11 // pred_fallthru
          _
      $region12: #{tpu_custom_call.1} parent=5 // pred_fallthru
        _
      %p458 = scmp.lt.s32.totalorder %s29, 2
      // Predicated region
      $region61: #{tpu_custom_call.1} parent=5 // pred_check
        %p459 = pneg %p458
      $region62: #{tpu_custom_call.1} parent=5 // pred_check_branch
        %461 = sbr.rel (%p459) target = $region64
      $region63: #{tpu_custom_call.1} parent=5 // pred_region
        // Predicated region
        $region65: #{tpu_custom_call.1} parent=63 // pred_check
          %p462 = pneg %p49
        $region66: #{tpu_custom_call.1} parent=63 // pred_check_branch
          %464 = sbr.rel (%p462) target = $region68
        $region67: #{tpu_custom_call.1} parent=63 // pred_region
          %s465 = sand.u32 %s39, 1
          %s466 = scalar_lea.sflag [#allocation3], %s465
          %s467 = sand.u32 %s39, 1
          %s468 = smul.addr %s467, 128
          %s469 = scalar_lea.vmem [#allocation2], %s468
          %s471 = ssub.s32 2048, 2048
          %472 = vsyncadd %s466, %s471
          %s473 = smul.addr %s29, 16
          %s474 = smul.addr %s473, 128
          %s475 = scalar_lea.hbm %s0, %s474
          %s476 = sshll.u32 %s469, 4
          %s477 = int_to_ptr.vmem [resolvable:$true] %s476
          %482 = dma.hbm_to_vmem [thread:$0]  %s475, 2048, %s477, %s466, 128, 128, 8
        $region68: #{tpu_custom_call.1} parent=63 // pred_fallthru
          _
        // Predicated region
        $region69: #{tpu_custom_call.1} parent=63 // pred_check
          %p483 = pneg %p75
        $region70: #{tpu_custom_call.1} parent=63 // pred_check_branch
          %485 = sbr.rel (%p483) target = $region72
        $region71: #{tpu_custom_call.1} parent=63 // pred_region
          %p486 = scmp.lt.s32.totalorder %s29, 1
          %s487 = scalar_select %p486, %s29, 1
          %s488 = scalar_lea.vmem %s1, %s487
        $region72: #{tpu_custom_call.1} parent=63 // pred_fallthru
          _
      $region64: #{tpu_custom_call.1} parent=5 // pred_fallthru
        _
      %p489 = scmp.le.s32.totalorder 1, %s29
      %p490 = scmp.lt.s32.totalorder %s29, 3
      %p491 = pnand %p489, %p490
      %p492 = pneg %p491
      // Predicated region
      $region73: #{tpu_custom_call.1} parent=5 // pred_check
        _
      $region74: #{tpu_custom_call.1} parent=5 // pred_check_branch
        %494 = sbr.rel (%p491) target = $region76
      $region75: #{tpu_custom_call.1} parent=5 // pred_region
        %s495 = ssub.s32 %s29, 1
        %s496 = sand.u32 %s42, 1
        %s497 = scalar_lea.sflag [#allocation3], %s496
        %s498 = sand.u32 %s42, 1
        %s499 = smul.addr %s498, 128
        %s500 = scalar_lea.vmem [#allocation2], %s499
        // Predicated region
        $region77: #{tpu_custom_call.1} parent=75 // pred_check
          %p501 = pneg %p55
        $region78: #{tpu_custom_call.1} parent=75 // pred_check_branch
          %503 = sbr.rel (%p501) target = $region80
        $region79: #{tpu_custom_call.1} parent=75 // pred_region
          %504 = dma.done %s497, 2048
        $region80: #{tpu_custom_call.1} parent=75 // pred_fallthru
          _
        // Predicated region
        $region81: #{tpu_custom_call.1} parent=75 // pred_check
          %p505 = pneg %p102
        $region82: #{tpu_custom_call.1} parent=75 // pred_check_branch
          %507 = sbr.rel (%p505) target = $region84
        $region83: #{tpu_custom_call.1} parent=75 // pred_region
          %508 = dma.done [#allocation6], 16
        $region84: #{tpu_custom_call.1} parent=75 // pred_fallthru
          _
        // Predicated region
        $region85: #{tpu_custom_call.1} parent=75 // pred_check
          %p509 = pneg %p144
        $region86: #{tpu_custom_call.1} parent=75 // pred_check_branch
          %511 = sbr.rel (%p509) target = $region88
        $region87: #{tpu_custom_call.1} parent=75 // pred_region
          %512 = dma.done [#allocation6], 6144
        $region88: #{tpu_custom_call.1} parent=75 // pred_fallthru
          _
        // Predicated region
        $region89: #{tpu_custom_call.1} parent=75 // pred_check
          %p513 = pneg %p186
        $region90: #{tpu_custom_call.1} parent=75 // pred_check_branch
          %515 = sbr.rel (%p513) target = $region92
        $region91: #{tpu_custom_call.1} parent=75 // pred_region
          %516 = dma.done [#allocation9], 2048
        $region92: #{tpu_custom_call.1} parent=75 // pred_fallthru
          _
        // Predicated region
        $region93: #{tpu_custom_call.1} parent=75 // pred_check
          %p517 = pneg %p270
        $region94: #{tpu_custom_call.1} parent=75 // pred_check_branch
          %519 = sbr.rel (%p517) target = $region96
        $region95: #{tpu_custom_call.1} parent=75 // pred_region
          %520 = dma.done [#allocation9], 4096
        $region96: #{tpu_custom_call.1} parent=75 // pred_fallthru
          _
        // Predicated region
        $region97: #{tpu_custom_call.1} parent=75 // pred_check
          %p521 = pneg %p312
        $region98: #{tpu_custom_call.1} parent=75 // pred_check_branch
          %523 = sbr.rel (%p521) target = $region100
        $region99: #{tpu_custom_call.1} parent=75 // pred_region
          %524 = dma.done [#allocation12], 4096
        $region100: #{tpu_custom_call.1} parent=75 // pred_fallthru
          _
        %s525 = sand.u32 %s42, 1
        %s526 = scalar_lea.sflag [#allocation3], %s525
        %s527 = sand.u32 %s42, 1
        %s528 = smul.addr %s527, 128
        %s529 = scalar_lea.vmem [#allocation2], %s528
        %p530 = pneg %p55
        %p531 = pneg %p52
        %p532 = scmp.lt.s32.totalorder %s34, 1
        %s533 = scalar_select %p532, %s34, 1
        %s534 = scalar_lea.vmem %s1, %s533
        %p535 = pneg %p81
        %p536 = pneg %p78
        %p537 = pneg %p102
        %p538 = pneg %p99
        %p539 = pneg %p123
        %p540 = pneg %p120
        %p541 = pneg %p144
        %p542 = pneg %p141
        %p543 = pneg %p165
        %p544 = pneg %p162
        %p545 = pneg %p186
        %p546 = pneg %p183
        %p547 = pneg %p207
        %p548 = pneg %p204
        %p549 = pneg %p228
        %p550 = pneg %p225
        %p551 = pneg %p249
        %p552 = pneg %p246
        %p553 = pneg %p270
        %p554 = pneg %p267
        %p555 = pneg %p291
        %p556 = pneg %p288
        %p557 = pneg %p312
        %p558 = pneg %p309
        %p559 = pneg %p333
        %p560 = pneg %p330
        %p561 = pneg %p359
        %p562 = pneg %p356
        %s563 = sand.u32 %s346, 1
        %s564 = scalar_lea.sflag [#allocation4], %s563
        %s565 = sand.u32 %s346, 1
        %s566 = smul.addr %s565, 128
        %s567 = scalar_lea.vmem [#allocation13], %s566
        %p568 = scmp.lt.s32.totalorder %s34, 1
        %s569 = scalar_select %p568, %s34, 1
        %s570 = scalar_lea.vmem %s1, %s569
        %v571 = vld [vmem:[%s500] sm:$0xff]
        %v572 = vld [vmem:[%s500 + $0x8] sm:$0xff]
        %v573 = vld [vmem:[%s500 + $0x10] sm:$0xff]
        %v574 = vld [vmem:[%s500 + $0x18] sm:$0xff]
        %v575 = vld [vmem:[%s500 + $0x20] sm:$0xff]
        %v576 = vld [vmem:[%s500 + $0x28] sm:$0xff]
        %v577 = vld [vmem:[%s500 + $0x30] sm:$0xff]
        %v578 = vld [vmem:[%s500 + $0x38] sm:$0xff]
        %v579 = vld [vmem:[%s500 + $0x40] sm:$0xff]
        %v580 = vld [vmem:[%s500 + $0x48] sm:$0xff]
        %v581 = vld [vmem:[%s500 + $0x50] sm:$0xff]
        %v582 = vld [vmem:[%s500 + $0x58] sm:$0xff]
        %v583 = vld [vmem:[%s500 + $0x60] sm:$0xff]
        %v584 = vld [vmem:[%s500 + $0x68] sm:$0xff]
        %v585 = vld [vmem:[%s500 + $0x70] sm:$0xff]
        %v586 = vld [vmem:[%s500 + $0x78] sm:$0xff]
        %v587 = vld [vmem:[%s570] sm:$0x1]
        %vm588 = vcmp.eq.s32.totalorder %v587, 0
        %v589 = vsel %vm588, 0.0, -1e+30
        %v591 = vlaneseq
        %v592 = vshrl.u32 %v591, 7
        %v593 = vsub.s32 0, %v592
        %v594 = vrot.slane %v589, %v593
        %v596 = vld [vmem:[#allocation5] sm:$0x1]
        %v597 = vld [vmem:[%s3] sm:$0x1]
        %598 = vadd.xlane.f32.xlu0 %v571
        %v599 = vpop.xlane.xlu0 %598
        %600 = vadd.xlane.f32.xlu0 %v572
        %v601 = vpop.xlane.xlu0 %600
        %602 = vadd.xlane.f32.xlu0 %v573
        %v603 = vpop.xlane.xlu0 %602
        %604 = vadd.xlane.f32.xlu0 %v574
        %v605 = vpop.xlane.xlu0 %604
        %606 = vadd.xlane.f32.xlu0 %v575
        %v607 = vpop.xlane.xlu0 %606
        %608 = vadd.xlane.f32.xlu0 %v576
        %v609 = vpop.xlane.xlu0 %608
        %610 = vadd.xlane.f32.xlu0 %v577
        %v611 = vpop.xlane.xlu0 %610
        %612 = vadd.xlane.f32.xlu0 %v578
        %v613 = vpop.xlane.xlu0 %612
        %614 = vadd.xlane.f32.xlu0 %v579
        %v615 = vpop.xlane.xlu0 %614
        %616 = vadd.xlane.f32.xlu0 %v580
        %v617 = vpop.xlane.xlu0 %616
        %618 = vadd.xlane.f32.xlu0 %v581
        %v619 = vpop.xlane.xlu0 %618
        %620 = vadd.xlane.f32.xlu0 %v582
        %v621 = vpop.xlane.xlu0 %620
        %622 = vadd.xlane.f32.xlu0 %v583
        %v623 = vpop.xlane.xlu0 %622
        %624 = vadd.xlane.f32.xlu0 %v584
        %v625 = vpop.xlane.xlu0 %624
        %626 = vadd.xlane.f32.xlu0 %v585
        %v627 = vpop.xlane.xlu0 %626
        %628 = vadd.xlane.f32.xlu0 %v586
        %v629 = vpop.xlane.xlu0 %628
        %v630 = vrcp.pop 128.0
        %v631 = vmul.f32 %v599, %v630
        %v632 = vmul.f32 %v601, %v630
        %v633 = vmul.f32 %v603, %v630
        %v634 = vmul.f32 %v605, %v630
        %v635 = vmul.f32 %v607, %v630
        %v636 = vmul.f32 %v609, %v630
        %v637 = vmul.f32 %v611, %v630
        %v638 = vmul.f32 %v613, %v630
        %v639 = vmul.f32 %v615, %v630
        %v640 = vmul.f32 %v617, %v630
        %v641 = vmul.f32 %v619, %v630
        %v642 = vmul.f32 %v621, %v630
        %v643 = vmul.f32 %v623, %v630
        %v644 = vmul.f32 %v625, %v630
        %v645 = vmul.f32 %v627, %v630
        %v646 = vmul.f32 %v629, %v630
        %v647 = vsub.f32 %v571, %v631
        %v648 = vsub.f32 %v572, %v632
        %v649 = vsub.f32 %v573, %v633
        %v650 = vsub.f32 %v574, %v634
        %v651 = vsub.f32 %v575, %v635
        %v652 = vsub.f32 %v576, %v636
        %v653 = vsub.f32 %v577, %v637
        %v654 = vsub.f32 %v578, %v638
        %v655 = vsub.f32 %v579, %v639
        %v656 = vsub.f32 %v580, %v640
        %v657 = vsub.f32 %v581, %v641
        %v658 = vsub.f32 %v582, %v642
        %v659 = vsub.f32 %v583, %v643
        %v660 = vsub.f32 %v584, %v644
        %v661 = vsub.f32 %v585, %v645
        %v662 = vsub.f32 %v586, %v646
        %v663 = vmul.f32 %v647, %v647
        %v664 = vmul.f32 %v648, %v648
        %v665 = vmul.f32 %v649, %v649
        %v666 = vmul.f32 %v650, %v650
        %v667 = vmul.f32 %v651, %v651
        %v668 = vmul.f32 %v652, %v652
        %v669 = vmul.f32 %v653, %v653
        %v670 = vmul.f32 %v654, %v654
        %v671 = vmul.f32 %v655, %v655
        %v672 = vmul.f32 %v656, %v656
        %v673 = vmul.f32 %v657, %v657
        %v674 = vmul.f32 %v658, %v658
        %v675 = vmul.f32 %v659, %v659
        %v676 = vmul.f32 %v660, %v660
        %v677 = vmul.f32 %v661, %v661
        %v678 = vmul.f32 %v662, %v662
        %679 = vadd.xlane.f32.xlu0 %v663
        %v680 = vpop.xlane.xlu0 %679
        %681 = vadd.xlane.f32.xlu0 %v664
        %v682 = vpop.xlane.xlu0 %681
        %683 = vadd.xlane.f32.xlu0 %v665
        %v684 = vpop.xlane.xlu0 %683
        %685 = vadd.xlane.f32.xlu0 %v666
        %v686 = vpop.xlane.xlu0 %685
        %687 = vadd.xlane.f32.xlu0 %v667
        %v688 = vpop.xlane.xlu0 %687
        %689 = vadd.xlane.f32.xlu0 %v668
        %v690 = vpop.xlane.xlu0 %689
        %691 = vadd.xlane.f32.xlu0 %v669
        %v692 = vpop.xlane.xlu0 %691
        %693 = vadd.xlane.f32.xlu0 %v670
        %v694 = vpop.xlane.xlu0 %693
        %695 = vadd.xlane.f32.xlu0 %v671
        %v696 = vpop.xlane.xlu0 %695
        %697 = vadd.xlane.f32.xlu0 %v672
        %v698 = vpop.xlane.xlu0 %697
        %699 = vadd.xlane.f32.xlu0 %v673
        %v700 = vpop.xlane.xlu0 %699
        %701 = vadd.xlane.f32.xlu0 %v674
        %v702 = vpop.xlane.xlu0 %701
        %703 = vadd.xlane.f32.xlu0 %v675
        %v704 = vpop.xlane.xlu0 %703
        %705 = vadd.xlane.f32.xlu0 %v676
        %v706 = vpop.xlane.xlu0 %705
        %707 = vadd.xlane.f32.xlu0 %v677
        %v708 = vpop.xlane.xlu0 %707
        %709 = vadd.xlane.f32.xlu0 %v678
        %v710 = vpop.xlane.xlu0 %709
        %v711 = vmul.f32 %v680, %v630
        %v712 = vmul.f32 %v682, %v630
        %v713 = vmul.f32 %v684, %v630
        %v714 = vmul.f32 %v686, %v630
        %v715 = vmul.f32 %v688, %v630
        %v716 = vmul.f32 %v690, %v630
        %v717 = vmul.f32 %v692, %v630
        %v718 = vmul.f32 %v694, %v630
        %v719 = vmul.f32 %v696, %v630
        %v720 = vmul.f32 %v698, %v630
        %v721 = vmul.f32 %v700, %v630
        %v722 = vmul.f32 %v702, %v630
        %v723 = vmul.f32 %v704, %v630
        %v724 = vmul.f32 %v706, %v630
        %v725 = vmul.f32 %v708, %v630
        %v726 = vmul.f32 %v710, %v630
        %v727 = vadd.f32 %v711, 1e-05
        %v728 = vadd.f32 %v712, 1e-05
        %v729 = vadd.f32 %v713, 1e-05
        %v730 = vadd.f32 %v714, 1e-05
        %v731 = vadd.f32 %v715, 1e-05
        %v732 = vadd.f32 %v716, 1e-05
        %v733 = vadd.f32 %v717, 1e-05
        %v734 = vadd.f32 %v718, 1e-05
        %v735 = vadd.f32 %v719, 1e-05
        %v736 = vadd.f32 %v720, 1e-05
        %v737 = vadd.f32 %v721, 1e-05
        %v738 = vadd.f32 %v722, 1e-05
        %v739 = vadd.f32 %v723, 1e-05
        %v740 = vadd.f32 %v724, 1e-05
        %v741 = vadd.f32 %v725, 1e-05
        %v742 = vadd.f32 %v726, 1e-05
        %v743 = vrsqrt.pop %v727
        %v744 = vrsqrt.pop %v728
        %v745 = vrsqrt.pop %v729
        %v746 = vrsqrt.pop %v730
        %v747 = vrsqrt.pop %v731
        %v748 = vrsqrt.pop %v732
        %v749 = vrsqrt.pop %v733
        %v750 = vrsqrt.pop %v734
        %v751 = vrsqrt.pop %v735
        %v752 = vrsqrt.pop %v736
        %v753 = vrsqrt.pop %v737
        %v754 = vrsqrt.pop %v738
        %v755 = vrsqrt.pop %v739
        %v756 = vrsqrt.pop %v740
        %v757 = vrsqrt.pop %v741
        %v758 = vrsqrt.pop %v742
        %v759 = vmul.f32 %v647, %v743
        %v760 = vmul.f32 %v648, %v744
        %v761 = vmul.f32 %v649, %v745
        %v762 = vmul.f32 %v650, %v746
        %v763 = vmul.f32 %v651, %v747
        %v764 = vmul.f32 %v652, %v748
        %v765 = vmul.f32 %v653, %v749
        %v766 = vmul.f32 %v654, %v750
        %v767 = vmul.f32 %v655, %v751
        %v768 = vmul.f32 %v656, %v752
        %v769 = vmul.f32 %v657, %v753
        %v770 = vmul.f32 %v658, %v754
        %v771 = vmul.f32 %v659, %v755
        %v772 = vmul.f32 %v660, %v756
        %v773 = vmul.f32 %v661, %v757
        %v774 = vmul.f32 %v662, %v758
        %v776 = vlaneseq
        %v777 = vshrl.u32 %v776, 7
        %v778 = vsub.s32 0, %v777
        %v779 = vrot.slane %v596, %v778
        %v781 = vmul.f32 %v759, %v779
        %v782 = vmul.f32 %v760, %v779
        %v783 = vmul.f32 %v761, %v779
        %v784 = vmul.f32 %v762, %v779
        %v785 = vmul.f32 %v763, %v779
        %v786 = vmul.f32 %v764, %v779
        %v787 = vmul.f32 %v765, %v779
        %v788 = vmul.f32 %v766, %v779
        %v789 = vmul.f32 %v767, %v779
        %v790 = vmul.f32 %v768, %v779
        %v791 = vmul.f32 %v769, %v779
        %v792 = vmul.f32 %v770, %v779
        %v793 = vmul.f32 %v771, %v779
        %v794 = vmul.f32 %v772, %v779
        %v795 = vmul.f32 %v773, %v779
        %v796 = vmul.f32 %v774, %v779
        %v798 = vlaneseq
        %v799 = vshrl.u32 %v798, 7
        %v800 = vsub.s32 0, %v799
        %v801 = vrot.slane %v597, %v800
        %v803 = vadd.f32 %v781, %v801
        %v804 = vadd.f32 %v782, %v801
        %v805 = vadd.f32 %v783, %v801
        %v806 = vadd.f32 %v784, %v801
        %v807 = vadd.f32 %v785, %v801
        %v808 = vadd.f32 %v786, %v801
        %v809 = vadd.f32 %v787, %v801
        %v810 = vadd.f32 %v788, %v801
        %v811 = vadd.f32 %v789, %v801
        %v812 = vadd.f32 %v790, %v801
        %v813 = vadd.f32 %v791, %v801
        %v814 = vadd.f32 %v792, %v801
        %v815 = vadd.f32 %v793, %v801
        %v816 = vadd.f32 %v794, %v801
        %v817 = vadd.f32 %v795, %v801
        %v818 = vadd.f32 %v796, %v801
        %v819 = vld [vmem:[#allocation7] sm:$0xff]
        %v820 = vld [vmem:[#allocation7 + $0x8] sm:$0xff]
        %v821 = vld [vmem:[#allocation7 + $0x10] sm:$0xff]
        %v822 = vld [vmem:[#allocation7 + $0x18] sm:$0xff]
        %v823 = vld [vmem:[#allocation7 + $0x20] sm:$0xff]
        %v824 = vld [vmem:[#allocation7 + $0x28] sm:$0xff]
        %v825 = vld [vmem:[#allocation7 + $0x30] sm:$0xff]
        %v826 = vld [vmem:[#allocation7 + $0x38] sm:$0xff]
        %v827 = vld [vmem:[#allocation7 + $0x40] sm:$0xff]
        %v828 = vld [vmem:[#allocation7 + $0x48] sm:$0xff]
        %v829 = vld [vmem:[#allocation7 + $0x50] sm:$0xff]
        %v830 = vld [vmem:[#allocation7 + $0x58] sm:$0xff]
        %v831 = vld [vmem:[#allocation7 + $0x60] sm:$0xff]
        %v832 = vld [vmem:[#allocation7 + $0x68] sm:$0xff]
        %v833 = vld [vmem:[#allocation7 + $0x70] sm:$0xff]
        %v834 = vld [vmem:[#allocation7 + $0x78] sm:$0xff]
        %v835 = vld [vmem:[#allocation7 + $0x80] sm:$0xff]
        %v836 = vld [vmem:[#allocation7 + $0x88] sm:$0xff]
        %v837 = vld [vmem:[#allocation7 + $0x90] sm:$0xff]
        %v838 = vld [vmem:[#allocation7 + $0x98] sm:$0xff]
        %v839 = vld [vmem:[#allocation7 + $0xa0] sm:$0xff]
        %v840 = vld [vmem:[#allocation7 + $0xa8] sm:$0xff]
        %v841 = vld [vmem:[#allocation7 + $0xb0] sm:$0xff]
        %v842 = vld [vmem:[#allocation7 + $0xb8] sm:$0xff]
        %v843 = vld [vmem:[#allocation7 + $0xc0] sm:$0xff]
        %v844 = vld [vmem:[#allocation7 + $0xc8] sm:$0xff]
        %v845 = vld [vmem:[#allocation7 + $0xd0] sm:$0xff]
        %v846 = vld [vmem:[#allocation7 + $0xd8] sm:$0xff]
        %v847 = vld [vmem:[#allocation7 + $0xe0] sm:$0xff]
        %v848 = vld [vmem:[#allocation7 + $0xe8] sm:$0xff]
        %v849 = vld [vmem:[#allocation7 + $0xf0] sm:$0xff]
        %v850 = vld [vmem:[#allocation7 + $0xf8] sm:$0xff]
        %v851 = vld [vmem:[#allocation7 + $0x100] sm:$0xff]
        %v852 = vld [vmem:[#allocation7 + $0x108] sm:$0xff]
        %v853 = vld [vmem:[#allocation7 + $0x110] sm:$0xff]
        %v854 = vld [vmem:[#allocation7 + $0x118] sm:$0xff]
        %v855 = vld [vmem:[#allocation7 + $0x120] sm:$0xff]
        %v856 = vld [vmem:[#allocation7 + $0x128] sm:$0xff]
        %v857 = vld [vmem:[#allocation7 + $0x130] sm:$0xff]
        %v858 = vld [vmem:[#allocation7 + $0x138] sm:$0xff]
        %v859 = vld [vmem:[#allocation7 + $0x140] sm:$0xff]
        %v860 = vld [vmem:[#allocation7 + $0x148] sm:$0xff]
        %v861 = vld [vmem:[#allocation7 + $0x150] sm:$0xff]
        %v862 = vld [vmem:[#allocation7 + $0x158] sm:$0xff]
        %v863 = vld [vmem:[#allocation7 + $0x160] sm:$0xff]
        %v864 = vld [vmem:[#allocation7 + $0x168] sm:$0xff]
        %v865 = vld [vmem:[#allocation7 + $0x170] sm:$0xff]
        %v866 = vld [vmem:[#allocation7 + $0x178] sm:$0xff]
        %v867 = vld [vmem:[%s5] sm:$0x7]
        %v869 = vlaneseq
        %v870 = vshrl.u32 %v869, 7
        %v871 = vsub.s32 0, %v870
        %v872 = vrot.slane %v867, %v871
        %v873 = vlaneseq
        %v874 = vshrl.u32 %v873, 7
        %v875 = vsub.s32 1, %v874
        %v876 = vrot.slane %v867, %v875
        %v877 = vlaneseq
        %v878 = vshrl.u32 %v877, 7
        %v879 = vsub.s32 2, %v878
        %v880 = vrot.slane %v867, %v879
        %884 = vmatprep.subr.mxu0 %v820
        %885 = vmatpush1.msra.mxu0 %v819
        %886 = vmatprep.subr.mxu0 %v823
        %887 = vmatpush1.msra.mxu0 %v822
        %888 = vmatprep.subr.mxu0 %v826
        %889 = vmatpush1.msra.mxu0 %v825
        %890 = vmatprep.subr.mxu0 %v829
        %891 = vmatpush1.msra.mxu0 %v828
        %892 = vmatprep.subr.mxu0 %v832
        %893 = vmatpush1.msra.mxu0 %v831
        %894 = vmatprep.subr.mxu0 %v835
        %895 = vmatpush1.msra.mxu0 %v834
        %896 = vmatprep.subr.mxu0 %v838
        %897 = vmatpush1.msra.mxu0 %v837
        %898 = vmatprep.subr.mxu0 %v841
        %899 = vmatpush1.msra.mxu0 %v840
        %900 = vmatprep.subr.mxu0 %v844
        %901 = vmatpush1.msra.mxu0 %v843
        %902 = vmatprep.subr.mxu0 %v847
        %903 = vmatpush1.msra.mxu0 %v846
        %904 = vmatprep.subr.mxu0 %v850
        %905 = vmatpush1.msra.mxu0 %v849
        %906 = vmatprep.subr.mxu0 %v853
        %907 = vmatpush1.msra.mxu0 %v852
        %908 = vmatprep.subr.mxu0 %v856
        %909 = vmatpush1.msra.mxu0 %v855
        %910 = vmatprep.subr.mxu0 %v859
        %911 = vmatpush1.msra.mxu0 %v858
        %912 = vmatprep.subr.mxu0 %v862
        %913 = vmatpush1.msra.mxu0 %v861
        %914 = vmatprep.subr.mxu0 %v865
        %915 = vmatpush1.msra.mxu0 %v864
        %916 = vmatprep.subr.mxu0 0.0
        %917 = vmatpush1.msra.mxu0 0.0
        %918 = vmatprep.subr.mxu0 0.0
        %919 = vmatpush1.msra.mxu0 0.0
        %920 = vmatprep.subr.mxu0 0.0
        %921 = vmatpush1.msra.mxu0 0.0
        %922 = vmatprep.subr.mxu0 0.0
        %923 = vmatpush1.msra.mxu0 0.0
        %924 = vmatprep.subr.mxu0 0.0
        %925 = vmatpush1.msra.mxu0 0.0
        %926 = vmatprep.subr.mxu0 0.0
        %927 = vmatpush1.msra.mxu0 0.0
        %928 = vmatprep.subr.mxu0 0.0
        %929 = vmatpush1.msra.mxu0 0.0
        %930 = vmatprep.subr.mxu0 0.0
        %931 = vmatpush1.msra.mxu0 0.0
        %932 = vmatprep.subr.mxu0 0.0
        %933 = vmatpush1.msra.mxu0 0.0
        %934 = vmatprep.subr.mxu0 0.0
        %935 = vmatpush1.msra.mxu0 0.0
        %936 = vmatprep.subr.mxu0 0.0
        %937 = vmatpush1.msra.mxu0 0.0
        %938 = vmatprep.subr.mxu0 0.0
        %939 = vmatpush1.msra.mxu0 0.0
        %940 = vmatprep.subr.mxu0 0.0
        %941 = vmatpush1.msra.mxu0 0.0
        %942 = vmatprep.subr.mxu0 0.0
        %943 = vmatpush1.msra.mxu0 0.0
        %944 = vmatprep.subr.mxu0 0.0
        %945 = vmatpush1.msra.mxu0 0.0
        %946 = vmatprep.subr.mxu0 0.0
        %947 = vmatpush1.msra.mxu0 0.0
        %948 = vmatprep.mubr.f32.mxu0 0.0
        %949 = vmatmul.mubr.f32.gmra.mrb[0].mxu0 %v803
        %v950 = vpop.f32.mrb[0].mxu0
        %v951 = vadd.f32 %v872, %v950
        %v952 = vpop.f32.mrb[0].mxu0
        %v953 = vadd.f32 %v876, %v952
        %954 = vmatprep.mubr.f32.mxu0 0.0
        %955 = vmatmul.mubr.f32.gmra.mrb[0].mxu0 %v804
        %v956 = vpop.f32.mrb[0].mxu0
        %v957 = vadd.f32 %v872, %v956
        %v958 = vpop.f32.mrb[0].mxu0
        %v959 = vadd.f32 %v876, %v958
        %960 = vmatprep.mubr.f32.mxu0 0.0
        %961 = vmatmul.mubr.f32.gmra.mrb[0].mxu0 %v805
        %v962 = vpop.f32.mrb[0].mxu0
        %v963 = vadd.f32 %v872, %v962
        %v964 = vpop.f32.mrb[0].mxu0
        %v965 = vadd.f32 %v876, %v964
        %966 = vmatprep.mubr.f32.mxu0 0.0
        %967 = vmatmul.mubr.f32.gmra.mrb[0].mxu0 %v806
        %v968 = vpop.f32.mrb[0].mxu0
        %v969 = vadd.f32 %v872, %v968
        %v970 = vpop.f32.mrb[0].mxu0
        %v971 = vadd.f32 %v876, %v970
        %972 = vmatprep.mubr.f32.mxu0 0.0
        %973 = vmatmul.mubr.f32.gmra.mrb[0].mxu0 %v807
        %v974 = vpop.f32.mrb[0].mxu0
        %v975 = vadd.f32 %v872, %v974
        %v976 = vpop.f32.mrb[0].mxu0
        %v977 = vadd.f32 %v876, %v976
        %978 = vmatprep.mubr.f32.mxu0 0.0
        %979 = vmatmul.mubr.f32.gmra.mrb[0].mxu0 %v808
        %v980 = vpop.f32.mrb[0].mxu0
        %v981 = vadd.f32 %v872, %v980
        %v982 = vpop.f32.mrb[0].mxu0
        %v983 = vadd.f32 %v876, %v982
        %984 = vmatprep.mubr.f32.mxu0 0.0
        %985 = vmatmul.mubr.f32.gmra.mrb[0].mxu0 %v809
        %v986 = vpop.f32.mrb[0].mxu0
        %v987 = vadd.f32 %v872, %v986
        %v988 = vpop.f32.mrb[0].mxu0
        %v989 = vadd.f32 %v876, %v988
        %990 = vmatprep.mubr.f32.mxu0 0.0
        %991 = vmatmul.mubr.f32.gmra.mrb[0].mxu0 %v810
        %v992 = vpop.f32.mrb[0].mxu0
        %v993 = vadd.f32 %v872, %v992
        %v994 = vpop.f32.mrb[0].mxu0
        %v995 = vadd.f32 %v876, %v994
        %996 = vmatprep.mubr.f32.mxu0 0.0
        %997 = vmatmul.mubr.f32.gmra.mrb[0].mxu0 %v811
        %v998 = vpop.f32.mrb[0].mxu0
        %v999 = vadd.f32 %v872, %v998
        %v1000 = vpop.f32.mrb[0].mxu0
        %v1001 = vadd.f32 %v876, %v1000
        %1002 = vmatprep.mubr.f32.mxu0 0.0
        %1003 = vmatmul.mubr.f32.gmra.mrb[0].mxu0 %v812
        %v1004 = vpop.f32.mrb[0].mxu0
        %v1005 = vadd.f32 %v872, %v1004
        %v1006 = vpop.f32.mrb[0].mxu0
        %v1007 = vadd.f32 %v876, %v1006
        %1008 = vmatprep.mubr.f32.mxu0 0.0
        %1009 = vmatmul.mubr.f32.gmra.mrb[0].mxu0 %v813
        %v1010 = vpop.f32.mrb[0].mxu0
        %v1011 = vadd.f32 %v872, %v1010
        %v1012 = vpop.f32.mrb[0].mxu0
        %v1013 = vadd.f32 %v876, %v1012
        %1014 = vmatprep.mubr.f32.mxu0 0.0
        %1015 = vmatmul.mubr.f32.gmra.mrb[0].mxu0 %v814
        %v1016 = vpop.f32.mrb[0].mxu0
        %v1017 = vadd.f32 %v872, %v1016
        %v1018 = vpop.f32.mrb[0].mxu0
        %v1019 = vadd.f32 %v876, %v1018
        %1020 = vmatprep.mubr.f32.mxu0 0.0
        %1021 = vmatmul.mubr.f32.gmra.mrb[0].mxu0 %v815
        %v1022 = vpop.f32.mrb[0].mxu0
        %v1023 = vadd.f32 %v872, %v1022
        %v1024 = vpop.f32.mrb[0].mxu0
        %v1025 = vadd.f32 %v876, %v1024
        %1026 = vmatprep.mubr.f32.mxu0 0.0
        %1027 = vmatmul.mubr.f32.gmra.mrb[0].mxu0 %v816
        %v1028 = vpop.f32.mrb[0].mxu0
        %v1029 = vadd.f32 %v872, %v1028
        %v1030 = vpop.f32.mrb[0].mxu0
        %v1031 = vadd.f32 %v876, %v1030
        %1032 = vmatprep.mubr.f32.mxu0 0.0
        %1033 = vmatmul.mubr.f32.gmra.mrb[0].mxu0 %v817
        %v1034 = vpop.f32.mrb[0].mxu0
        %v1035 = vadd.f32 %v872, %v1034
        %v1036 = vpop.f32.mrb[0].mxu0
        %v1037 = vadd.f32 %v876, %v1036
        %1038 = vmatprep.mubr.f32.mxu0 0.0
        %1039 = vmatmul.mubr.f32.gmra.mrb[0].mxu0 %v818
        %v1040 = vpop.f32.mrb[0].mxu0
        %v1041 = vadd.f32 %v872, %v1040
        %v1042 = vpop.f32.mrb[0].mxu0
        %v1043 = vadd.f32 %v876, %v1042
        %1044 = vdwg.mxu0
        %1045 = vmatprep.subr.mxu0 0.0
        %1046 = vmatpush1.msra.mxu0 %v821
        %1047 = vmatprep.subr.mxu0 0.0
        %1048 = vmatpush1.msra.mxu0 %v824
        %1049 = vmatprep.subr.mxu0 0.0
        %1050 = vmatpush1.msra.mxu0 %v827
        %1051 = vmatprep.subr.mxu0 0.0
        %1052 = vmatpush1.msra.mxu0 %v830
        %1053 = vmatprep.subr.mxu0 0.0
        %1054 = vmatpush1.msra.mxu0 %v833
        %1055 = vmatprep.subr.mxu0 0.0
        %1056 = vmatpush1.msra.mxu0 %v836
        %1057 = vmatprep.subr.mxu0 0.0
        %1058 = vmatpush1.msra.mxu0 %v839
        %1059 = vmatprep.subr.mxu0 0.0
        %1060 = vmatpush1.msra.mxu0 %v842
        %1061 = vmatprep.subr.mxu0 0.0
        %1062 = vmatpush1.msra.mxu0 %v845
        %1063 = vmatprep.subr.mxu0 0.0
        %1064 = vmatpush1.msra.mxu0 %v848
        %1065 = vmatprep.subr.mxu0 0.0
        %1066 = vmatpush1.msra.mxu0 %v851
        %1067 = vmatprep.subr.mxu0 0.0
        %1068 = vmatpush1.msra.mxu0 %v854
        %1069 = vmatprep.subr.mxu0 0.0
        %1070 = vmatpush1.msra.mxu0 %v857
        %1071 = vmatprep.subr.mxu0 0.0
        %1072 = vmatpush1.msra.mxu0 %v860
        %1073 = vmatprep.subr.mxu0 0.0
        %1074 = vmatpush1.msra.mxu0 %v863
        %1075 = vmatprep.subr.mxu0 0.0
        %1076 = vmatpush1.msra.mxu0 %v866
        %1077 = vmatprep.subr.mxu0 0.0
        %1078 = vmatpush1.msra.mxu0 0.0
        %1079 = vmatprep.subr.mxu0 0.0
        %1080 = vmatpush1.msra.mxu0 0.0
        %1081 = vmatprep.subr.mxu0 0.0
        %1082 = vmatpush1.msra.mxu0 0.0
        %1083 = vmatprep.subr.mxu0 0.0
        %1084 = vmatpush1.msra.mxu0 0.0
        %1085 = vmatprep.subr.mxu0 0.0
        %1086 = vmatpush1.msra.mxu0 0.0
        %1087 = vmatprep.subr.mxu0 0.0
        %1088 = vmatpush1.msra.mxu0 0.0
        %1089 = vmatprep.subr.mxu0 0.0
        %1090 = vmatpush1.msra.mxu0 0.0
        %1091 = vmatprep.subr.mxu0 0.0
        %1092 = vmatpush1.msra.mxu0 0.0
        %1093 = vmatprep.subr.mxu0 0.0
        %1094 = vmatpush1.msra.mxu0 0.0
        %1095 = vmatprep.subr.mxu0 0.0
        %1096 = vmatpush1.msra.mxu0 0.0
        %1097 = vmatprep.subr.mxu0 0.0
        %1098 = vmatpush1.msra.mxu0 0.0
        %1099 = vmatprep.subr.mxu0 0.0
        %1100 = vmatpush1.msra.mxu0 0.0
        %1101 = vmatprep.subr.mxu0 0.0
        %1102 = vmatpush1.msra.mxu0 0.0
        %1103 = vmatprep.subr.mxu0 0.0
        %1104 = vmatpush1.msra.mxu0 0.0
        %1105 = vmatprep.subr.mxu0 0.0
        %1106 = vmatpush1.msra.mxu0 0.0
        %1107 = vmatprep.subr.mxu0 0.0
        %1108 = vmatpush1.msra.mxu0 0.0
        %1109 = vmatprep.mubr.f32.mxu0 0.0
        %1110 = vmatmul.mubr.f32.gmra.mrb[0].mxu0 %v803
        %v1111 = vpop.f32.mrb[0].mxu0
        %v1112 = vadd.f32 %v880, %v1111
        %v1113 = vpop.f32.mrb[0].mxu0
        %1114 = vmatprep.mubr.f32.mxu0 0.0
        %1115 = vmatmul.mubr.f32.gmra.mrb[0].mxu0 %v804
        %v1116 = vpop.f32.mrb[0].mxu0
        %v1117 = vadd.f32 %v880, %v1116
        %v1118 = vpop.f32.mrb[0].mxu0
        %1119 = vmatprep.mubr.f32.mxu0 0.0
        %1120 = vmatmul.mubr.f32.gmra.mrb[0].mxu0 %v805
        %v1121 = vpop.f32.mrb[0].mxu0
        %v1122 = vadd.f32 %v880, %v1121
        %v1123 = vpop.f32.mrb[0].mxu0
        %1124 = vmatprep.mubr.f32.mxu0 0.0
        %1125 = vmatmul.mubr.f32.gmra.mrb[0].mxu0 %v806
        %v1126 = vpop.f32.mrb[0].mxu0
        %v1127 = vadd.f32 %v880, %v1126
        %v1128 = vpop.f32.mrb[0].mxu0
        %1129 = vmatprep.mubr.f32.mxu0 0.0
        %1130 = vmatmul.mubr.f32.gmra.mrb[0].mxu0 %v807
        %v1131 = vpop.f32.mrb[0].mxu0
        %v1132 = vadd.f32 %v880, %v1131
        %v1133 = vpop.f32.mrb[0].mxu0
        %1134 = vmatprep.mubr.f32.mxu0 0.0
        %1135 = vmatmul.mubr.f32.gmra.mrb[0].mxu0 %v808
        %v1136 = vpop.f32.mrb[0].mxu0
        %v1137 = vadd.f32 %v880, %v1136
        %v1138 = vpop.f32.mrb[0].mxu0
        %1139 = vmatprep.mubr.f32.mxu0 0.0
        %1140 = vmatmul.mubr.f32.gmra.mrb[0].mxu0 %v809
        %v1141 = vpop.f32.mrb[0].mxu0
        %v1142 = vadd.f32 %v880, %v1141
        %v1143 = vpop.f32.mrb[0].mxu0
        %1144 = vmatprep.mubr.f32.mxu0 0.0
        %1145 = vmatmul.mubr.f32.gmra.mrb[0].mxu0 %v810
        %v1146 = vpop.f32.mrb[0].mxu0
        %v1147 = vadd.f32 %v880, %v1146
        %v1148 = vpop.f32.mrb[0].mxu0
        %1149 = vmatprep.mubr.f32.mxu0 0.0
        %1150 = vmatmul.mubr.f32.gmra.mrb[0].mxu0 %v811
        %v1151 = vpop.f32.mrb[0].mxu0
        %v1152 = vadd.f32 %v880, %v1151
        %v1153 = vpop.f32.mrb[0].mxu0
        %1154 = vmatprep.mubr.f32.mxu0 0.0
        %1155 = vmatmul.mubr.f32.gmra.mrb[0].mxu0 %v812
        %v1156 = vpop.f32.mrb[0].mxu0
        %v1157 = vadd.f32 %v880, %v1156
        %v1158 = vpop.f32.mrb[0].mxu0
        %1159 = vmatprep.mubr.f32.mxu0 0.0
        %1160 = vmatmul.mubr.f32.gmra.mrb[0].mxu0 %v813
        %v1161 = vpop.f32.mrb[0].mxu0
        %v1162 = vadd.f32 %v880, %v1161
        %v1163 = vpop.f32.mrb[0].mxu0
        %1164 = vmatprep.mubr.f32.mxu0 0.0
        %1165 = vmatmul.mubr.f32.gmra.mrb[0].mxu0 %v814
        %v1166 = vpop.f32.mrb[0].mxu0
        %v1167 = vadd.f32 %v880, %v1166
        %v1168 = vpop.f32.mrb[0].mxu0
        %1169 = vmatprep.mubr.f32.mxu0 0.0
        %1170 = vmatmul.mubr.f32.gmra.mrb[0].mxu0 %v815
        %v1171 = vpop.f32.mrb[0].mxu0
        %v1172 = vadd.f32 %v880, %v1171
        %v1173 = vpop.f32.mrb[0].mxu0
        %1174 = vmatprep.mubr.f32.mxu0 0.0
        %1175 = vmatmul.mubr.f32.gmra.mrb[0].mxu0 %v816
        %v1176 = vpop.f32.mrb[0].mxu0
        %v1177 = vadd.f32 %v880, %v1176
        %v1178 = vpop.f32.mrb[0].mxu0
        %1179 = vmatprep.mubr.f32.mxu0 0.0
        %1180 = vmatmul.mubr.f32.gmra.mrb[0].mxu0 %v817
        %v1181 = vpop.f32.mrb[0].mxu0
        %v1182 = vadd.f32 %v880, %v1181
        %v1183 = vpop.f32.mrb[0].mxu0
        %1184 = vmatprep.mubr.f32.mxu0 0.0
        %1185 = vmatmul.mubr.f32.gmra.mrb[0].mxu0 %v818
        %v1186 = vpop.f32.mrb[0].mxu0
        %v1187 = vadd.f32 %v880, %v1186
        %v1188 = vpop.f32.mrb[0].mxu0
        %1189 = vdwg.mxu0
        %v1190 = vmul.f32 %v951, 0.17677669
        %v1191 = vmul.f32 %v957, 0.17677669
        %v1192 = vmul.f32 %v963, 0.17677669
        %v1193 = vmul.f32 %v969, 0.17677669
        %v1194 = vmul.f32 %v975, 0.17677669
        %v1195 = vmul.f32 %v981, 0.17677669
        %v1196 = vmul.f32 %v987, 0.17677669
        %v1197 = vmul.f32 %v993, 0.17677669
        %v1198 = vmul.f32 %v999, 0.17677669
        %v1199 = vmul.f32 %v1005, 0.17677669
        %v1200 = vmul.f32 %v1011, 0.17677669
        %v1201 = vmul.f32 %v1017, 0.17677669
        %v1202 = vmul.f32 %v1023, 0.17677669
        %v1203 = vmul.f32 %v1029, 0.17677669
        %v1204 = vmul.f32 %v1035, 0.17677669
        %v1205 = vmul.f32 %v1041, 0.17677669
        %v1206 = vld [vmem:[#allocation8] sm:$0xff]
        %v1207 = vld [vmem:[#allocation8 + $0x8] sm:$0xff]
        %v1208 = vld [vmem:[#allocation8 + $0x10] sm:$0xff]
        %v1209 = vld [vmem:[#allocation8 + $0x18] sm:$0xff]
        %v1210 = vld [vmem:[#allocation8 + $0x20] sm:$0xff]
        %v1211 = vld [vmem:[#allocation8 + $0x28] sm:$0xff]
        %v1212 = vld [vmem:[#allocation8 + $0x30] sm:$0xff]
        %v1213 = vld [vmem:[#allocation8 + $0x38] sm:$0xff]
        %v1214 = vld [vmem:[#allocation8 + $0x40] sm:$0xff]
        %v1215 = vld [vmem:[#allocation8 + $0x48] sm:$0xff]
        %v1216 = vld [vmem:[#allocation8 + $0x50] sm:$0xff]
        %v1217 = vld [vmem:[#allocation8 + $0x58] sm:$0xff]
        %v1218 = vld [vmem:[#allocation8 + $0x60] sm:$0xff]
        %v1219 = vld [vmem:[#allocation8 + $0x68] sm:$0xff]
        %v1220 = vld [vmem:[#allocation8 + $0x70] sm:$0xff]
        %v1221 = vld [vmem:[#allocation8 + $0x78] sm:$0xff]
        %v1222 = vld [vmem:[%s7] sm:$0x1]
        %v1224 = vlaneseq
        %v1225 = vshrl.u32 %v1224, 7
        %v1226 = vsub.s32 0, %v1225
        %v1227 = vrot.slane %v1222, %v1226
        %v1229 = vadd.f32 %v571, %v1227
        %v1230 = vadd.f32 %v572, %v1227
        %v1231 = vadd.f32 %v573, %v1227
        %v1232 = vadd.f32 %v574, %v1227
        %v1233 = vadd.f32 %v575, %v1227
        %v1234 = vadd.f32 %v576, %v1227
        %v1235 = vadd.f32 %v577, %v1227
        %v1236 = vadd.f32 %v578, %v1227
        %v1237 = vadd.f32 %v579, %v1227
        %v1238 = vadd.f32 %v580, %v1227
        %v1239 = vadd.f32 %v581, %v1227
        %v1240 = vadd.f32 %v582, %v1227
        %v1241 = vadd.f32 %v583, %v1227
        %v1242 = vadd.f32 %v584, %v1227
        %v1243 = vadd.f32 %v585, %v1227
        %v1244 = vadd.f32 %v586, %v1227
        %vm1245 = vcmask 261120
        %v1247 = vsel %vm1245, %v1190, 0
        %v1250 = vsel %vm1245, %v1191, 0
        %v1253 = vsel %vm1245, %v1192, 0
        %v1256 = vsel %vm1245, %v1193, 0
        %v1259 = vsel %vm1245, %v1194, 0
        %v1262 = vsel %vm1245, %v1195, 0
        %v1265 = vsel %vm1245, %v1196, 0
        %v1268 = vsel %vm1245, %v1197, 0
        %v1271 = vsel %vm1245, %v1198, 0
        %v1274 = vsel %vm1245, %v1199, 0
        %v1277 = vsel %vm1245, %v1200, 0
        %v1280 = vsel %vm1245, %v1201, 0
        %v1283 = vsel %vm1245, %v1202, 0
        %v1286 = vsel %vm1245, %v1203, 0
        %v1289 = vsel %vm1245, %v1204, 0
        %v1292 = vsel %vm1245, %v1205, 0
        %v1295 = vsel %vm1245, %v953, 0
        %v1298 = vsel %vm1245, %v959, 0
        %v1301 = vsel %vm1245, %v965, 0
        %v1304 = vsel %vm1245, %v971, 0
        %v1307 = vsel %vm1245, %v977, 0
        %v1310 = vsel %vm1245, %v983, 0
        %v1313 = vsel %vm1245, %v989, 0
        %v1316 = vsel %vm1245, %v995, 0
        %v1319 = vsel %vm1245, %v1001, 0
        %v1322 = vsel %vm1245, %v1007, 0
        %v1325 = vsel %vm1245, %v1013, 0
        %v1328 = vsel %vm1245, %v1019, 0
        %v1331 = vsel %vm1245, %v1025, 0
        %v1334 = vsel %vm1245, %v1031, 0
        %v1337 = vsel %vm1245, %v1037, 0
        %v1340 = vsel %vm1245, %v1043, 0
        %1342 = vmatprep.subr.mxu0 0.0
        %1343 = vmatpush1.xpose.msra.mxu0 %v1295
        %1344 = vmatprep.subr.mxu0 0.0
        %1345 = vmatpush1.xpose.msra.mxu0 %v1298
        %1346 = vmatprep.subr.mxu0 0.0
        %1347 = vmatpush1.xpose.msra.mxu0 %v1301
        %1348 = vmatprep.subr.mxu0 0.0
        %1349 = vmatpush1.xpose.msra.mxu0 %v1304
        %1350 = vmatprep.subr.mxu0 0.0
        %1351 = vmatpush1.xpose.msra.mxu0 %v1307
        %1352 = vmatprep.subr.mxu0 0.0
        %1353 = vmatpush1.xpose.msra.mxu0 %v1310
        %1354 = vmatprep.subr.mxu0 0.0
        %1355 = vmatpush1.xpose.msra.mxu0 %v1313
        %1356 = vmatprep.subr.mxu0 0.0
        %1357 = vmatpush1.xpose.msra.mxu0 %v1316
        %1358 = vmatprep.subr.mxu0 0.0
        %1359 = vmatpush1.xpose.msra.mxu0 %v1319
        %1360 = vmatprep.subr.mxu0 0.0
        %1361 = vmatpush1.xpose.msra.mxu0 %v1322
        %1362 = vmatprep.subr.mxu0 0.0
        %1363 = vmatpush1.xpose.msra.mxu0 %v1325
        %1364 = vmatprep.subr.mxu0 0.0
        %1365 = vmatpush1.xpose.msra.mxu0 %v1328
        %1366 = vmatprep.subr.mxu0 0.0
        %1367 = vmatpush1.xpose.msra.mxu0 %v1331
        %1368 = vmatprep.subr.mxu0 0.0
        %1369 = vmatpush1.xpose.msra.mxu0 %v1334
        %1370 = vmatprep.subr.mxu0 0.0
        %1371 = vmatpush1.xpose.msra.mxu0 %v1337
        %1372 = vmatprep.subr.mxu0 0.0
        %1373 = vmatpush1.xpose.msra.mxu0 %v1340
        %1374 = vmatprep.subr.mxu0 0.0
        %1375 = vmatpush1.xpose.msra.mxu0 0.0
        %1376 = vmatprep.subr.mxu0 0.0
        %1377 = vmatpush1.xpose.msra.mxu0 0.0
        %1378 = vmatprep.subr.mxu0 0.0
        %1379 = vmatpush1.xpose.msra.mxu0 0.0
        %1380 = vmatprep.subr.mxu0 0.0
        %1381 = vmatpush1.xpose.msra.mxu0 0.0
        %1382 = vmatprep.subr.mxu0 0.0
        %1383 = vmatpush1.xpose.msra.mxu0 0.0
        %1384 = vmatprep.subr.mxu0 0.0
        %1385 = vmatpush1.xpose.msra.mxu0 0.0
        %1386 = vmatprep.subr.mxu0 0.0
        %1387 = vmatpush1.xpose.msra.mxu0 0.0
        %1388 = vmatprep.subr.mxu0 0.0
        %1389 = vmatpush1.xpose.msra.mxu0 0.0
        %1390 = vmatprep.subr.mxu0 0.0
        %1391 = vmatpush1.xpose.msra.mxu0 0.0
        %1392 = vmatprep.subr.mxu0 0.0
        %1393 = vmatpush1.xpose.msra.mxu0 0.0
        %1394 = vmatprep.subr.mxu0 0.0
        %1395 = vmatpush1.xpose.msra.mxu0 0.0
        %1396 = vmatprep.subr.mxu0 0.0
        %1397 = vmatpush1.xpose.msra.mxu0 0.0
        %1398 = vmatprep.subr.mxu0 0.0
        %1399 = vmatpush1.xpose.msra.mxu0 0.0
        %1400 = vmatprep.subr.mxu0 0.0
        %1401 = vmatpush1.xpose.msra.mxu0 0.0
        %1402 = vmatprep.subr.mxu0 0.0
        %1403 = vmatpush1.xpose.msra.mxu0 0.0
        %1404 = vmatprep.subr.mxu0 0.0
        %1405 = vmatpush1.xpose.msra.mxu0 0.0
        %1406 = vmatprep.mubr.f32.mxu0 0.0
        %1407 = vmatmul.mubr.f32.gmra.mrb[0].mxu0 %v1247
        %v1408 = vpop.f32.mrb[0].mxu0
        %v1409 = vadd.f32 %v594, %v1408
        %v1410 = vpop.f32.mrb[0].mxu0
        %1411 = vmatprep.mubr.f32.mxu0 0.0
        %1412 = vmatmul.mubr.f32.gmra.mrb[0].mxu0 %v1250
        %v1413 = vpop.f32.mrb[0].mxu0
        %v1414 = vadd.f32 %v594, %v1413
        %v1415 = vpop.f32.mrb[0].mxu0
        %1416 = vmatprep.mubr.f32.mxu0 0.0
        %1417 = vmatmul.mubr.f32.gmra.mrb[0].mxu0 %v1253
        %v1418 = vpop.f32.mrb[0].mxu0
        %v1419 = vadd.f32 %v594, %v1418
        %v1420 = vpop.f32.mrb[0].mxu0
        %1421 = vmatprep.mubr.f32.mxu0 0.0
        %1422 = vmatmul.mubr.f32.gmra.mrb[0].mxu0 %v1256
        %v1423 = vpop.f32.mrb[0].mxu0
        %v1424 = vadd.f32 %v594, %v1423
        %v1425 = vpop.f32.mrb[0].mxu0
        %1426 = vmatprep.mubr.f32.mxu0 0.0
        %1427 = vmatmul.mubr.f32.gmra.mrb[0].mxu0 %v1259
        %v1428 = vpop.f32.mrb[0].mxu0
        %v1429 = vadd.f32 %v594, %v1428
        %v1430 = vpop.f32.mrb[0].mxu0
        %1431 = vmatprep.mubr.f32.mxu0 0.0
        %1432 = vmatmul.mubr.f32.gmra.mrb[0].mxu0 %v1262
        %v1433 = vpop.f32.mrb[0].mxu0
        %v1434 = vadd.f32 %v594, %v1433
        %v1435 = vpop.f32.mrb[0].mxu0
        %1436 = vmatprep.mubr.f32.mxu0 0.0
        %1437 = vmatmul.mubr.f32.gmra.mrb[0].mxu0 %v1265
        %v1438 = vpop.f32.mrb[0].mxu0
        %v1439 = vadd.f32 %v594, %v1438
        %v1440 = vpop.f32.mrb[0].mxu0
        %1441 = vmatprep.mubr.f32.mxu0 0.0
        %1442 = vmatmul.mubr.f32.gmra.mrb[0].mxu0 %v1268
        %v1443 = vpop.f32.mrb[0].mxu0
        %v1444 = vadd.f32 %v594, %v1443
        %v1445 = vpop.f32.mrb[0].mxu0
        %1446 = vmatprep.mubr.f32.mxu0 0.0
        %1447 = vmatmul.mubr.f32.gmra.mrb[0].mxu0 %v1271
        %v1448 = vpop.f32.mrb[0].mxu0
        %v1449 = vadd.f32 %v594, %v1448
        %v1450 = vpop.f32.mrb[0].mxu0
        %1451 = vmatprep.mubr.f32.mxu0 0.0
        %1452 = vmatmul.mubr.f32.gmra.mrb[0].mxu0 %v1274
        %v1453 = vpop.f32.mrb[0].mxu0
        %v1454 = vadd.f32 %v594, %v1453
        %v1455 = vpop.f32.mrb[0].mxu0
        %1456 = vmatprep.mubr.f32.mxu0 0.0
        %1457 = vmatmul.mubr.f32.gmra.mrb[0].mxu0 %v1277
        %v1458 = vpop.f32.mrb[0].mxu0
        %v1459 = vadd.f32 %v594, %v1458
        %v1460 = vpop.f32.mrb[0].mxu0
        %1461 = vmatprep.mubr.f32.mxu0 0.0
        %1462 = vmatmul.mubr.f32.gmra.mrb[0].mxu0 %v1280
        %v1463 = vpop.f32.mrb[0].mxu0
        %v1464 = vadd.f32 %v594, %v1463
        %v1465 = vpop.f32.mrb[0].mxu0
        %1466 = vmatprep.mubr.f32.mxu0 0.0
        %1467 = vmatmul.mubr.f32.gmra.mrb[0].mxu0 %v1283
        %v1468 = vpop.f32.mrb[0].mxu0
        %v1469 = vadd.f32 %v594, %v1468
        %v1470 = vpop.f32.mrb[0].mxu0
        %1471 = vmatprep.mubr.f32.mxu0 0.0
        %1472 = vmatmul.mubr.f32.gmra.mrb[0].mxu0 %v1286
        %v1473 = vpop.f32.mrb[0].mxu0
        %v1474 = vadd.f32 %v594, %v1473
        %v1475 = vpop.f32.mrb[0].mxu0
        %1476 = vmatprep.mubr.f32.mxu0 0.0
        %1477 = vmatmul.mubr.f32.gmra.mrb[0].mxu0 %v1289
        %v1478 = vpop.f32.mrb[0].mxu0
        %v1479 = vadd.f32 %v594, %v1478
        %v1480 = vpop.f32.mrb[0].mxu0
        %1481 = vmatprep.mubr.f32.mxu0 0.0
        %1482 = vmatmul.mubr.f32.gmra.mrb[0].mxu0 %v1292
        %v1483 = vpop.f32.mrb[0].mxu0
        %v1484 = vadd.f32 %v594, %v1483
        %v1485 = vpop.f32.mrb[0].mxu0
        %1486 = vdwg.mxu0
        %1487 = vmax.xlane.f32.xlu0 %v1409
        %v1488 = vpop.xlane.xlu0 %1487
        %1489 = vmax.xlane.f32.xlu0 %v1414
        %v1490 = vpop.xlane.xlu0 %1489
        %1491 = vmax.xlane.f32.xlu0 %v1419
        %v1492 = vpop.xlane.xlu0 %1491
        %1493 = vmax.xlane.f32.xlu0 %v1424
        %v1494 = vpop.xlane.xlu0 %1493
        %1495 = vmax.xlane.f32.xlu0 %v1429
        %v1496 = vpop.xlane.xlu0 %1495
        %1497 = vmax.xlane.f32.xlu0 %v1434
        %v1498 = vpop.xlane.xlu0 %1497
        %1499 = vmax.xlane.f32.xlu0 %v1439
        %v1500 = vpop.xlane.xlu0 %1499
        %1501 = vmax.xlane.f32.xlu0 %v1444
        %v1502 = vpop.xlane.xlu0 %1501
        %1503 = vmax.xlane.f32.xlu0 %v1449
        %v1504 = vpop.xlane.xlu0 %1503
        %1505 = vmax.xlane.f32.xlu0 %v1454
        %v1506 = vpop.xlane.xlu0 %1505
        %1507 = vmax.xlane.f32.xlu0 %v1459
        %v1508 = vpop.xlane.xlu0 %1507
        %1509 = vmax.xlane.f32.xlu0 %v1464
        %v1510 = vpop.xlane.xlu0 %1509
        %1511 = vmax.xlane.f32.xlu0 %v1469
        %v1512 = vpop.xlane.xlu0 %1511
        %1513 = vmax.xlane.f32.xlu0 %v1474
        %v1514 = vpop.xlane.xlu0 %1513
        %1515 = vmax.xlane.f32.xlu0 %v1479
        %v1516 = vpop.xlane.xlu0 %1515
        %1517 = vmax.xlane.f32.xlu0 %v1484
        %v1518 = vpop.xlane.xlu0 %1517
        %v1519 = vsub.f32 %v1409, %v1488
        %v1520 = vsub.f32 %v1414, %v1490
        %v1521 = vsub.f32 %v1419, %v1492
        %v1522 = vsub.f32 %v1424, %v1494
        %v1523 = vsub.f32 %v1429, %v1496
        %v1524 = vsub.f32 %v1434, %v1498
        %v1525 = vsub.f32 %v1439, %v1500
        %v1526 = vsub.f32 %v1444, %v1502
        %v1527 = vsub.f32 %v1449, %v1504
        %v1528 = vsub.f32 %v1454, %v1506
        %v1529 = vsub.f32 %v1459, %v1508
        %v1530 = vsub.f32 %v1464, %v1510
        %v1531 = vsub.f32 %v1469, %v1512
        %v1532 = vsub.f32 %v1474, %v1514
        %v1533 = vsub.f32 %v1479, %v1516
        %v1534 = vsub.f32 %v1484, %v1518
        %v1535 = vmul.f32 %v1519, 1.442695
        %v1536 = vpow.pop %v1535
        %v1537 = vmul.f32 %v1520, 1.442695
        %v1538 = vpow.pop %v1537
        %v1539 = vmul.f32 %v1521, 1.442695
        %v1540 = vpow.pop %v1539
        %v1541 = vmul.f32 %v1522, 1.442695
        %v1542 = vpow.pop %v1541
        %v1543 = vmul.f32 %v1523, 1.442695
        %v1544 = vpow.pop %v1543
        %v1545 = vmul.f32 %v1524, 1.442695
        %v1546 = vpow.pop %v1545
        %v1547 = vmul.f32 %v1525, 1.442695
        %v1548 = vpow.pop %v1547
        %v1549 = vmul.f32 %v1526, 1.442695
        %v1550 = vpow.pop %v1549
        %v1551 = vmul.f32 %v1527, 1.442695
        %v1552 = vpow.pop %v1551
        %v1553 = vmul.f32 %v1528, 1.442695
        %v1554 = vpow.pop %v1553
        %v1555 = vmul.f32 %v1529, 1.442695
        %v1556 = vpow.pop %v1555
        %v1557 = vmul.f32 %v1530, 1.442695
        %v1558 = vpow.pop %v1557
        %v1559 = vmul.f32 %v1531, 1.442695
        %v1560 = vpow.pop %v1559
        %v1561 = vmul.f32 %v1532, 1.442695
        %v1562 = vpow.pop %v1561
        %v1563 = vmul.f32 %v1533, 1.442695
        %v1564 = vpow.pop %v1563
        %v1565 = vmul.f32 %v1534, 1.442695
        %v1566 = vpow.pop %v1565
        %1567 = vadd.xlane.f32.xlu0 %v1536
        %v1568 = vpop.xlane.xlu0 %1567
        %1569 = vadd.xlane.f32.xlu0 %v1538
        %v1570 = vpop.xlane.xlu0 %1569
        %1571 = vadd.xlane.f32.xlu0 %v1540
        %v1572 = vpop.xlane.xlu0 %1571
        %1573 = vadd.xlane.f32.xlu0 %v1542
        %v1574 = vpop.xlane.xlu0 %1573
        %1575 = vadd.xlane.f32.xlu0 %v1544
        %v1576 = vpop.xlane.xlu0 %1575
        %1577 = vadd.xlane.f32.xlu0 %v1546
        %v1578 = vpop.xlane.xlu0 %1577
        %1579 = vadd.xlane.f32.xlu0 %v1548
        %v1580 = vpop.xlane.xlu0 %1579
        %1581 = vadd.xlane.f32.xlu0 %v1550
        %v1582 = vpop.xlane.xlu0 %1581
        %1583 = vadd.xlane.f32.xlu0 %v1552
        %v1584 = vpop.xlane.xlu0 %1583
        %1585 = vadd.xlane.f32.xlu0 %v1554
        %v1586 = vpop.xlane.xlu0 %1585
        %1587 = vadd.xlane.f32.xlu0 %v1556
        %v1588 = vpop.xlane.xlu0 %1587
        %1589 = vadd.xlane.f32.xlu0 %v1558
        %v1590 = vpop.xlane.xlu0 %1589
        %1591 = vadd.xlane.f32.xlu0 %v1560
        %v1592 = vpop.xlane.xlu0 %1591
        %1593 = vadd.xlane.f32.xlu0 %v1562
        %v1594 = vpop.xlane.xlu0 %1593
        %1595 = vadd.xlane.f32.xlu0 %v1564
        %v1596 = vpop.xlane.xlu0 %1595
        %1597 = vadd.xlane.f32.xlu0 %v1566
        %v1598 = vpop.xlane.xlu0 %1597
        %v1599 = vrcp.pop %v1568
        %v1600 = vrcp.pop %v1570
        %v1601 = vrcp.pop %v1572
        %v1602 = vrcp.pop %v1574
        %v1603 = vrcp.pop %v1576
        %v1604 = vrcp.pop %v1578
        %v1605 = vrcp.pop %v1580
        %v1606 = vrcp.pop %v1582
        %v1607 = vrcp.pop %v1584
        %v1608 = vrcp.pop %v1586
        %v1609 = vrcp.pop %v1588
        %v1610 = vrcp.pop %v1590
        %v1611 = vrcp.pop %v1592
        %v1612 = vrcp.pop %v1594
        %v1613 = vrcp.pop %v1596
        %v1614 = vrcp.pop %v1598
        %1615 = vmatprep.subr.mxu0 0.0
        %1616 = vmatpush1.msra.mxu0 %v1112
        %1617 = vmatprep.subr.mxu0 0.0
        %1618 = vmatpush1.msra.mxu0 %v1117
        %1619 = vmatprep.subr.mxu0 0.0
        %1620 = vmatpush1.msra.mxu0 %v1122
        %1621 = vmatprep.subr.mxu0 0.0
        %1622 = vmatpush1.msra.mxu0 %v1127
        %1623 = vmatprep.subr.mxu0 0.0
        %1624 = vmatpush1.msra.mxu0 %v1132
        %1625 = vmatprep.subr.mxu0 0.0
        %1626 = vmatpush1.msra.mxu0 %v1137
        %1627 = vmatprep.subr.mxu0 0.0
        %1628 = vmatpush1.msra.mxu0 %v1142
        %1629 = vmatprep.subr.mxu0 0.0
        %1630 = vmatpush1.msra.mxu0 %v1147
        %1631 = vmatprep.subr.mxu0 0.0
        %1632 = vmatpush1.msra.mxu0 %v1152
        %1633 = vmatprep.subr.mxu0 0.0
        %1634 = vmatpush1.msra.mxu0 %v1157
        %1635 = vmatprep.subr.mxu0 0.0
        %1636 = vmatpush1.msra.mxu0 %v1162
        %1637 = vmatprep.subr.mxu0 0.0
        %1638 = vmatpush1.msra.mxu0 %v1167
        %1639 = vmatprep.subr.mxu0 0.0
        %1640 = vmatpush1.msra.mxu0 %v1172
        %1641 = vmatprep.subr.mxu0 0.0
        %1642 = vmatpush1.msra.mxu0 %v1177
        %1643 = vmatprep.subr.mxu0 0.0
        %1644 = vmatpush1.msra.mxu0 %v1182
        %1645 = vmatprep.subr.mxu0 0.0
        %1646 = vmatpush1.msra.mxu0 %v1187
        %1647 = vmatprep.subr.mxu0 0.0
        %1648 = vmatpush1.msra.mxu0 0.0
        %1649 = vmatprep.subr.mxu0 0.0
        %1650 = vmatpush1.msra.mxu0 0.0
        %1651 = vmatprep.subr.mxu0 0.0
        %1652 = vmatpush1.msra.mxu0 0.0
        %1653 = vmatprep.subr.mxu0 0.0
        %1654 = vmatpush1.msra.mxu0 0.0
        %1655 = vmatprep.subr.mxu0 0.0
        %1656 = vmatpush1.msra.mxu0 0.0
        %1657 = vmatprep.subr.mxu0 0.0
        %1658 = vmatpush1.msra.mxu0 0.0
        %1659 = vmatprep.subr.mxu0 0.0
        %1660 = vmatpush1.msra.mxu0 0.0
        %1661 = vmatprep.subr.mxu0 0.0
        %1662 = vmatpush1.msra.mxu0 0.0
        %1663 = vmatprep.subr.mxu0 0.0
        %1664 = vmatpush1.msra.mxu0 0.0
        %1665 = vmatprep.subr.mxu0 0.0
        %1666 = vmatpush1.msra.mxu0 0.0
        %1667 = vmatprep.subr.mxu0 0.0
        %1668 = vmatpush1.msra.mxu0 0.0
        %1669 = vmatprep.subr.mxu0 0.0
        %1670 = vmatpush1.msra.mxu0 0.0
        %1671 = vmatprep.subr.mxu0 0.0
        %1672 = vmatpush1.msra.mxu0 0.0
        %1673 = vmatprep.subr.mxu0 0.0
        %1674 = vmatpush1.msra.mxu0 0.0
        %1675 = vmatprep.subr.mxu0 0.0
        %1676 = vmatpush1.msra.mxu0 0.0
        %1677 = vmatprep.subr.mxu0 0.0
        %1678 = vmatpush1.msra.mxu0 0.0
        %1679 = vmatprep.mubr.f32.mxu0 0.0
        %1680 = vmatmul.mubr.f32.gmra.mrb[0].mxu0 %v1536
        %v1681 = vpop.f32.mrb[0].mxu0
        %v1682 = vadd.f32 0.0, %v1681
        %v1683 = vpop.f32.mrb[0].mxu0
        %1684 = vmatprep.mubr.f32.mxu0 0.0
        %1685 = vmatmul.mubr.f32.gmra.mrb[0].mxu0 %v1538
        %v1686 = vpop.f32.mrb[0].mxu0
        %v1687 = vadd.f32 0.0, %v1686
        %v1688 = vpop.f32.mrb[0].mxu0
        %1689 = vmatprep.mubr.f32.mxu0 0.0
        %1690 = vmatmul.mubr.f32.gmra.mrb[0].mxu0 %v1540
        %v1691 = vpop.f32.mrb[0].mxu0
        %v1692 = vadd.f32 0.0, %v1691
        %v1693 = vpop.f32.mrb[0].mxu0
        %1694 = vmatprep.mubr.f32.mxu0 0.0
        %1695 = vmatmul.mubr.f32.gmra.mrb[0].mxu0 %v1542
        %v1696 = vpop.f32.mrb[0].mxu0
        %v1697 = vadd.f32 0.0, %v1696
        %v1698 = vpop.f32.mrb[0].mxu0
        %1699 = vmatprep.mubr.f32.mxu0 0.0
        %1700 = vmatmul.mubr.f32.gmra.mrb[0].mxu0 %v1544
        %v1701 = vpop.f32.mrb[0].mxu0
        %v1702 = vadd.f32 0.0, %v1701
        %v1703 = vpop.f32.mrb[0].mxu0
        %1704 = vmatprep.mubr.f32.mxu0 0.0
        %1705 = vmatmul.mubr.f32.gmra.mrb[0].mxu0 %v1546
        %v1706 = vpop.f32.mrb[0].mxu0
        %v1707 = vadd.f32 0.0, %v1706
        %v1708 = vpop.f32.mrb[0].mxu0
        %1709 = vmatprep.mubr.f32.mxu0 0.0
        %1710 = vmatmul.mubr.f32.gmra.mrb[0].mxu0 %v1548
        %v1711 = vpop.f32.mrb[0].mxu0
        %v1712 = vadd.f32 0.0, %v1711
        %v1713 = vpop.f32.mrb[0].mxu0
        %1714 = vmatprep.mubr.f32.mxu0 0.0
        %1715 = vmatmul.mubr.f32.gmra.mrb[0].mxu0 %v1550
        %v1716 = vpop.f32.mrb[0].mxu0
        %v1717 = vadd.f32 0.0, %v1716
        %v1718 = vpop.f32.mrb[0].mxu0
        %1719 = vmatprep.mubr.f32.mxu0 0.0
        %1720 = vmatmul.mubr.f32.gmra.mrb[0].mxu0 %v1552
        %v1721 = vpop.f32.mrb[0].mxu0
        %v1722 = vadd.f32 0.0, %v1721
        %v1723 = vpop.f32.mrb[0].mxu0
        %1724 = vmatprep.mubr.f32.mxu0 0.0
        %1725 = vmatmul.mubr.f32.gmra.mrb[0].mxu0 %v1554
        %v1726 = vpop.f32.mrb[0].mxu0
        %v1727 = vadd.f32 0.0, %v1726
        %v1728 = vpop.f32.mrb[0].mxu0
        %1729 = vmatprep.mubr.f32.mxu0 0.0
        %1730 = vmatmul.mubr.f32.gmra.mrb[0].mxu0 %v1556
        %v1731 = vpop.f32.mrb[0].mxu0
        %v1732 = vadd.f32 0.0, %v1731
        %v1733 = vpop.f32.mrb[0].mxu0
        %1734 = vmatprep.mubr.f32.mxu0 0.0
        %1735 = vmatmul.mubr.f32.gmra.mrb[0].mxu0 %v1558
        %v1736 = vpop.f32.mrb[0].mxu0
        %v1737 = vadd.f32 0.0, %v1736
        %v1738 = vpop.f32.mrb[0].mxu0
        %1739 = vmatprep.mubr.f32.mxu0 0.0
        %1740 = vmatmul.mubr.f32.gmra.mrb[0].mxu0 %v1560
        %v1741 = vpop.f32.mrb[0].mxu0
        %v1742 = vadd.f32 0.0, %v1741
        %v1743 = vpop.f32.mrb[0].mxu0
        %1744 = vmatprep.mubr.f32.mxu0 0.0
        %1745 = vmatmul.mubr.f32.gmra.mrb[0].mxu0 %v1562
        %v1746 = vpop.f32.mrb[0].mxu0
        %v1747 = vadd.f32 0.0, %v1746
        %v1748 = vpop.f32.mrb[0].mxu0
        %1749 = vmatprep.mubr.f32.mxu0 0.0
        %1750 = vmatmul.mubr.f32.gmra.mrb[0].mxu0 %v1564
        %v1751 = vpop.f32.mrb[0].mxu0
        %v1752 = vadd.f32 0.0, %v1751
        %v1753 = vpop.f32.mrb[0].mxu0
        %1754 = vmatprep.mubr.f32.mxu0 0.0
        %1755 = vmatmul.mubr.f32.gmra.mrb[0].mxu0 %v1566
        %v1756 = vpop.f32.mrb[0].mxu0
        %v1757 = vadd.f32 0.0, %v1756
        %v1758 = vpop.f32.mrb[0].mxu0
        %1759 = vdwg.mxu0
        %v1760 = vmul.f32 %v1682, %v1599
        %v1761 = vmul.f32 %v1687, %v1600
        %v1762 = vmul.f32 %v1692, %v1601
        %v1763 = vmul.f32 %v1697, %v1602
        %v1764 = vmul.f32 %v1702, %v1603
        %v1765 = vmul.f32 %v1707, %v1604
        %v1766 = vmul.f32 %v1712, %v1605
        %v1767 = vmul.f32 %v1717, %v1606
        %v1768 = vmul.f32 %v1722, %v1607
        %v1769 = vmul.f32 %v1727, %v1608
        %v1770 = vmul.f32 %v1732, %v1609
        %v1771 = vmul.f32 %v1737, %v1610
        %v1772 = vmul.f32 %v1742, %v1611
        %v1773 = vmul.f32 %v1747, %v1612
        %v1774 = vmul.f32 %v1752, %v1613
        %v1775 = vmul.f32 %v1757, %v1614
        %v1777 = vsel %vm1245, %v1760, 0
        %v1780 = vsel %vm1245, %v1761, 0
        %v1783 = vsel %vm1245, %v1762, 0
        %v1786 = vsel %vm1245, %v1763, 0
        %v1789 = vsel %vm1245, %v1764, 0
        %v1792 = vsel %vm1245, %v1765, 0
        %v1795 = vsel %vm1245, %v1766, 0
        %v1798 = vsel %vm1245, %v1767, 0
        %v1801 = vsel %vm1245, %v1768, 0
        %v1804 = vsel %vm1245, %v1769, 0
        %v1807 = vsel %vm1245, %v1770, 0
        %v1810 = vsel %vm1245, %v1771, 0
        %v1813 = vsel %vm1245, %v1772, 0
        %v1816 = vsel %vm1245, %v1773, 0
        %v1819 = vsel %vm1245, %v1774, 0
        %v1822 = vsel %vm1245, %v1775, 0
        %1824 = vmatprep.subr.mxu0 0.0
        %1825 = vmatpush1.msra.mxu0 %v1206
        %1826 = vmatprep.subr.mxu0 0.0
        %1827 = vmatpush1.msra.mxu0 %v1207
        %1828 = vmatprep.subr.mxu0 0.0
        %1829 = vmatpush1.msra.mxu0 %v1208
        %1830 = vmatprep.subr.mxu0 0.0
        %1831 = vmatpush1.msra.mxu0 %v1209
        %1832 = vmatprep.subr.mxu0 0.0
        %1833 = vmatpush1.msra.mxu0 0.0
        %1834 = vmatprep.subr.mxu0 0.0
        %1835 = vmatpush1.msra.mxu0 0.0
        %1836 = vmatprep.subr.mxu0 0.0
        %1837 = vmatpush1.msra.mxu0 0.0
        %1838 = vmatprep.subr.mxu0 0.0
        %1839 = vmatpush1.msra.mxu0 0.0
        %1840 = vmatprep.subr.mxu0 0.0
        %1841 = vmatpush1.msra.mxu0 0.0
        %1842 = vmatprep.subr.mxu0 0.0
        %1843 = vmatpush1.msra.mxu0 0.0
        %1844 = vmatprep.subr.mxu0 0.0
        %1845 = vmatpush1.msra.mxu0 0.0
        %1846 = vmatprep.subr.mxu0 0.0
        %1847 = vmatpush1.msra.mxu0 0.0
        %1848 = vmatprep.subr.mxu0 0.0
        %1849 = vmatpush1.msra.mxu0 0.0
        %1850 = vmatprep.subr.mxu0 0.0
        %1851 = vmatpush1.msra.mxu0 0.0
        %1852 = vmatprep.subr.mxu0 0.0
        %1853 = vmatpush1.msra.mxu0 0.0
        %1854 = vmatprep.subr.mxu0 0.0
        %1855 = vmatpush1.msra.mxu0 0.0
        %1856 = vmatprep.subr.mxu0 0.0
        %1857 = vmatpush1.msra.mxu0 0.0
        %1858 = vmatprep.subr.mxu0 0.0
        %1859 = vmatpush1.msra.mxu0 0.0
        %1860 = vmatprep.subr.mxu0 0.0
        %1861 = vmatpush1.msra.mxu0 0.0
        %1862 = vmatprep.subr.mxu0 0.0
        %1863 = vmatpush1.msra.mxu0 0.0
        %1864 = vmatprep.subr.mxu0 0.0
        %1865 = vmatpush1.msra.mxu0 0.0
        %1866 = vmatprep.subr.mxu0 0.0
        %1867 = vmatpush1.msra.mxu0 0.0
        %1868 = vmatprep.subr.mxu0 0.0
        %1869 = vmatpush1.msra.mxu0 0.0
        %1870 = vmatprep.subr.mxu0 0.0
        %1871 = vmatpush1.msra.mxu0 0.0
        %1872 = vmatprep.subr.mxu0 0.0
        %1873 = vmatpush1.msra.mxu0 0.0
        %1874 = vmatprep.subr.mxu0 0.0
        %1875 = vmatpush1.msra.mxu0 0.0
        %1876 = vmatprep.subr.mxu0 0.0
        %1877 = vmatpush1.msra.mxu0 0.0
        %1878 = vmatprep.subr.mxu0 0.0
        %1879 = vmatpush1.msra.mxu0 0.0
        %1880 = vmatprep.subr.mxu0 0.0
        %1881 = vmatpush1.msra.mxu0 0.0
        %1882 = vmatprep.subr.mxu0 0.0
        %1883 = vmatpush1.msra.mxu0 0.0
        %1884 = vmatprep.subr.mxu0 0.0
        %1885 = vmatpush1.msra.mxu0 0.0
        %1886 = vmatprep.subr.mxu0 0.0
        %1887 = vmatpush1.msra.mxu0 0.0
        %1888 = vmatprep.mubr.f32.mxu0 0.0
        %1889 = vmatmul.mubr.f32.gmra.mrb[0].mxu0 %v1777
        %v1890 = vpop.f32.mrb[0].mxu0
        %v1891 = vadd.f32 0.0, %v1890
        %v1892 = vpop.f32.mrb[0].mxu0
        %1893 = vmatprep.mubr.f32.mxu0 0.0
        %1894 = vmatmul.mubr.f32.gmra.mrb[0].mxu0 %v1780
        %v1895 = vpop.f32.mrb[0].mxu0
        %v1896 = vadd.f32 0.0, %v1895
        %v1897 = vpop.f32.mrb[0].mxu0
        %1898 = vmatprep.mubr.f32.mxu0 0.0
        %1899 = vmatmul.mubr.f32.gmra.mrb[0].mxu0 %v1783
        %v1900 = vpop.f32.mrb[0].mxu0
        %v1901 = vadd.f32 0.0, %v1900
        %v1902 = vpop.f32.mrb[0].mxu0
        %1903 = vmatprep.mubr.f32.mxu0 0.0
        %1904 = vmatmul.mubr.f32.gmra.mrb[0].mxu0 %v1786
        %v1905 = vpop.f32.mrb[0].mxu0
        %v1906 = vadd.f32 0.0, %v1905
        %v1907 = vpop.f32.mrb[0].mxu0
        %1908 = vmatprep.mubr.f32.mxu0 0.0
        %1909 = vmatmul.mubr.f32.gmra.mrb[0].mxu0 %v1789
        %v1910 = vpop.f32.mrb[0].mxu0
        %v1911 = vadd.f32 0.0, %v1910
        %v1912 = vpop.f32.mrb[0].mxu0
        %1913 = vmatprep.mubr.f32.mxu0 0.0
        %1914 = vmatmul.mubr.f32.gmra.mrb[0].mxu0 %v1792
        %v1915 = vpop.f32.mrb[0].mxu0
        %v1916 = vadd.f32 0.0, %v1915
        %v1917 = vpop.f32.mrb[0].mxu0
        %1918 = vmatprep.mubr.f32.mxu0 0.0
        %1919 = vmatmul.mubr.f32.gmra.mrb[0].mxu0 %v1795
        %v1920 = vpop.f32.mrb[0].mxu0
        %v1921 = vadd.f32 0.0, %v1920
        %v1922 = vpop.f32.mrb[0].mxu0
        %1923 = vmatprep.mubr.f32.mxu0 0.0
        %1924 = vmatmul.mubr.f32.gmra.mrb[0].mxu0 %v1798
        %v1925 = vpop.f32.mrb[0].mxu0
        %v1926 = vadd.f32 0.0, %v1925
        %v1927 = vpop.f32.mrb[0].mxu0
        %1928 = vmatprep.mubr.f32.mxu0 0.0
        %1929 = vmatmul.mubr.f32.gmra.mrb[0].mxu0 %v1801
        %v1930 = vpop.f32.mrb[0].mxu0
        %v1931 = vadd.f32 0.0, %v1930
        %v1932 = vpop.f32.mrb[0].mxu0
        %1933 = vmatprep.mubr.f32.mxu0 0.0
        %1934 = vmatmul.mubr.f32.gmra.mrb[0].mxu0 %v1804
        %v1935 = vpop.f32.mrb[0].mxu0
        %v1936 = vadd.f32 0.0, %v1935
        %v1937 = vpop.f32.mrb[0].mxu0
        %1938 = vmatprep.mubr.f32.mxu0 0.0
        %1939 = vmatmul.mubr.f32.gmra.mrb[0].mxu0 %v1807
        %v1940 = vpop.f32.mrb[0].mxu0
        %v1941 = vadd.f32 0.0, %v1940
        %v1942 = vpop.f32.mrb[0].mxu0
        %1943 = vmatprep.mubr.f32.mxu0 0.0
        %1944 = vmatmul.mubr.f32.gmra.mrb[0].mxu0 %v1810
        %v1945 = vpop.f32.mrb[0].mxu0
        %v1946 = vadd.f32 0.0, %v1945
        %v1947 = vpop.f32.mrb[0].mxu0
        %1948 = vmatprep.mubr.f32.mxu0 0.0
        %1949 = vmatmul.mubr.f32.gmra.mrb[0].mxu0 %v1813
        %v1950 = vpop.f32.mrb[0].mxu0
        %v1951 = vadd.f32 0.0, %v1950
        %v1952 = vpop.f32.mrb[0].mxu0
        %1953 = vmatprep.mubr.f32.mxu0 0.0
        %1954 = vmatmul.mubr.f32.gmra.mrb[0].mxu0 %v1816
        %v1955 = vpop.f32.mrb[0].mxu0
        %v1956 = vadd.f32 0.0, %v1955
        %v1957 = vpop.f32.mrb[0].mxu0
        %1958 = vmatprep.mubr.f32.mxu0 0.0
        %1959 = vmatmul.mubr.f32.gmra.mrb[0].mxu0 %v1819
        %v1960 = vpop.f32.mrb[0].mxu0
        %v1961 = vadd.f32 0.0, %v1960
        %v1962 = vpop.f32.mrb[0].mxu0
        %1963 = vmatprep.mubr.f32.mxu0 0.0
        %1964 = vmatmul.mubr.f32.gmra.mrb[0].mxu0 %v1822
        %v1965 = vpop.f32.mrb[0].mxu0
        %v1966 = vadd.f32 0.0, %v1965
        %v1967 = vpop.f32.mrb[0].mxu0
        %1968 = vdwg.mxu0
        %v1969 = vadd.f32 %v1229, %v1891
        %v1970 = vadd.f32 %v1230, %v1896
        %v1971 = vadd.f32 %v1231, %v1901
        %v1972 = vadd.f32 %v1232, %v1906
        %v1973 = vadd.f32 %v1233, %v1911
        %v1974 = vadd.f32 %v1234, %v1916
        %v1975 = vadd.f32 %v1235, %v1921
        %v1976 = vadd.f32 %v1236, %v1926
        %v1977 = vadd.f32 %v1237, %v1931
        %v1978 = vadd.f32 %v1238, %v1936
        %v1979 = vadd.f32 %v1239, %v1941
        %v1980 = vadd.f32 %v1240, %v1946
        %v1981 = vadd.f32 %v1241, %v1951
        %v1982 = vadd.f32 %v1242, %v1956
        %v1983 = vadd.f32 %v1243, %v1961
        %v1984 = vadd.f32 %v1244, %v1966
        %1985 = vrot.lane.b32.xlu0 %v1190, 96
        %v1986 = vpop.permute.xlu0 %1985
        %1987 = vrot.lane.b32.xlu0 %v1191, 96
        %v1988 = vpop.permute.xlu0 %1987
        %1989 = vrot.lane.b32.xlu0 %v1192, 96
        %v1990 = vpop.permute.xlu0 %1989
        %1991 = vrot.lane.b32.xlu0 %v1193, 96
        %v1992 = vpop.permute.xlu0 %1991
        %1993 = vrot.lane.b32.xlu0 %v1194, 96
        %v1994 = vpop.permute.xlu0 %1993
        %1995 = vrot.lane.b32.xlu0 %v1195, 96
        %v1996 = vpop.permute.xlu0 %1995
        %1997 = vrot.lane.b32.xlu0 %v1196, 96
        %v1998 = vpop.permute.xlu0 %1997
        %1999 = vrot.lane.b32.xlu0 %v1197, 96
        %v2000 = vpop.permute.xlu0 %1999
        %2001 = vrot.lane.b32.xlu0 %v1198, 96
        %v2002 = vpop.permute.xlu0 %2001
        %2003 = vrot.lane.b32.xlu0 %v1199, 96
        %v2004 = vpop.permute.xlu0 %2003
        %2005 = vrot.lane.b32.xlu0 %v1200, 96
        %v2006 = vpop.permute.xlu0 %2005
        %2007 = vrot.lane.b32.xlu0 %v1201, 96
        %v2008 = vpop.permute.xlu0 %2007
        %2009 = vrot.lane.b32.xlu0 %v1202, 96
        %v2010 = vpop.permute.xlu0 %2009
        %2011 = vrot.lane.b32.xlu0 %v1203, 96
        %v2012 = vpop.permute.xlu0 %2011
        %2013 = vrot.lane.b32.xlu0 %v1204, 96
        %v2014 = vpop.permute.xlu0 %2013
        %2015 = vrot.lane.b32.xlu0 %v1205, 96
        %v2016 = vpop.permute.xlu0 %2015
        %2017 = vrot.lane.b32.xlu0 %v953, 96
        %v2018 = vpop.permute.xlu0 %2017
        %2019 = vrot.lane.b32.xlu0 %v959, 96
        %v2020 = vpop.permute.xlu0 %2019
        %2021 = vrot.lane.b32.xlu0 %v965, 96
        %v2022 = vpop.permute.xlu0 %2021
        %2023 = vrot.lane.b32.xlu0 %v971, 96
        %v2024 = vpop.permute.xlu0 %2023
        %2025 = vrot.lane.b32.xlu0 %v977, 96
        %v2026 = vpop.permute.xlu0 %2025
        %2027 = vrot.lane.b32.xlu0 %v983, 96
        %v2028 = vpop.permute.xlu0 %2027
        %2029 = vrot.lane.b32.xlu0 %v989, 96
        %v2030 = vpop.permute.xlu0 %2029
        %2031 = vrot.lane.b32.xlu0 %v995, 96
        %v2032 = vpop.permute.xlu0 %2031
        %2033 = vrot.lane.b32.xlu0 %v1001, 96
        %v2034 = vpop.permute.xlu0 %2033
        %2035 = vrot.lane.b32.xlu0 %v1007, 96
        %v2036 = vpop.permute.xlu0 %2035
        %2037 = vrot.lane.b32.xlu0 %v1013, 96
        %v2038 = vpop.permute.xlu0 %2037
        %2039 = vrot.lane.b32.xlu0 %v1019, 96
        %v2040 = vpop.permute.xlu0 %2039
        %2041 = vrot.lane.b32.xlu0 %v1025, 96
        %v2042 = vpop.permute.xlu0 %2041
        %2043 = vrot.lane.b32.xlu0 %v1031, 96
        %v2044 = vpop.permute.xlu0 %2043
        %2045 = vrot.lane.b32.xlu0 %v1037, 96
        %v2046 = vpop.permute.xlu0 %2045
        %2047 = vrot.lane.b32.xlu0 %v1043, 96
        %v2048 = vpop.permute.xlu0 %2047
        %v2049 = vsel %vm1245, %v1986, 0
        %v2051 = vsel %vm1245, %v1988, 0
        %v2053 = vsel %vm1245, %v1990, 0
        %v2055 = vsel %vm1245, %v1992, 0
        %v2057 = vsel %vm1245, %v1994, 0
        %v2059 = vsel %vm1245, %v1996, 0
        %v2061 = vsel %vm1245, %v1998, 0
        %v2063 = vsel %vm1245, %v2000, 0
        %v2065 = vsel %vm1245, %v2002, 0
        %v2067 = vsel %vm1245, %v2004, 0
        %v2069 = vsel %vm1245, %v2006, 0
        %v2071 = vsel %vm1245, %v2008, 0
        %v2073 = vsel %vm1245, %v2010, 0
        %v2075 = vsel %vm1245, %v2012, 0
        %v2077 = vsel %vm1245, %v2014, 0
        %v2079 = vsel %vm1245, %v2016, 0
        %v2081 = vsel %vm1245, %v2018, 0
        %v2083 = vsel %vm1245, %v2020, 0
        %v2085 = vsel %vm1245, %v2022, 0
        %v2087 = vsel %vm1245, %v2024, 0
        %v2089 = vsel %vm1245, %v2026, 0
        %v2091 = vsel %vm1245, %v2028, 0
        %v2093 = vsel %vm1245, %v2030, 0
        %v2095 = vsel %vm1245, %v2032, 0
        %v2097 = vsel %vm1245, %v2034, 0
        %v2099 = vsel %vm1245, %v2036, 0
        %v2101 = vsel %vm1245, %v2038, 0
        %v2103 = vsel %vm1245, %v2040, 0
        %v2105 = vsel %vm1245, %v2042, 0
        %v2107 = vsel %vm1245, %v2044, 0
        %v2109 = vsel %vm1245, %v2046, 0
        %v2111 = vsel %vm1245, %v2048, 0
        %2113 = vmatprep.subr.mxu0 0.0
        %2114 = vmatpush1.xpose.msra.mxu0 %v2081
        %2115 = vmatprep.subr.mxu0 0.0
        %2116 = vmatpush1.xpose.msra.mxu0 %v2083
        %2117 = vmatprep.subr.mxu0 0.0
        %2118 = vmatpush1.xpose.msra.mxu0 %v2085
        %2119 = vmatprep.subr.mxu0 0.0
        %2120 = vmatpush1.xpose.msra.mxu0 %v2087
        %2121 = vmatprep.subr.mxu0 0.0
        %2122 = vmatpush1.xpose.msra.mxu0 %v2089
        %2123 = vmatprep.subr.mxu0 0.0
        %2124 = vmatpush1.xpose.msra.mxu0 %v2091
        %2125 = vmatprep.subr.mxu0 0.0
        %2126 = vmatpush1.xpose.msra.mxu0 %v2093
        %2127 = vmatprep.subr.mxu0 0.0
        %2128 = vmatpush1.xpose.msra.mxu0 %v2095
        %2129 = vmatprep.subr.mxu0 0.0
        %2130 = vmatpush1.xpose.msra.mxu0 %v2097
        %2131 = vmatprep.subr.mxu0 0.0
        %2132 = vmatpush1.xpose.msra.mxu0 %v2099
        %2133 = vmatprep.subr.mxu0 0.0
        %2134 = vmatpush1.xpose.msra.mxu0 %v2101
        %2135 = vmatprep.subr.mxu0 0.0
        %2136 = vmatpush1.xpose.msra.mxu0 %v2103
        %2137 = vmatprep.subr.mxu0 0.0
        %2138 = vmatpush1.xpose.msra.mxu0 %v2105
        %2139 = vmatprep.subr.mxu0 0.0
        %2140 = vmatpush1.xpose.msra.mxu0 %v2107
        %2141 = vmatprep.subr.mxu0 0.0
        %2142 = vmatpush1.xpose.msra.mxu0 %v2109
        %2143 = vmatprep.subr.mxu0 0.0
        %2144 = vmatpush1.xpose.msra.mxu0 %v2111
        %2145 = vmatprep.subr.mxu0 0.0
        %2146 = vmatpush1.xpose.msra.mxu0 0.0
        %2147 = vmatprep.subr.mxu0 0.0
        %2148 = vmatpush1.xpose.msra.mxu0 0.0
        %2149 = vmatprep.subr.mxu0 0.0
        %2150 = vmatpush1.xpose.msra.mxu0 0.0
        %2151 = vmatprep.subr.mxu0 0.0
        %2152 = vmatpush1.xpose.msra.mxu0 0.0
        %2153 = vmatprep.subr.mxu0 0.0
        %2154 = vmatpush1.xpose.msra.mxu0 0.0
        %2155 = vmatprep.subr.mxu0 0.0
        %2156 = vmatpush1.xpose.msra.mxu0 0.0
        %2157 = vmatprep.subr.mxu0 0.0
        %2158 = vmatpush1.xpose.msra.mxu0 0.0
        %2159 = vmatprep.subr.mxu0 0.0
        %2160 = vmatpush1.xpose.msra.mxu0 0.0
        %2161 = vmatprep.subr.mxu0 0.0
        %2162 = vmatpush1.xpose.msra.mxu0 0.0
        %2163 = vmatprep.subr.mxu0 0.0
        %2164 = vmatpush1.xpose.msra.mxu0 0.0
        %2165 = vmatprep.subr.mxu0 0.0
        %2166 = vmatpush1.xpose.msra.mxu0 0.0
        %2167 = vmatprep.subr.mxu0 0.0
        %2168 = vmatpush1.xpose.msra.mxu0 0.0
        %2169 = vmatprep.subr.mxu0 0.0
        %2170 = vmatpush1.xpose.msra.mxu0 0.0
        %2171 = vmatprep.subr.mxu0 0.0
        %2172 = vmatpush1.xpose.msra.mxu0 0.0
        %2173 = vmatprep.subr.mxu0 0.0
        %2174 = vmatpush1.xpose.msra.mxu0 0.0
        %2175 = vmatprep.subr.mxu0 0.0
        %2176 = vmatpush1.xpose.msra.mxu0 0.0
        %2177 = vmatprep.mubr.f32.mxu0 0.0
        %2178 = vmatmul.mubr.f32.gmra.mrb[0].mxu0 %v2049
        %v2179 = vpop.f32.mrb[0].mxu0
        %v2180 = vadd.f32 %v594, %v2179
        %v2181 = vpop.f32.mrb[0].mxu0
        %2182 = vmatprep.mubr.f32.mxu0 0.0
        %2183 = vmatmul.mubr.f32.gmra.mrb[0].mxu0 %v2051
        %v2184 = vpop.f32.mrb[0].mxu0
        %v2185 = vadd.f32 %v594, %v2184
        %v2186 = vpop.f32.mrb[0].mxu0
        %2187 = vmatprep.mubr.f32.mxu0 0.0
        %2188 = vmatmul.mubr.f32.gmra.mrb[0].mxu0 %v2053
        %v2189 = vpop.f32.mrb[0].mxu0
        %v2190 = vadd.f32 %v594, %v2189
        %v2191 = vpop.f32.mrb[0].mxu0
        %2192 = vmatprep.mubr.f32.mxu0 0.0
        %2193 = vmatmul.mubr.f32.gmra.mrb[0].mxu0 %v2055
        %v2194 = vpop.f32.mrb[0].mxu0
        %v2195 = vadd.f32 %v594, %v2194
        %v2196 = vpop.f32.mrb[0].mxu0
        %2197 = vmatprep.mubr.f32.mxu0 0.0
        %2198 = vmatmul.mubr.f32.gmra.mrb[0].mxu0 %v2057
        %v2199 = vpop.f32.mrb[0].mxu0
        %v2200 = vadd.f32 %v594, %v2199
        %v2201 = vpop.f32.mrb[0].mxu0
        %2202 = vmatprep.mubr.f32.mxu0 0.0
        %2203 = vmatmul.mubr.f32.gmra.mrb[0].mxu0 %v2059
        %v2204 = vpop.f32.mrb[0].mxu0
        %v2205 = vadd.f32 %v594, %v2204
        %v2206 = vpop.f32.mrb[0].mxu0
        %2207 = vmatprep.mubr.f32.mxu0 0.0
        %2208 = vmatmul.mubr.f32.gmra.mrb[0].mxu0 %v2061
        %v2209 = vpop.f32.mrb[0].mxu0
        %v2210 = vadd.f32 %v594, %v2209
        %v2211 = vpop.f32.mrb[0].mxu0
        %2212 = vmatprep.mubr.f32.mxu0 0.0
        %2213 = vmatmul.mubr.f32.gmra.mrb[0].mxu0 %v2063
        %v2214 = vpop.f32.mrb[0].mxu0
        %v2215 = vadd.f32 %v594, %v2214
        %v2216 = vpop.f32.mrb[0].mxu0
        %2217 = vmatprep.mubr.f32.mxu0 0.0
        %2218 = vmatmul.mubr.f32.gmra.mrb[0].mxu0 %v2065
        %v2219 = vpop.f32.mrb[0].mxu0
        %v2220 = vadd.f32 %v594, %v2219
        %v2221 = vpop.f32.mrb[0].mxu0
        %2222 = vmatprep.mubr.f32.mxu0 0.0
        %2223 = vmatmul.mubr.f32.gmra.mrb[0].mxu0 %v2067
        %v2224 = vpop.f32.mrb[0].mxu0
        %v2225 = vadd.f32 %v594, %v2224
        %v2226 = vpop.f32.mrb[0].mxu0
        %2227 = vmatprep.mubr.f32.mxu0 0.0
        %2228 = vmatmul.mubr.f32.gmra.mrb[0].mxu0 %v2069
        %v2229 = vpop.f32.mrb[0].mxu0
        %v2230 = vadd.f32 %v594, %v2229
        %v2231 = vpop.f32.mrb[0].mxu0
        %2232 = vmatprep.mubr.f32.mxu0 0.0
        %2233 = vmatmul.mubr.f32.gmra.mrb[0].mxu0 %v2071
        %v2234 = vpop.f32.mrb[0].mxu0
        %v2235 = vadd.f32 %v594, %v2234
        %v2236 = vpop.f32.mrb[0].mxu0
        %2237 = vmatprep.mubr.f32.mxu0 0.0
        %2238 = vmatmul.mubr.f32.gmra.mrb[0].mxu0 %v2073
        %v2239 = vpop.f32.mrb[0].mxu0
        %v2240 = vadd.f32 %v594, %v2239
        %v2241 = vpop.f32.mrb[0].mxu0
        %2242 = vmatprep.mubr.f32.mxu0 0.0
        %2243 = vmatmul.mubr.f32.gmra.mrb[0].mxu0 %v2075
        %v2244 = vpop.f32.mrb[0].mxu0
        %v2245 = vadd.f32 %v594, %v2244
        %v2246 = vpop.f32.mrb[0].mxu0
        %2247 = vmatprep.mubr.f32.mxu0 0.0
        %2248 = vmatmul.mubr.f32.gmra.mrb[0].mxu0 %v2077
        %v2249 = vpop.f32.mrb[0].mxu0
        %v2250 = vadd.f32 %v594, %v2249
        %v2251 = vpop.f32.mrb[0].mxu0
        %2252 = vmatprep.mubr.f32.mxu0 0.0
        %2253 = vmatmul.mubr.f32.gmra.mrb[0].mxu0 %v2079
        %v2254 = vpop.f32.mrb[0].mxu0
        %v2255 = vadd.f32 %v594, %v2254
        %v2256 = vpop.f32.mrb[0].mxu0
        %2257 = vdwg.mxu0
        %2258 = vmax.xlane.f32.xlu0 %v2180
        %v2259 = vpop.xlane.xlu0 %2258
        %2260 = vmax.xlane.f32.xlu0 %v2185
        %v2261 = vpop.xlane.xlu0 %2260
        %2262 = vmax.xlane.f32.xlu0 %v2190
        %v2263 = vpop.xlane.xlu0 %2262
        %2264 = vmax.xlane.f32.xlu0 %v2195
        %v2265 = vpop.xlane.xlu0 %2264
        %2266 = vmax.xlane.f32.xlu0 %v2200
        %v2267 = vpop.xlane.xlu0 %2266
        %2268 = vmax.xlane.f32.xlu0 %v2205
        %v2269 = vpop.xlane.xlu0 %2268
        %2270 = vmax.xlane.f32.xlu0 %v2210
        %v2271 = vpop.xlane.xlu0 %2270
        %2272 = vmax.xlane.f32.xlu0 %v2215
        %v2273 = vpop.xlane.xlu0 %2272
        %2274 = vmax.xlane.f32.xlu0 %v2220
        %v2275 = vpop.xlane.xlu0 %2274
        %2276 = vmax.xlane.f32.xlu0 %v2225
        %v2277 = vpop.xlane.xlu0 %2276
        %2278 = vmax.xlane.f32.xlu0 %v2230
        %v2279 = vpop.xlane.xlu0 %2278
        %2280 = vmax.xlane.f32.xlu0 %v2235
        %v2281 = vpop.xlane.xlu0 %2280
        %2282 = vmax.xlane.f32.xlu0 %v2240
        %v2283 = vpop.xlane.xlu0 %2282
        %2284 = vmax.xlane.f32.xlu0 %v2245
        %v2285 = vpop.xlane.xlu0 %2284
        %2286 = vmax.xlane.f32.xlu0 %v2250
        %v2287 = vpop.xlane.xlu0 %2286
        %2288 = vmax.xlane.f32.xlu0 %v2255
        %v2289 = vpop.xlane.xlu0 %2288
        %v2290 = vsub.f32 %v2180, %v2259
        %v2291 = vsub.f32 %v2185, %v2261
        %v2292 = vsub.f32 %v2190, %v2263
        %v2293 = vsub.f32 %v2195, %v2265
        %v2294 = vsub.f32 %v2200, %v2267
        %v2295 = vsub.f32 %v2205, %v2269
        %v2296 = vsub.f32 %v2210, %v2271
        %v2297 = vsub.f32 %v2215, %v2273
        %v2298 = vsub.f32 %v2220, %v2275
        %v2299 = vsub.f32 %v2225, %v2277
        %v2300 = vsub.f32 %v2230, %v2279
        %v2301 = vsub.f32 %v2235, %v2281
        %v2302 = vsub.f32 %v2240, %v2283
        %v2303 = vsub.f32 %v2245, %v2285
        %v2304 = vsub.f32 %v2250, %v2287
        %v2305 = vsub.f32 %v2255, %v2289
        %v2306 = vmul.f32 %v2290, 1.442695
        %v2307 = vpow.pop %v2306
        %v2308 = vmul.f32 %v2291, 1.442695
        %v2309 = vpow.pop %v2308
        %v2310 = vmul.f32 %v2292, 1.442695
        %v2311 = vpow.pop %v2310
        %v2312 = vmul.f32 %v2293, 1.442695
        %v2313 = vpow.pop %v2312
        %v2314 = vmul.f32 %v2294, 1.442695
        %v2315 = vpow.pop %v2314
        %v2316 = vmul.f32 %v2295, 1.442695
        %v2317 = vpow.pop %v2316
        %v2318 = vmul.f32 %v2296, 1.442695
        %v2319 = vpow.pop %v2318
        %v2320 = vmul.f32 %v2297, 1.442695
        %v2321 = vpow.pop %v2320
        %v2322 = vmul.f32 %v2298, 1.442695
        %v2323 = vpow.pop %v2322
        %v2324 = vmul.f32 %v2299, 1.442695
        %v2325 = vpow.pop %v2324
        %v2326 = vmul.f32 %v2300, 1.442695
        %v2327 = vpow.pop %v2326
        %v2328 = vmul.f32 %v2301, 1.442695
        %v2329 = vpow.pop %v2328
        %v2330 = vmul.f32 %v2302, 1.442695
        %v2331 = vpow.pop %v2330
        %v2332 = vmul.f32 %v2303, 1.442695
        %v2333 = vpow.pop %v2332
        %v2334 = vmul.f32 %v2304, 1.442695
        %v2335 = vpow.pop %v2334
        %v2336 = vmul.f32 %v2305, 1.442695
        %v2337 = vpow.pop %v2336
        %2338 = vadd.xlane.f32.xlu0 %v2307
        %v2339 = vpop.xlane.xlu0 %2338
        %2340 = vadd.xlane.f32.xlu0 %v2309
        %v2341 = vpop.xlane.xlu0 %2340
        %2342 = vadd.xlane.f32.xlu0 %v2311
        %v2343 = vpop.xlane.xlu0 %2342
        %2344 = vadd.xlane.f32.xlu0 %v2313
        %v2345 = vpop.xlane.xlu0 %2344
        %2346 = vadd.xlane.f32.xlu0 %v2315
        %v2347 = vpop.xlane.xlu0 %2346
        %2348 = vadd.xlane.f32.xlu0 %v2317
        %v2349 = vpop.xlane.xlu0 %2348
        %2350 = vadd.xlane.f32.xlu0 %v2319
        %v2351 = vpop.xlane.xlu0 %2350
        %2352 = vadd.xlane.f32.xlu0 %v2321
        %v2353 = vpop.xlane.xlu0 %2352
        %2354 = vadd.xlane.f32.xlu0 %v2323
        %v2355 = vpop.xlane.xlu0 %2354
        %2356 = vadd.xlane.f32.xlu0 %v2325
        %v2357 = vpop.xlane.xlu0 %2356
        %2358 = vadd.xlane.f32.xlu0 %v2327
        %v2359 = vpop.xlane.xlu0 %2358
        %2360 = vadd.xlane.f32.xlu0 %v2329
        %v2361 = vpop.xlane.xlu0 %2360
        %2362 = vadd.xlane.f32.xlu0 %v2331
        %v2363 = vpop.xlane.xlu0 %2362
        %2364 = vadd.xlane.f32.xlu0 %v2333
        %v2365 = vpop.xlane.xlu0 %2364
        %2366 = vadd.xlane.f32.xlu0 %v2335
        %v2367 = vpop.xlane.xlu0 %2366
        %2368 = vadd.xlane.f32.xlu0 %v2337
        %v2369 = vpop.xlane.xlu0 %2368
        %v2370 = vrcp.pop %v2339
        %v2371 = vrcp.pop %v2341
        %v2372 = vrcp.pop %v2343
        %v2373 = vrcp.pop %v2345
        %v2374 = vrcp.pop %v2347
        %v2375 = vrcp.pop %v2349
        %v2376 = vrcp.pop %v2351
        %v2377 = vrcp.pop %v2353
        %v2378 = vrcp.pop %v2355
        %v2379 = vrcp.pop %v2357
        %v2380 = vrcp.pop %v2359
        %v2381 = vrcp.pop %v2361
        %v2382 = vrcp.pop %v2363
        %v2383 = vrcp.pop %v2365
        %v2384 = vrcp.pop %v2367
        %v2385 = vrcp.pop %v2369
        %2402 = vrot.lane.b32.xlu0 %v1112, 96
        %v2403 = vpop.permute.xlu0 %2402
        %2404 = vrot.lane.b32.xlu0 %v1117, 96
        %v2405 = vpop.permute.xlu0 %2404
        %2406 = vrot.lane.b32.xlu0 %v1122, 96
        %v2407 = vpop.permute.xlu0 %2406
        %2408 = vrot.lane.b32.xlu0 %v1127, 96
        %v2409 = vpop.permute.xlu0 %2408
        %2410 = vrot.lane.b32.xlu0 %v1132, 96
        %v2411 = vpop.permute.xlu0 %2410
        %2412 = vrot.lane.b32.xlu0 %v1137, 96
        %v2413 = vpop.permute.xlu0 %2412
        %2414 = vrot.lane.b32.xlu0 %v1142, 96
        %v2415 = vpop.permute.xlu0 %2414
        %2416 = vrot.lane.b32.xlu0 %v1147, 96
        %v2417 = vpop.permute.xlu0 %2416
        %2418 = vrot.lane.b32.xlu0 %v1152, 96
        %v2419 = vpop.permute.xlu0 %2418
        %2420 = vrot.lane.b32.xlu0 %v1157, 96
        %v2421 = vpop.permute.xlu0 %2420
        %2422 = vrot.lane.b32.xlu0 %v1162, 96
        %v2423 = vpop.permute.xlu0 %2422
        %2424 = vrot.lane.b32.xlu0 %v1167, 96
        %v2425 = vpop.permute.xlu0 %2424
        %2426 = vrot.lane.b32.xlu0 %v1172, 96
        %v2427 = vpop.permute.xlu0 %2426
        %2428 = vrot.lane.b32.xlu0 %v1177, 96
        %v2429 = vpop.permute.xlu0 %2428
        %2430 = vrot.lane.b32.xlu0 %v1182, 96
        %v2431 = vpop.permute.xlu0 %2430
        %2432 = vrot.lane.b32.xlu0 %v1187, 96
        %v2433 = vpop.permute.xlu0 %2432
        %2450 = vmatprep.subr.mxu0 0.0
        %2451 = vmatpush1.msra.mxu0 %v2403
        %2452 = vmatprep.subr.mxu0 0.0
        %2453 = vmatpush1.msra.mxu0 %v2405
        %2454 = vmatprep.subr.mxu0 0.0
        %2455 = vmatpush1.msra.mxu0 %v2407
        %2456 = vmatprep.subr.mxu0 0.0
        %2457 = vmatpush1.msra.mxu0 %v2409
        %2458 = vmatprep.subr.mxu0 0.0
        %2459 = vmatpush1.msra.mxu0 %v2411
        %2460 = vmatprep.subr.mxu0 0.0
        %2461 = vmatpush1.msra.mxu0 %v2413
        %2462 = vmatprep.subr.mxu0 0.0
        %2463 = vmatpush1.msra.mxu0 %v2415
        %2464 = vmatprep.subr.mxu0 0.0
        %2465 = vmatpush1.msra.mxu0 %v2417
        %2466 = vmatprep.subr.mxu0 0.0
        %2467 = vmatpush1.msra.mxu0 %v2419
        %2468 = vmatprep.subr.mxu0 0.0
        %2469 = vmatpush1.msra.mxu0 %v2421
        %2470 = vmatprep.subr.mxu0 0.0
        %2471 = vmatpush1.msra.mxu0 %v2423
        %2472 = vmatprep.subr.mxu0 0.0
        %2473 = vmatpush1.msra.mxu0 %v2425
        %2474 = vmatprep.subr.mxu0 0.0
        %2475 = vmatpush1.msra.mxu0 %v2427
        %2476 = vmatprep.subr.mxu0 0.0
        %2477 = vmatpush1.msra.mxu0 %v2429
        %2478 = vmatprep.subr.mxu0 0.0
        %2479 = vmatpush1.msra.mxu0 %v2431
        %2480 = vmatprep.subr.mxu0 0.0
        %2481 = vmatpush1.msra.mxu0 %v2433
        %2482 = vmatprep.subr.mxu0 0.0
        %2483 = vmatpush1.msra.mxu0 0.0
        %2484 = vmatprep.subr.mxu0 0.0
        %2485 = vmatpush1.msra.mxu0 0.0
        %2486 = vmatprep.subr.mxu0 0.0
        %2487 = vmatpush1.msra.mxu0 0.0
        %2488 = vmatprep.subr.mxu0 0.0
        %2489 = vmatpush1.msra.mxu0 0.0
        %2490 = vmatprep.subr.mxu0 0.0
        %2491 = vmatpush1.msra.mxu0 0.0
        %2492 = vmatprep.subr.mxu0 0.0
        %2493 = vmatpush1.msra.mxu0 0.0
        %2494 = vmatprep.subr.mxu0 0.0
        %2495 = vmatpush1.msra.mxu0 0.0
        %2496 = vmatprep.subr.mxu0 0.0
        %2497 = vmatpush1.msra.mxu0 0.0
        %2498 = vmatprep.subr.mxu0 0.0
        %2499 = vmatpush1.msra.mxu0 0.0
        %2500 = vmatprep.subr.mxu0 0.0
        %2501 = vmatpush1.msra.mxu0 0.0
        %2502 = vmatprep.subr.mxu0 0.0
        %2503 = vmatpush1.msra.mxu0 0.0
        %2504 = vmatprep.subr.mxu0 0.0
        %2505 = vmatpush1.msra.mxu0 0.0
        %2506 = vmatprep.subr.mxu0 0.0
        %2507 = vmatpush1.msra.mxu0 0.0
        %2508 = vmatprep.subr.mxu0 0.0
        %2509 = vmatpush1.msra.mxu0 0.0
        %2510 = vmatprep.subr.mxu0 0.0
        %2511 = vmatpush1.msra.mxu0 0.0
        %2512 = vmatprep.subr.mxu0 0.0
        %2513 = vmatpush1.msra.mxu0 0.0
        %2514 = vmatprep.mubr.f32.mxu0 0.0
        %2515 = vmatmul.mubr.f32.gmra.mrb[0].mxu0 %v2307
        %v2516 = vpop.f32.mrb[0].mxu0
        %v2517 = vadd.f32 0.0, %v2516
        %v2518 = vpop.f32.mrb[0].mxu0
        %2519 = vmatprep.mubr.f32.mxu0 0.0
        %2520 = vmatmul.mubr.f32.gmra.mrb[0].mxu0 %v2309
        %v2521 = vpop.f32.mrb[0].mxu0
        %v2522 = vadd.f32 0.0, %v2521
        %v2523 = vpop.f32.mrb[0].mxu0
        %2524 = vmatprep.mubr.f32.mxu0 0.0
        %2525 = vmatmul.mubr.f32.gmra.mrb[0].mxu0 %v2311
        %v2526 = vpop.f32.mrb[0].mxu0
        %v2527 = vadd.f32 0.0, %v2526
        %v2528 = vpop.f32.mrb[0].mxu0
        %2529 = vmatprep.mubr.f32.mxu0 0.0
        %2530 = vmatmul.mubr.f32.gmra.mrb[0].mxu0 %v2313
        %v2531 = vpop.f32.mrb[0].mxu0
        %v2532 = vadd.f32 0.0, %v2531
        %v2533 = vpop.f32.mrb[0].mxu0
        %2534 = vmatprep.mubr.f32.mxu0 0.0
        %2535 = vmatmul.mubr.f32.gmra.mrb[0].mxu0 %v2315
        %v2536 = vpop.f32.mrb[0].mxu0
        %v2537 = vadd.f32 0.0, %v2536
        %v2538 = vpop.f32.mrb[0].mxu0
        %2539 = vmatprep.mubr.f32.mxu0 0.0
        %2540 = vmatmul.mubr.f32.gmra.mrb[0].mxu0 %v2317
        %v2541 = vpop.f32.mrb[0].mxu0
        %v2542 = vadd.f32 0.0, %v2541
        %v2543 = vpop.f32.mrb[0].mxu0
        %2544 = vmatprep.mubr.f32.mxu0 0.0
        %2545 = vmatmul.mubr.f32.gmra.mrb[0].mxu0 %v2319
        %v2546 = vpop.f32.mrb[0].mxu0
        %v2547 = vadd.f32 0.0, %v2546
        %v2548 = vpop.f32.mrb[0].mxu0
        %2549 = vmatprep.mubr.f32.mxu0 0.0
        %2550 = vmatmul.mubr.f32.gmra.mrb[0].mxu0 %v2321
        %v2551 = vpop.f32.mrb[0].mxu0
        %v2552 = vadd.f32 0.0, %v2551
        %v2553 = vpop.f32.mrb[0].mxu0
        %2554 = vmatprep.mubr.f32.mxu0 0.0
        %2555 = vmatmul.mubr.f32.gmra.mrb[0].mxu0 %v2323
        %v2556 = vpop.f32.mrb[0].mxu0
        %v2557 = vadd.f32 0.0, %v2556
        %v2558 = vpop.f32.mrb[0].mxu0
        %2559 = vmatprep.mubr.f32.mxu0 0.0
        %2560 = vmatmul.mubr.f32.gmra.mrb[0].mxu0 %v2325
        %v2561 = vpop.f32.mrb[0].mxu0
        %v2562 = vadd.f32 0.0, %v2561
        %v2563 = vpop.f32.mrb[0].mxu0
        %2564 = vmatprep.mubr.f32.mxu0 0.0
        %2565 = vmatmul.mubr.f32.gmra.mrb[0].mxu0 %v2327
        %v2566 = vpop.f32.mrb[0].mxu0
        %v2567 = vadd.f32 0.0, %v2566
        %v2568 = vpop.f32.mrb[0].mxu0
        %2569 = vmatprep.mubr.f32.mxu0 0.0
        %2570 = vmatmul.mubr.f32.gmra.mrb[0].mxu0 %v2329
        %v2571 = vpop.f32.mrb[0].mxu0
        %v2572 = vadd.f32 0.0, %v2571
        %v2573 = vpop.f32.mrb[0].mxu0
        %2574 = vmatprep.mubr.f32.mxu0 0.0
        %2575 = vmatmul.mubr.f32.gmra.mrb[0].mxu0 %v2331
        %v2576 = vpop.f32.mrb[0].mxu0
        %v2577 = vadd.f32 0.0, %v2576
        %v2578 = vpop.f32.mrb[0].mxu0
        %2579 = vmatprep.mubr.f32.mxu0 0.0
        %2580 = vmatmul.mubr.f32.gmra.mrb[0].mxu0 %v2333
        %v2581 = vpop.f32.mrb[0].mxu0
        %v2582 = vadd.f32 0.0, %v2581
        %v2583 = vpop.f32.mrb[0].mxu0
        %2584 = vmatprep.mubr.f32.mxu0 0.0
        %2585 = vmatmul.mubr.f32.gmra.mrb[0].mxu0 %v2335
        %v2586 = vpop.f32.mrb[0].mxu0
        %v2587 = vadd.f32 0.0, %v2586
        %v2588 = vpop.f32.mrb[0].mxu0
        %2589 = vmatprep.mubr.f32.mxu0 0.0
        %2590 = vmatmul.mubr.f32.gmra.mrb[0].mxu0 %v2337
        %v2591 = vpop.f32.mrb[0].mxu0
        %v2592 = vadd.f32 0.0, %v2591
        %v2593 = vpop.f32.mrb[0].mxu0
        %2594 = vdwg.mxu0
        %v2595 = vmul.f32 %v2517, %v2370
        %v2596 = vmul.f32 %v2522, %v2371
        %v2597 = vmul.f32 %v2527, %v2372
        %v2598 = vmul.f32 %v2532, %v2373
        %v2599 = vmul.f32 %v2537, %v2374
        %v2600 = vmul.f32 %v2542, %v2375
        %v2601 = vmul.f32 %v2547, %v2376
        %v2602 = vmul.f32 %v2552, %v2377
        %v2603 = vmul.f32 %v2557, %v2378
        %v2604 = vmul.f32 %v2562, %v2379
        %v2605 = vmul.f32 %v2567, %v2380
        %v2606 = vmul.f32 %v2572, %v2381
        %v2607 = vmul.f32 %v2577, %v2382
        %v2608 = vmul.f32 %v2582, %v2383
        %v2609 = vmul.f32 %v2587, %v2384
        %v2610 = vmul.f32 %v2592, %v2385
        %v2612 = vsel %vm1245, %v2595, 0
        %v2615 = vsel %vm1245, %v2596, 0
        %v2618 = vsel %vm1245, %v2597, 0
        %v2621 = vsel %vm1245, %v2598, 0
        %v2624 = vsel %vm1245, %v2599, 0
        %v2627 = vsel %vm1245, %v2600, 0
        %v2630 = vsel %vm1245, %v2601, 0
        %v2633 = vsel %vm1245, %v2602, 0
        %v2636 = vsel %vm1245, %v2603, 0
        %v2639 = vsel %vm1245, %v2604, 0
        %v2642 = vsel %vm1245, %v2605, 0
        %v2645 = vsel %vm1245, %v2606, 0
        %v2648 = vsel %vm1245, %v2607, 0
        %v2651 = vsel %vm1245, %v2608, 0
        %v2654 = vsel %vm1245, %v2609, 0
        %v2657 = vsel %vm1245, %v2610, 0
        %2659 = vmatprep.subr.mxu0 0.0
        %2660 = vmatpush1.msra.mxu0 %v1210
        %2661 = vmatprep.subr.mxu0 0.0
        %2662 = vmatpush1.msra.mxu0 %v1211
        %2663 = vmatprep.subr.mxu0 0.0
        %2664 = vmatpush1.msra.mxu0 %v1212
        %2665 = vmatprep.subr.mxu0 0.0
        %2666 = vmatpush1.msra.mxu0 %v1213
        %2667 = vmatprep.subr.mxu0 0.0
        %2668 = vmatpush1.msra.mxu0 0.0
        %2669 = vmatprep.subr.mxu0 0.0
        %2670 = vmatpush1.msra.mxu0 0.0
        %2671 = vmatprep.subr.mxu0 0.0
        %2672 = vmatpush1.msra.mxu0 0.0
        %2673 = vmatprep.subr.mxu0 0.0
        %2674 = vmatpush1.msra.mxu0 0.0
        %2675 = vmatprep.subr.mxu0 0.0
        %2676 = vmatpush1.msra.mxu0 0.0
        %2677 = vmatprep.subr.mxu0 0.0
        %2678 = vmatpush1.msra.mxu0 0.0
        %2679 = vmatprep.subr.mxu0 0.0
        %2680 = vmatpush1.msra.mxu0 0.0
        %2681 = vmatprep.subr.mxu0 0.0
        %2682 = vmatpush1.msra.mxu0 0.0
        %2683 = vmatprep.subr.mxu0 0.0
        %2684 = vmatpush1.msra.mxu0 0.0
        %2685 = vmatprep.subr.mxu0 0.0
        %2686 = vmatpush1.msra.mxu0 0.0
        %2687 = vmatprep.subr.mxu0 0.0
        %2688 = vmatpush1.msra.mxu0 0.0
        %2689 = vmatprep.subr.mxu0 0.0
        %2690 = vmatpush1.msra.mxu0 0.0
        %2691 = vmatprep.subr.mxu0 0.0
        %2692 = vmatpush1.msra.mxu0 0.0
        %2693 = vmatprep.subr.mxu0 0.0
        %2694 = vmatpush1.msra.mxu0 0.0
        %2695 = vmatprep.subr.mxu0 0.0
        %2696 = vmatpush1.msra.mxu0 0.0
        %2697 = vmatprep.subr.mxu0 0.0
        %2698 = vmatpush1.msra.mxu0 0.0
        %2699 = vmatprep.subr.mxu0 0.0
        %2700 = vmatpush1.msra.mxu0 0.0
        %2701 = vmatprep.subr.mxu0 0.0
        %2702 = vmatpush1.msra.mxu0 0.0
        %2703 = vmatprep.subr.mxu0 0.0
        %2704 = vmatpush1.msra.mxu0 0.0
        %2705 = vmatprep.subr.mxu0 0.0
        %2706 = vmatpush1.msra.mxu0 0.0
        %2707 = vmatprep.subr.mxu0 0.0
        %2708 = vmatpush1.msra.mxu0 0.0
        %2709 = vmatprep.subr.mxu0 0.0
        %2710 = vmatpush1.msra.mxu0 0.0
        %2711 = vmatprep.subr.mxu0 0.0
        %2712 = vmatpush1.msra.mxu0 0.0
        %2713 = vmatprep.subr.mxu0 0.0
        %2714 = vmatpush1.msra.mxu0 0.0
        %2715 = vmatprep.subr.mxu0 0.0
        %2716 = vmatpush1.msra.mxu0 0.0
        %2717 = vmatprep.subr.mxu0 0.0
        %2718 = vmatpush1.msra.mxu0 0.0
        %2719 = vmatprep.subr.mxu0 0.0
        %2720 = vmatpush1.msra.mxu0 0.0
        %2721 = vmatprep.subr.mxu0 0.0
        %2722 = vmatpush1.msra.mxu0 0.0
        %2723 = vmatprep.mubr.f32.mxu0 0.0
        %2724 = vmatmul.mubr.f32.gmra.mrb[0].mxu0 %v2612
        %v2725 = vpop.f32.mrb[0].mxu0
        %v2726 = vadd.f32 0.0, %v2725
        %v2727 = vpop.f32.mrb[0].mxu0
        %2728 = vmatprep.mubr.f32.mxu0 0.0
        %2729 = vmatmul.mubr.f32.gmra.mrb[0].mxu0 %v2615
        %v2730 = vpop.f32.mrb[0].mxu0
        %v2731 = vadd.f32 0.0, %v2730
        %v2732 = vpop.f32.mrb[0].mxu0
        %2733 = vmatprep.mubr.f32.mxu0 0.0
        %2734 = vmatmul.mubr.f32.gmra.mrb[0].mxu0 %v2618
        %v2735 = vpop.f32.mrb[0].mxu0
        %v2736 = vadd.f32 0.0, %v2735
        %v2737 = vpop.f32.mrb[0].mxu0
        %2738 = vmatprep.mubr.f32.mxu0 0.0
        %2739 = vmatmul.mubr.f32.gmra.mrb[0].mxu0 %v2621
        %v2740 = vpop.f32.mrb[0].mxu0
        %v2741 = vadd.f32 0.0, %v2740
        %v2742 = vpop.f32.mrb[0].mxu0
        %2743 = vmatprep.mubr.f32.mxu0 0.0
        %2744 = vmatmul.mubr.f32.gmra.mrb[0].mxu0 %v2624
        %v2745 = vpop.f32.mrb[0].mxu0
        %v2746 = vadd.f32 0.0, %v2745
        %v2747 = vpop.f32.mrb[0].mxu0
        %2748 = vmatprep.mubr.f32.mxu0 0.0
        %2749 = vmatmul.mubr.f32.gmra.mrb[0].mxu0 %v2627
        %v2750 = vpop.f32.mrb[0].mxu0
        %v2751 = vadd.f32 0.0, %v2750
        %v2752 = vpop.f32.mrb[0].mxu0
        %2753 = vmatprep.mubr.f32.mxu0 0.0
        %2754 = vmatmul.mubr.f32.gmra.mrb[0].mxu0 %v2630
        %v2755 = vpop.f32.mrb[0].mxu0
        %v2756 = vadd.f32 0.0, %v2755
        %v2757 = vpop.f32.mrb[0].mxu0
        %2758 = vmatprep.mubr.f32.mxu0 0.0
        %2759 = vmatmul.mubr.f32.gmra.mrb[0].mxu0 %v2633
        %v2760 = vpop.f32.mrb[0].mxu0
        %v2761 = vadd.f32 0.0, %v2760
        %v2762 = vpop.f32.mrb[0].mxu0
        %2763 = vmatprep.mubr.f32.mxu0 0.0
        %2764 = vmatmul.mubr.f32.gmra.mrb[0].mxu0 %v2636
        %v2765 = vpop.f32.mrb[0].mxu0
        %v2766 = vadd.f32 0.0, %v2765
        %v2767 = vpop.f32.mrb[0].mxu0
        %2768 = vmatprep.mubr.f32.mxu0 0.0
        %2769 = vmatmul.mubr.f32.gmra.mrb[0].mxu0 %v2639
        %v2770 = vpop.f32.mrb[0].mxu0
        %v2771 = vadd.f32 0.0, %v2770
        %v2772 = vpop.f32.mrb[0].mxu0
        %2773 = vmatprep.mubr.f32.mxu0 0.0
        %2774 = vmatmul.mubr.f32.gmra.mrb[0].mxu0 %v2642
        %v2775 = vpop.f32.mrb[0].mxu0
        %v2776 = vadd.f32 0.0, %v2775
        %v2777 = vpop.f32.mrb[0].mxu0
        %2778 = vmatprep.mubr.f32.mxu0 0.0
        %2779 = vmatmul.mubr.f32.gmra.mrb[0].mxu0 %v2645
        %v2780 = vpop.f32.mrb[0].mxu0
        %v2781 = vadd.f32 0.0, %v2780
        %v2782 = vpop.f32.mrb[0].mxu0
        %2783 = vmatprep.mubr.f32.mxu0 0.0
        %2784 = vmatmul.mubr.f32.gmra.mrb[0].mxu0 %v2648
        %v2785 = vpop.f32.mrb[0].mxu0
        %v2786 = vadd.f32 0.0, %v2785
        %v2787 = vpop.f32.mrb[0].mxu0
        %2788 = vmatprep.mubr.f32.mxu0 0.0
        %2789 = vmatmul.mubr.f32.gmra.mrb[0].mxu0 %v2651
        %v2790 = vpop.f32.mrb[0].mxu0
        %v2791 = vadd.f32 0.0, %v2790
        %v2792 = vpop.f32.mrb[0].mxu0
        %2793 = vmatprep.mubr.f32.mxu0 0.0
        %2794 = vmatmul.mubr.f32.gmra.mrb[0].mxu0 %v2654
        %v2795 = vpop.f32.mrb[0].mxu0
        %v2796 = vadd.f32 0.0, %v2795
        %v2797 = vpop.f32.mrb[0].mxu0
        %2798 = vmatprep.mubr.f32.mxu0 0.0
        %2799 = vmatmul.mubr.f32.gmra.mrb[0].mxu0 %v2657
        %v2800 = vpop.f32.mrb[0].mxu0
        %v2801 = vadd.f32 0.0, %v2800
        %v2802 = vpop.f32.mrb[0].mxu0
        %2803 = vdwg.mxu0
        %v2804 = vadd.f32 %v1969, %v2726
        %v2805 = vadd.f32 %v1970, %v2731
        %v2806 = vadd.f32 %v1971, %v2736
        %v2807 = vadd.f32 %v1972, %v2741
        %v2808 = vadd.f32 %v1973, %v2746
        %v2809 = vadd.f32 %v1974, %v2751
        %v2810 = vadd.f32 %v1975, %v2756
        %v2811 = vadd.f32 %v1976, %v2761
        %v2812 = vadd.f32 %v1977, %v2766
        %v2813 = vadd.f32 %v1978, %v2771
        %v2814 = vadd.f32 %v1979, %v2776
        %v2815 = vadd.f32 %v1980, %v2781
        %v2816 = vadd.f32 %v1981, %v2786
        %v2817 = vadd.f32 %v1982, %v2791
        %v2818 = vadd.f32 %v1983, %v2796
        %v2819 = vadd.f32 %v1984, %v2801
        %2820 = vrot.lane.b32.xlu0 %v1190, 64
        %v2821 = vpop.permute.xlu0 %2820
        %2822 = vrot.lane.b32.xlu0 %v1191, 64
        %v2823 = vpop.permute.xlu0 %2822
        %2824 = vrot.lane.b32.xlu0 %v1192, 64
        %v2825 = vpop.permute.xlu0 %2824
        %2826 = vrot.lane.b32.xlu0 %v1193, 64
        %v2827 = vpop.permute.xlu0 %2826
        %2828 = vrot.lane.b32.xlu0 %v1194, 64
        %v2829 = vpop.permute.xlu0 %2828
        %2830 = vrot.lane.b32.xlu0 %v1195, 64
        %v2831 = vpop.permute.xlu0 %2830
        %2832 = vrot.lane.b32.xlu0 %v1196, 64
        %v2833 = vpop.permute.xlu0 %2832
        %2834 = vrot.lane.b32.xlu0 %v1197, 64
        %v2835 = vpop.permute.xlu0 %2834
        %2836 = vrot.lane.b32.xlu0 %v1198, 64
        %v2837 = vpop.permute.xlu0 %2836
        %2838 = vrot.lane.b32.xlu0 %v1199, 64
        %v2839 = vpop.permute.xlu0 %2838
        %2840 = vrot.lane.b32.xlu0 %v1200, 64
        %v2841 = vpop.permute.xlu0 %2840
        %2842 = vrot.lane.b32.xlu0 %v1201, 64
        %v2843 = vpop.permute.xlu0 %2842
        %2844 = vrot.lane.b32.xlu0 %v1202, 64
        %v2845 = vpop.permute.xlu0 %2844
        %2846 = vrot.lane.b32.xlu0 %v1203, 64
        %v2847 = vpop.permute.xlu0 %2846
        %2848 = vrot.lane.b32.xlu0 %v1204, 64
        %v2849 = vpop.permute.xlu0 %2848
        %2850 = vrot.lane.b32.xlu0 %v1205, 64
        %v2851 = vpop.permute.xlu0 %2850
        %2852 = vrot.lane.b32.xlu0 %v953, 64
        %v2853 = vpop.permute.xlu0 %2852
        %2854 = vrot.lane.b32.xlu0 %v959, 64
        %v2855 = vpop.permute.xlu0 %2854
        %2856 = vrot.lane.b32.xlu0 %v965, 64
        %v2857 = vpop.permute.xlu0 %2856
        %2858 = vrot.lane.b32.xlu0 %v971, 64
        %v2859 = vpop.permute.xlu0 %2858
        %2860 = vrot.lane.b32.xlu0 %v977, 64
        %v2861 = vpop.permute.xlu0 %2860
        %2862 = vrot.lane.b32.xlu0 %v983, 64
        %v2863 = vpop.permute.xlu0 %2862
        %2864 = vrot.lane.b32.xlu0 %v989, 64
        %v2865 = vpop.permute.xlu0 %2864
        %2866 = vrot.lane.b32.xlu0 %v995, 64
        %v2867 = vpop.permute.xlu0 %2866
        %2868 = vrot.lane.b32.xlu0 %v1001, 64
        %v2869 = vpop.permute.xlu0 %2868
        %2870 = vrot.lane.b32.xlu0 %v1007, 64
        %v2871 = vpop.permute.xlu0 %2870
        %2872 = vrot.lane.b32.xlu0 %v1013, 64
        %v2873 = vpop.permute.xlu0 %2872
        %2874 = vrot.lane.b32.xlu0 %v1019, 64
        %v2875 = vpop.permute.xlu0 %2874
        %2876 = vrot.lane.b32.xlu0 %v1025, 64
        %v2877 = vpop.permute.xlu0 %2876
        %2878 = vrot.lane.b32.xlu0 %v1031, 64
        %v2879 = vpop.permute.xlu0 %2878
        %2880 = vrot.lane.b32.xlu0 %v1037, 64
        %v2881 = vpop.permute.xlu0 %2880
        %2882 = vrot.lane.b32.xlu0 %v1043, 64
        %v2883 = vpop.permute.xlu0 %2882
        %v2884 = vsel %vm1245, %v2821, 0
        %v2886 = vsel %vm1245, %v2823, 0
        %v2888 = vsel %vm1245, %v2825, 0
        %v2890 = vsel %vm1245, %v2827, 0
        %v2892 = vsel %vm1245, %v2829, 0
        %v2894 = vsel %vm1245, %v2831, 0
        %v2896 = vsel %vm1245, %v2833, 0
        %v2898 = vsel %vm1245, %v2835, 0
        %v2900 = vsel %vm1245, %v2837, 0
        %v2902 = vsel %vm1245, %v2839, 0
        %v2904 = vsel %vm1245, %v2841, 0
        %v2906 = vsel %vm1245, %v2843, 0
        %v2908 = vsel %vm1245, %v2845, 0
        %v2910 = vsel %vm1245, %v2847, 0
        %v2912 = vsel %vm1245, %v2849, 0
        %v2914 = vsel %vm1245, %v2851, 0
        %v2916 = vsel %vm1245, %v2853, 0
        %v2918 = vsel %vm1245, %v2855, 0
        %v2920 = vsel %vm1245, %v2857, 0
        %v2922 = vsel %vm1245, %v2859, 0
        %v2924 = vsel %vm1245, %v2861, 0
        %v2926 = vsel %vm1245, %v2863, 0
        %v2928 = vsel %vm1245, %v2865, 0
        %v2930 = vsel %vm1245, %v2867, 0
        %v2932 = vsel %vm1245, %v2869, 0
        %v2934 = vsel %vm1245, %v2871, 0
        %v2936 = vsel %vm1245, %v2873, 0
        %v2938 = vsel %vm1245, %v2875, 0
        %v2940 = vsel %vm1245, %v2877, 0
        %v2942 = vsel %vm1245, %v2879, 0
        %v2944 = vsel %vm1245, %v2881, 0
        %v2946 = vsel %vm1245, %v2883, 0
        %2948 = vmatprep.subr.mxu0 0.0
        %2949 = vmatpush1.xpose.msra.mxu0 %v2916
        %2950 = vmatprep.subr.mxu0 0.0
        %2951 = vmatpush1.xpose.msra.mxu0 %v2918
        %2952 = vmatprep.subr.mxu0 0.0
        %2953 = vmatpush1.xpose.msra.mxu0 %v2920
        %2954 = vmatprep.subr.mxu0 0.0
        %2955 = vmatpush1.xpose.msra.mxu0 %v2922
        %2956 = vmatprep.subr.mxu0 0.0
        %2957 = vmatpush1.xpose.msra.mxu0 %v2924
        %2958 = vmatprep.subr.mxu0 0.0
        %2959 = vmatpush1.xpose.msra.mxu0 %v2926
        %2960 = vmatprep.subr.mxu0 0.0
        %2961 = vmatpush1.xpose.msra.mxu0 %v2928
        %2962 = vmatprep.subr.mxu0 0.0
        %2963 = vmatpush1.xpose.msra.mxu0 %v2930
        %2964 = vmatprep.subr.mxu0 0.0
        %2965 = vmatpush1.xpose.msra.mxu0 %v2932
        %2966 = vmatprep.subr.mxu0 0.0
        %2967 = vmatpush1.xpose.msra.mxu0 %v2934
        %2968 = vmatprep.subr.mxu0 0.0
        %2969 = vmatpush1.xpose.msra.mxu0 %v2936
        %2970 = vmatprep.subr.mxu0 0.0
        %2971 = vmatpush1.xpose.msra.mxu0 %v2938
        %2972 = vmatprep.subr.mxu0 0.0
        %2973 = vmatpush1.xpose.msra.mxu0 %v2940
        %2974 = vmatprep.subr.mxu0 0.0
        %2975 = vmatpush1.xpose.msra.mxu0 %v2942
        %2976 = vmatprep.subr.mxu0 0.0
        %2977 = vmatpush1.xpose.msra.mxu0 %v2944
        %2978 = vmatprep.subr.mxu0 0.0
        %2979 = vmatpush1.xpose.msra.mxu0 %v2946
        %2980 = vmatprep.subr.mxu0 0.0
        %2981 = vmatpush1.xpose.msra.mxu0 0.0
        %2982 = vmatprep.subr.mxu0 0.0
        %2983 = vmatpush1.xpose.msra.mxu0 0.0
        %2984 = vmatprep.subr.mxu0 0.0
        %2985 = vmatpush1.xpose.msra.mxu0 0.0
        %2986 = vmatprep.subr.mxu0 0.0
        %2987 = vmatpush1.xpose.msra.mxu0 0.0
        %2988 = vmatprep.subr.mxu0 0.0
        %2989 = vmatpush1.xpose.msra.mxu0 0.0
        %2990 = vmatprep.subr.mxu0 0.0
        %2991 = vmatpush1.xpose.msra.mxu0 0.0
        %2992 = vmatprep.subr.mxu0 0.0
        %2993 = vmatpush1.xpose.msra.mxu0 0.0
        %2994 = vmatprep.subr.mxu0 0.0
        %2995 = vmatpush1.xpose.msra.mxu0 0.0
        %2996 = vmatprep.subr.mxu0 0.0
        %2997 = vmatpush1.xpose.msra.mxu0 0.0
        %2998 = vmatprep.subr.mxu0 0.0
        %2999 = vmatpush1.xpose.msra.mxu0 0.0
        %3000 = vmatprep.subr.mxu0 0.0
        %3001 = vmatpush1.xpose.msra.mxu0 0.0
        %3002 = vmatprep.subr.mxu0 0.0
        %3003 = vmatpush1.xpose.msra.mxu0 0.0
        %3004 = vmatprep.subr.mxu0 0.0
        %3005 = vmatpush1.xpose.msra.mxu0 0.0
        %3006 = vmatprep.subr.mxu0 0.0
        %3007 = vmatpush1.xpose.msra.mxu0 0.0
        %3008 = vmatprep.subr.mxu0 0.0
        %3009 = vmatpush1.xpose.msra.mxu0 0.0
        %3010 = vmatprep.subr.mxu0 0.0
        %3011 = vmatpush1.xpose.msra.mxu0 0.0
        %3012 = vmatprep.mubr.f32.mxu0 0.0
        %3013 = vmatmul.mubr.f32.gmra.mrb[0].mxu0 %v2884
        %v3014 = vpop.f32.mrb[0].mxu0
        %v3015 = vadd.f32 %v594, %v3014
        %v3016 = vpop.f32.mrb[0].mxu0
        %3017 = vmatprep.mubr.f32.mxu0 0.0
        %3018 = vmatmul.mubr.f32.gmra.mrb[0].mxu0 %v2886
        %v3019 = vpop.f32.mrb[0].mxu0
        %v3020 = vadd.f32 %v594, %v3019
        %v3021 = vpop.f32.mrb[0].mxu0
        %3022 = vmatprep.mubr.f32.mxu0 0.0
        %3023 = vmatmul.mubr.f32.gmra.mrb[0].mxu0 %v2888
        %v3024 = vpop.f32.mrb[0].mxu0
        %v3025 = vadd.f32 %v594, %v3024
        %v3026 = vpop.f32.mrb[0].mxu0
        %3027 = vmatprep.mubr.f32.mxu0 0.0
        %3028 = vmatmul.mubr.f32.gmra.mrb[0].mxu0 %v2890
        %v3029 = vpop.f32.mrb[0].mxu0
        %v3030 = vadd.f32 %v594, %v3029
        %v3031 = vpop.f32.mrb[0].mxu0
        %3032 = vmatprep.mubr.f32.mxu0 0.0
        %3033 = vmatmul.mubr.f32.gmra.mrb[0].mxu0 %v2892
        %v3034 = vpop.f32.mrb[0].mxu0
        %v3035 = vadd.f32 %v594, %v3034
        %v3036 = vpop.f32.mrb[0].mxu0
        %3037 = vmatprep.mubr.f32.mxu0 0.0
        %3038 = vmatmul.mubr.f32.gmra.mrb[0].mxu0 %v2894
        %v3039 = vpop.f32.mrb[0].mxu0
        %v3040 = vadd.f32 %v594, %v3039
        %v3041 = vpop.f32.mrb[0].mxu0
        %3042 = vmatprep.mubr.f32.mxu0 0.0
        %3043 = vmatmul.mubr.f32.gmra.mrb[0].mxu0 %v2896
        %v3044 = vpop.f32.mrb[0].mxu0
        %v3045 = vadd.f32 %v594, %v3044
        %v3046 = vpop.f32.mrb[0].mxu0
        %3047 = vmatprep.mubr.f32.mxu0 0.0
        %3048 = vmatmul.mubr.f32.gmra.mrb[0].mxu0 %v2898
        %v3049 = vpop.f32.mrb[0].mxu0
        %v3050 = vadd.f32 %v594, %v3049
        %v3051 = vpop.f32.mrb[0].mxu0
        %3052 = vmatprep.mubr.f32.mxu0 0.0
        %3053 = vmatmul.mubr.f32.gmra.mrb[0].mxu0 %v2900
        %v3054 = vpop.f32.mrb[0].mxu0
        %v3055 = vadd.f32 %v594, %v3054
        %v3056 = vpop.f32.mrb[0].mxu0
        %3057 = vmatprep.mubr.f32.mxu0 0.0
        %3058 = vmatmul.mubr.f32.gmra.mrb[0].mxu0 %v2902
        %v3059 = vpop.f32.mrb[0].mxu0
        %v3060 = vadd.f32 %v594, %v3059
        %v3061 = vpop.f32.mrb[0].mxu0
        %3062 = vmatprep.mubr.f32.mxu0 0.0
        %3063 = vmatmul.mubr.f32.gmra.mrb[0].mxu0 %v2904
        %v3064 = vpop.f32.mrb[0].mxu0
        %v3065 = vadd.f32 %v594, %v3064
        %v3066 = vpop.f32.mrb[0].mxu0
        %3067 = vmatprep.mubr.f32.mxu0 0.0
        %3068 = vmatmul.mubr.f32.gmra.mrb[0].mxu0 %v2906
        %v3069 = vpop.f32.mrb[0].mxu0
        %v3070 = vadd.f32 %v594, %v3069
        %v3071 = vpop.f32.mrb[0].mxu0
        %3072 = vmatprep.mubr.f32.mxu0 0.0
        %3073 = vmatmul.mubr.f32.gmra.mrb[0].mxu0 %v2908
        %v3074 = vpop.f32.mrb[0].mxu0
        %v3075 = vadd.f32 %v594, %v3074
        %v3076 = vpop.f32.mrb[0].mxu0
        %3077 = vmatprep.mubr.f32.mxu0 0.0
        %3078 = vmatmul.mubr.f32.gmra.mrb[0].mxu0 %v2910
        %v3079 = vpop.f32.mrb[0].mxu0
        %v3080 = vadd.f32 %v594, %v3079
        %v3081 = vpop.f32.mrb[0].mxu0
        %3082 = vmatprep.mubr.f32.mxu0 0.0
        %3083 = vmatmul.mubr.f32.gmra.mrb[0].mxu0 %v2912
        %v3084 = vpop.f32.mrb[0].mxu0
        %v3085 = vadd.f32 %v594, %v3084
        %v3086 = vpop.f32.mrb[0].mxu0
        %3087 = vmatprep.mubr.f32.mxu0 0.0
        %3088 = vmatmul.mubr.f32.gmra.mrb[0].mxu0 %v2914
        %v3089 = vpop.f32.mrb[0].mxu0
        %v3090 = vadd.f32 %v594, %v3089
        %v3091 = vpop.f32.mrb[0].mxu0
        %3092 = vdwg.mxu0
        %3093 = vmax.xlane.f32.xlu0 %v3015
        %v3094 = vpop.xlane.xlu0 %3093
        %3095 = vmax.xlane.f32.xlu0 %v3020
        %v3096 = vpop.xlane.xlu0 %3095
        %3097 = vmax.xlane.f32.xlu0 %v3025
        %v3098 = vpop.xlane.xlu0 %3097
        %3099 = vmax.xlane.f32.xlu0 %v3030
        %v3100 = vpop.xlane.xlu0 %3099
        %3101 = vmax.xlane.f32.xlu0 %v3035
        %v3102 = vpop.xlane.xlu0 %3101
        %3103 = vmax.xlane.f32.xlu0 %v3040
        %v3104 = vpop.xlane.xlu0 %3103
        %3105 = vmax.xlane.f32.xlu0 %v3045
        %v3106 = vpop.xlane.xlu0 %3105
        %3107 = vmax.xlane.f32.xlu0 %v3050
        %v3108 = vpop.xlane.xlu0 %3107
        %3109 = vmax.xlane.f32.xlu0 %v3055
        %v3110 = vpop.xlane.xlu0 %3109
        %3111 = vmax.xlane.f32.xlu0 %v3060
        %v3112 = vpop.xlane.xlu0 %3111
        %3113 = vmax.xlane.f32.xlu0 %v3065
        %v3114 = vpop.xlane.xlu0 %3113
        %3115 = vmax.xlane.f32.xlu0 %v3070
        %v3116 = vpop.xlane.xlu0 %3115
        %3117 = vmax.xlane.f32.xlu0 %v3075
        %v3118 = vpop.xlane.xlu0 %3117
        %3119 = vmax.xlane.f32.xlu0 %v3080
        %v3120 = vpop.xlane.xlu0 %3119
        %3121 = vmax.xlane.f32.xlu0 %v3085
        %v3122 = vpop.xlane.xlu0 %3121
        %3123 = vmax.xlane.f32.xlu0 %v3090
        %v3124 = vpop.xlane.xlu0 %3123
        %v3125 = vsub.f32 %v3015, %v3094
        %v3126 = vsub.f32 %v3020, %v3096
        %v3127 = vsub.f32 %v3025, %v3098
        %v3128 = vsub.f32 %v3030, %v3100
        %v3129 = vsub.f32 %v3035, %v3102
        %v3130 = vsub.f32 %v3040, %v3104
        %v3131 = vsub.f32 %v3045, %v3106
        %v3132 = vsub.f32 %v3050, %v3108
        %v3133 = vsub.f32 %v3055, %v3110
        %v3134 = vsub.f32 %v3060, %v3112
        %v3135 = vsub.f32 %v3065, %v3114
        %v3136 = vsub.f32 %v3070, %v3116
        %v3137 = vsub.f32 %v3075, %v3118
        %v3138 = vsub.f32 %v3080, %v3120
        %v3139 = vsub.f32 %v3085, %v3122
        %v3140 = vsub.f32 %v3090, %v3124
        %v3141 = vmul.f32 %v3125, 1.442695
        %v3142 = vpow.pop %v3141
        %v3143 = vmul.f32 %v3126, 1.442695
        %v3144 = vpow.pop %v3143
        %v3145 = vmul.f32 %v3127, 1.442695
        %v3146 = vpow.pop %v3145
        %v3147 = vmul.f32 %v3128, 1.442695
        %v3148 = vpow.pop %v3147
        %v3149 = vmul.f32 %v3129, 1.442695
        %v3150 = vpow.pop %v3149
        %v3151 = vmul.f32 %v3130, 1.442695
        %v3152 = vpow.pop %v3151
        %v3153 = vmul.f32 %v3131, 1.442695
        %v3154 = vpow.pop %v3153
        %v3155 = vmul.f32 %v3132, 1.442695
        %v3156 = vpow.pop %v3155
        %v3157 = vmul.f32 %v3133, 1.442695
        %v3158 = vpow.pop %v3157
        %v3159 = vmul.f32 %v3134, 1.442695
        %v3160 = vpow.pop %v3159
        %v3161 = vmul.f32 %v3135, 1.442695
        %v3162 = vpow.pop %v3161
        %v3163 = vmul.f32 %v3136, 1.442695
        %v3164 = vpow.pop %v3163
        %v3165 = vmul.f32 %v3137, 1.442695
        %v3166 = vpow.pop %v3165
        %v3167 = vmul.f32 %v3138, 1.442695
        %v3168 = vpow.pop %v3167
        %v3169 = vmul.f32 %v3139, 1.442695
        %v3170 = vpow.pop %v3169
        %v3171 = vmul.f32 %v3140, 1.442695
        %v3172 = vpow.pop %v3171
        %3173 = vadd.xlane.f32.xlu0 %v3142
        %v3174 = vpop.xlane.xlu0 %3173
        %3175 = vadd.xlane.f32.xlu0 %v3144
        %v3176 = vpop.xlane.xlu0 %3175
        %3177 = vadd.xlane.f32.xlu0 %v3146
        %v3178 = vpop.xlane.xlu0 %3177
        %3179 = vadd.xlane.f32.xlu0 %v3148
        %v3180 = vpop.xlane.xlu0 %3179
        %3181 = vadd.xlane.f32.xlu0 %v3150
        %v3182 = vpop.xlane.xlu0 %3181
        %3183 = vadd.xlane.f32.xlu0 %v3152
        %v3184 = vpop.xlane.xlu0 %3183
        %3185 = vadd.xlane.f32.xlu0 %v3154
        %v3186 = vpop.xlane.xlu0 %3185
        %3187 = vadd.xlane.f32.xlu0 %v3156
        %v3188 = vpop.xlane.xlu0 %3187
        %3189 = vadd.xlane.f32.xlu0 %v3158
        %v3190 = vpop.xlane.xlu0 %3189
        %3191 = vadd.xlane.f32.xlu0 %v3160
        %v3192 = vpop.xlane.xlu0 %3191
        %3193 = vadd.xlane.f32.xlu0 %v3162
        %v3194 = vpop.xlane.xlu0 %3193
        %3195 = vadd.xlane.f32.xlu0 %v3164
        %v3196 = vpop.xlane.xlu0 %3195
        %3197 = vadd.xlane.f32.xlu0 %v3166
        %v3198 = vpop.xlane.xlu0 %3197
        %3199 = vadd.xlane.f32.xlu0 %v3168
        %v3200 = vpop.xlane.xlu0 %3199
        %3201 = vadd.xlane.f32.xlu0 %v3170
        %v3202 = vpop.xlane.xlu0 %3201
        %3203 = vadd.xlane.f32.xlu0 %v3172
        %v3204 = vpop.xlane.xlu0 %3203
        %v3205 = vrcp.pop %v3174
        %v3206 = vrcp.pop %v3176
        %v3207 = vrcp.pop %v3178
        %v3208 = vrcp.pop %v3180
        %v3209 = vrcp.pop %v3182
        %v3210 = vrcp.pop %v3184
        %v3211 = vrcp.pop %v3186
        %v3212 = vrcp.pop %v3188
        %v3213 = vrcp.pop %v3190
        %v3214 = vrcp.pop %v3192
        %v3215 = vrcp.pop %v3194
        %v3216 = vrcp.pop %v3196
        %v3217 = vrcp.pop %v3198
        %v3218 = vrcp.pop %v3200
        %v3219 = vrcp.pop %v3202
        %v3220 = vrcp.pop %v3204
        %3221 = vrot.lane.b32.xlu0 %v1112, 64
        %v3222 = vpop.permute.xlu0 %3221
        %3223 = vrot.lane.b32.xlu0 %v1117, 64
        %v3224 = vpop.permute.xlu0 %3223
        %3225 = vrot.lane.b32.xlu0 %v1122, 64
        %v3226 = vpop.permute.xlu0 %3225
        %3227 = vrot.lane.b32.xlu0 %v1127, 64
        %v3228 = vpop.permute.xlu0 %3227
        %3229 = vrot.lane.b32.xlu0 %v1132, 64
        %v3230 = vpop.permute.xlu0 %3229
        %3231 = vrot.lane.b32.xlu0 %v1137, 64
        %v3232 = vpop.permute.xlu0 %3231
        %3233 = vrot.lane.b32.xlu0 %v1142, 64
        %v3234 = vpop.permute.xlu0 %3233
        %3235 = vrot.lane.b32.xlu0 %v1147, 64
        %v3236 = vpop.permute.xlu0 %3235
        %3237 = vrot.lane.b32.xlu0 %v1152, 64
        %v3238 = vpop.permute.xlu0 %3237
        %3239 = vrot.lane.b32.xlu0 %v1157, 64
        %v3240 = vpop.permute.xlu0 %3239
        %3241 = vrot.lane.b32.xlu0 %v1162, 64
        %v3242 = vpop.permute.xlu0 %3241
        %3243 = vrot.lane.b32.xlu0 %v1167, 64
        %v3244 = vpop.permute.xlu0 %3243
        %3245 = vrot.lane.b32.xlu0 %v1172, 64
        %v3246 = vpop.permute.xlu0 %3245
        %3247 = vrot.lane.b32.xlu0 %v1177, 64
        %v3248 = vpop.permute.xlu0 %3247
        %3249 = vrot.lane.b32.xlu0 %v1182, 64
        %v3250 = vpop.permute.xlu0 %3249
        %3251 = vrot.lane.b32.xlu0 %v1187, 64
        %v3252 = vpop.permute.xlu0 %3251
        %3269 = vmatprep.subr.mxu0 0.0
        %3270 = vmatpush1.msra.mxu0 %v3222
        %3271 = vmatprep.subr.mxu0 0.0
        %3272 = vmatpush1.msra.mxu0 %v3224
        %3273 = vmatprep.subr.mxu0 0.0
        %3274 = vmatpush1.msra.mxu0 %v3226
        %3275 = vmatprep.subr.mxu0 0.0
        %3276 = vmatpush1.msra.mxu0 %v3228
        %3277 = vmatprep.subr.mxu0 0.0
        %3278 = vmatpush1.msra.mxu0 %v3230
        %3279 = vmatprep.subr.mxu0 0.0
        %3280 = vmatpush1.msra.mxu0 %v3232
        %3281 = vmatprep.subr.mxu0 0.0
        %3282 = vmatpush1.msra.mxu0 %v3234
        %3283 = vmatprep.subr.mxu0 0.0
        %3284 = vmatpush1.msra.mxu0 %v3236
        %3285 = vmatprep.subr.mxu0 0.0
        %3286 = vmatpush1.msra.mxu0 %v3238
        %3287 = vmatprep.subr.mxu0 0.0
        %3288 = vmatpush1.msra.mxu0 %v3240
        %3289 = vmatprep.subr.mxu0 0.0
        %3290 = vmatpush1.msra.mxu0 %v3242
        %3291 = vmatprep.subr.mxu0 0.0
        %3292 = vmatpush1.msra.mxu0 %v3244
        %3293 = vmatprep.subr.mxu0 0.0
        %3294 = vmatpush1.msra.mxu0 %v3246
        %3295 = vmatprep.subr.mxu0 0.0
        %3296 = vmatpush1.msra.mxu0 %v3248
        %3297 = vmatprep.subr.mxu0 0.0
        %3298 = vmatpush1.msra.mxu0 %v3250
        %3299 = vmatprep.subr.mxu0 0.0
        %3300 = vmatpush1.msra.mxu0 %v3252
        %3301 = vmatprep.subr.mxu0 0.0
        %3302 = vmatpush1.msra.mxu0 0.0
        %3303 = vmatprep.subr.mxu0 0.0
        %3304 = vmatpush1.msra.mxu0 0.0
        %3305 = vmatprep.subr.mxu0 0.0
        %3306 = vmatpush1.msra.mxu0 0.0
        %3307 = vmatprep.subr.mxu0 0.0
        %3308 = vmatpush1.msra.mxu0 0.0
        %3309 = vmatprep.subr.mxu0 0.0
        %3310 = vmatpush1.msra.mxu0 0.0
        %3311 = vmatprep.subr.mxu0 0.0
        %3312 = vmatpush1.msra.mxu0 0.0
        %3313 = vmatprep.subr.mxu0 0.0
        %3314 = vmatpush1.msra.mxu0 0.0
        %3315 = vmatprep.subr.mxu0 0.0
        %3316 = vmatpush1.msra.mxu0 0.0
        %3317 = vmatprep.subr.mxu0 0.0
        %3318 = vmatpush1.msra.mxu0 0.0
        %3319 = vmatprep.subr.mxu0 0.0
        %3320 = vmatpush1.msra.mxu0 0.0
        %3321 = vmatprep.subr.mxu0 0.0
        %3322 = vmatpush1.msra.mxu0 0.0
        %3323 = vmatprep.subr.mxu0 0.0
        %3324 = vmatpush1.msra.mxu0 0.0
        %3325 = vmatprep.subr.mxu0 0.0
        %3326 = vmatpush1.msra.mxu0 0.0
        %3327 = vmatprep.subr.mxu0 0.0
        %3328 = vmatpush1.msra.mxu0 0.0
        %3329 = vmatprep.subr.mxu0 0.0
        %3330 = vmatpush1.msra.mxu0 0.0
        %3331 = vmatprep.subr.mxu0 0.0
        %3332 = vmatpush1.msra.mxu0 0.0
        %3333 = vmatprep.mubr.f32.mxu0 0.0
        %3334 = vmatmul.mubr.f32.gmra.mrb[0].mxu0 %v3142
        %v3335 = vpop.f32.mrb[0].mxu0
        %v3336 = vadd.f32 0.0, %v3335
        %v3337 = vpop.f32.mrb[0].mxu0
        %3338 = vmatprep.mubr.f32.mxu0 0.0
        %3339 = vmatmul.mubr.f32.gmra.mrb[0].mxu0 %v3144
        %v3340 = vpop.f32.mrb[0].mxu0
        %v3341 = vadd.f32 0.0, %v3340
        %v3342 = vpop.f32.mrb[0].mxu0
        %3343 = vmatprep.mubr.f32.mxu0 0.0
        %3344 = vmatmul.mubr.f32.gmra.mrb[0].mxu0 %v3146
        %v3345 = vpop.f32.mrb[0].mxu0
        %v3346 = vadd.f32 0.0, %v3345
        %v3347 = vpop.f32.mrb[0].mxu0
        %3348 = vmatprep.mubr.f32.mxu0 0.0
        %3349 = vmatmul.mubr.f32.gmra.mrb[0].mxu0 %v3148
        %v3350 = vpop.f32.mrb[0].mxu0
        %v3351 = vadd.f32 0.0, %v3350
        %v3352 = vpop.f32.mrb[0].mxu0
        %3353 = vmatprep.mubr.f32.mxu0 0.0
        %3354 = vmatmul.mubr.f32.gmra.mrb[0].mxu0 %v3150
        %v3355 = vpop.f32.mrb[0].mxu0
        %v3356 = vadd.f32 0.0, %v3355
        %v3357 = vpop.f32.mrb[0].mxu0
        %3358 = vmatprep.mubr.f32.mxu0 0.0
        %3359 = vmatmul.mubr.f32.gmra.mrb[0].mxu0 %v3152
        %v3360 = vpop.f32.mrb[0].mxu0
        %v3361 = vadd.f32 0.0, %v3360
        %v3362 = vpop.f32.mrb[0].mxu0
        %3363 = vmatprep.mubr.f32.mxu0 0.0
        %3364 = vmatmul.mubr.f32.gmra.mrb[0].mxu0 %v3154
        %v3365 = vpop.f32.mrb[0].mxu0
        %v3366 = vadd.f32 0.0, %v3365
        %v3367 = vpop.f32.mrb[0].mxu0
        %3368 = vmatprep.mubr.f32.mxu0 0.0
        %3369 = vmatmul.mubr.f32.gmra.mrb[0].mxu0 %v3156
        %v3370 = vpop.f32.mrb[0].mxu0
        %v3371 = vadd.f32 0.0, %v3370
        %v3372 = vpop.f32.mrb[0].mxu0
        %3373 = vmatprep.mubr.f32.mxu0 0.0
        %3374 = vmatmul.mubr.f32.gmra.mrb[0].mxu0 %v3158
        %v3375 = vpop.f32.mrb[0].mxu0
        %v3376 = vadd.f32 0.0, %v3375
        %v3377 = vpop.f32.mrb[0].mxu0
        %3378 = vmatprep.mubr.f32.mxu0 0.0
        %3379 = vmatmul.mubr.f32.gmra.mrb[0].mxu0 %v3160
        %v3380 = vpop.f32.mrb[0].mxu0
        %v3381 = vadd.f32 0.0, %v3380
        %v3382 = vpop.f32.mrb[0].mxu0
        %3383 = vmatprep.mubr.f32.mxu0 0.0
        %3384 = vmatmul.mubr.f32.gmra.mrb[0].mxu0 %v3162
        %v3385 = vpop.f32.mrb[0].mxu0
        %v3386 = vadd.f32 0.0, %v3385
        %v3387 = vpop.f32.mrb[0].mxu0
        %3388 = vmatprep.mubr.f32.mxu0 0.0
        %3389 = vmatmul.mubr.f32.gmra.mrb[0].mxu0 %v3164
        %v3390 = vpop.f32.mrb[0].mxu0
        %v3391 = vadd.f32 0.0, %v3390
        %v3392 = vpop.f32.mrb[0].mxu0
        %3393 = vmatprep.mubr.f32.mxu0 0.0
        %3394 = vmatmul.mubr.f32.gmra.mrb[0].mxu0 %v3166
        %v3395 = vpop.f32.mrb[0].mxu0
        %v3396 = vadd.f32 0.0, %v3395
        %v3397 = vpop.f32.mrb[0].mxu0
        %3398 = vmatprep.mubr.f32.mxu0 0.0
        %3399 = vmatmul.mubr.f32.gmra.mrb[0].mxu0 %v3168
        %v3400 = vpop.f32.mrb[0].mxu0
        %v3401 = vadd.f32 0.0, %v3400
        %v3402 = vpop.f32.mrb[0].mxu0
        %3403 = vmatprep.mubr.f32.mxu0 0.0
        %3404 = vmatmul.mubr.f32.gmra.mrb[0].mxu0 %v3170
        %v3405 = vpop.f32.mrb[0].mxu0
        %v3406 = vadd.f32 0.0, %v3405
        %v3407 = vpop.f32.mrb[0].mxu0
        %3408 = vmatprep.mubr.f32.mxu0 0.0
        %3409 = vmatmul.mubr.f32.gmra.mrb[0].mxu0 %v3172
        %v3410 = vpop.f32.mrb[0].mxu0
        %v3411 = vadd.f32 0.0, %v3410
        %v3412 = vpop.f32.mrb[0].mxu0
        %3413 = vdwg.mxu0
        %v3414 = vmul.f32 %v3336, %v3205
        %v3415 = vmul.f32 %v3341, %v3206
        %v3416 = vmul.f32 %v3346, %v3207
        %v3417 = vmul.f32 %v3351, %v3208
        %v3418 = vmul.f32 %v3356, %v3209
        %v3419 = vmul.f32 %v3361, %v3210
        %v3420 = vmul.f32 %v3366, %v3211
        %v3421 = vmul.f32 %v3371, %v3212
        %v3422 = vmul.f32 %v3376, %v3213
        %v3423 = vmul.f32 %v3381, %v3214
        %v3424 = vmul.f32 %v3386, %v3215
        %v3425 = vmul.f32 %v3391, %v3216
        %v3426 = vmul.f32 %v3396, %v3217
        %v3427 = vmul.f32 %v3401, %v3218
        %v3428 = vmul.f32 %v3406, %v3219
        %v3429 = vmul.f32 %v3411, %v3220
        %v3431 = vsel %vm1245, %v3414, 0
        %v3434 = vsel %vm1245, %v3415, 0
        %v3437 = vsel %vm1245, %v3416, 0
        %v3440 = vsel %vm1245, %v3417, 0
        %v3443 = vsel %vm1245, %v3418, 0
        %v3446 = vsel %vm1245, %v3419, 0
        %v3449 = vsel %vm1245, %v3420, 0
        %v3452 = vsel %vm1245, %v3421, 0
        %v3455 = vsel %vm1245, %v3422, 0
        %v3458 = vsel %vm1245, %v3423, 0
        %v3461 = vsel %vm1245, %v3424, 0
        %v3464 = vsel %vm1245, %v3425, 0
        %v3467 = vsel %vm1245, %v3426, 0
        %v3470 = vsel %vm1245, %v3427, 0
        %v3473 = vsel %vm1245, %v3428, 0
        %v3476 = vsel %vm1245, %v3429, 0
        %3478 = vmatprep.subr.mxu0 0.0
        %3479 = vmatpush1.msra.mxu0 %v1214
        %3480 = vmatprep.subr.mxu0 0.0
        %3481 = vmatpush1.msra.mxu0 %v1215
        %3482 = vmatprep.subr.mxu0 0.0
        %3483 = vmatpush1.msra.mxu0 %v1216
        %3484 = vmatprep.subr.mxu0 0.0
        %3485 = vmatpush1.msra.mxu0 %v1217
        %3486 = vmatprep.subr.mxu0 0.0
        %3487 = vmatpush1.msra.mxu0 0.0
        %3488 = vmatprep.subr.mxu0 0.0
        %3489 = vmatpush1.msra.mxu0 0.0
        %3490 = vmatprep.subr.mxu0 0.0
        %3491 = vmatpush1.msra.mxu0 0.0
        %3492 = vmatprep.subr.mxu0 0.0
        %3493 = vmatpush1.msra.mxu0 0.0
        %3494 = vmatprep.subr.mxu0 0.0
        %3495 = vmatpush1.msra.mxu0 0.0
        %3496 = vmatprep.subr.mxu0 0.0
        %3497 = vmatpush1.msra.mxu0 0.0
        %3498 = vmatprep.subr.mxu0 0.0
        %3499 = vmatpush1.msra.mxu0 0.0
        %3500 = vmatprep.subr.mxu0 0.0
        %3501 = vmatpush1.msra.mxu0 0.0
        %3502 = vmatprep.subr.mxu0 0.0
        %3503 = vmatpush1.msra.mxu0 0.0
        %3504 = vmatprep.subr.mxu0 0.0
        %3505 = vmatpush1.msra.mxu0 0.0
        %3506 = vmatprep.subr.mxu0 0.0
        %3507 = vmatpush1.msra.mxu0 0.0
        %3508 = vmatprep.subr.mxu0 0.0
        %3509 = vmatpush1.msra.mxu0 0.0
        %3510 = vmatprep.subr.mxu0 0.0
        %3511 = vmatpush1.msra.mxu0 0.0
        %3512 = vmatprep.subr.mxu0 0.0
        %3513 = vmatpush1.msra.mxu0 0.0
        %3514 = vmatprep.subr.mxu0 0.0
        %3515 = vmatpush1.msra.mxu0 0.0
        %3516 = vmatprep.subr.mxu0 0.0
        %3517 = vmatpush1.msra.mxu0 0.0
        %3518 = vmatprep.subr.mxu0 0.0
        %3519 = vmatpush1.msra.mxu0 0.0
        %3520 = vmatprep.subr.mxu0 0.0
        %3521 = vmatpush1.msra.mxu0 0.0
        %3522 = vmatprep.subr.mxu0 0.0
        %3523 = vmatpush1.msra.mxu0 0.0
        %3524 = vmatprep.subr.mxu0 0.0
        %3525 = vmatpush1.msra.mxu0 0.0
        %3526 = vmatprep.subr.mxu0 0.0
        %3527 = vmatpush1.msra.mxu0 0.0
        %3528 = vmatprep.subr.mxu0 0.0
        %3529 = vmatpush1.msra.mxu0 0.0
        %3530 = vmatprep.subr.mxu0 0.0
        %3531 = vmatpush1.msra.mxu0 0.0
        %3532 = vmatprep.subr.mxu0 0.0
        %3533 = vmatpush1.msra.mxu0 0.0
        %3534 = vmatprep.subr.mxu0 0.0
        %3535 = vmatpush1.msra.mxu0 0.0
        %3536 = vmatprep.subr.mxu0 0.0
        %3537 = vmatpush1.msra.mxu0 0.0
        %3538 = vmatprep.subr.mxu0 0.0
        %3539 = vmatpush1.msra.mxu0 0.0
        %3540 = vmatprep.subr.mxu0 0.0
        %3541 = vmatpush1.msra.mxu0 0.0
        %3542 = vmatprep.mubr.f32.mxu0 0.0
        %3543 = vmatmul.mubr.f32.gmra.mrb[0].mxu0 %v3431
        %v3544 = vpop.f32.mrb[0].mxu0
        %v3545 = vadd.f32 0.0, %v3544
        %v3546 = vpop.f32.mrb[0].mxu0
        %3547 = vmatprep.mubr.f32.mxu0 0.0
        %3548 = vmatmul.mubr.f32.gmra.mrb[0].mxu0 %v3434
        %v3549 = vpop.f32.mrb[0].mxu0
        %v3550 = vadd.f32 0.0, %v3549
        %v3551 = vpop.f32.mrb[0].mxu0
        %3552 = vmatprep.mubr.f32.mxu0 0.0
        %3553 = vmatmul.mubr.f32.gmra.mrb[0].mxu0 %v3437
        %v3554 = vpop.f32.mrb[0].mxu0
        %v3555 = vadd.f32 0.0, %v3554
        %v3556 = vpop.f32.mrb[0].mxu0
        %3557 = vmatprep.mubr.f32.mxu0 0.0
        %3558 = vmatmul.mubr.f32.gmra.mrb[0].mxu0 %v3440
        %v3559 = vpop.f32.mrb[0].mxu0
        %v3560 = vadd.f32 0.0, %v3559
        %v3561 = vpop.f32.mrb[0].mxu0
        %3562 = vmatprep.mubr.f32.mxu0 0.0
        %3563 = vmatmul.mubr.f32.gmra.mrb[0].mxu0 %v3443
        %v3564 = vpop.f32.mrb[0].mxu0
        %v3565 = vadd.f32 0.0, %v3564
        %v3566 = vpop.f32.mrb[0].mxu0
        %3567 = vmatprep.mubr.f32.mxu0 0.0
        %3568 = vmatmul.mubr.f32.gmra.mrb[0].mxu0 %v3446
        %v3569 = vpop.f32.mrb[0].mxu0
        %v3570 = vadd.f32 0.0, %v3569
        %v3571 = vpop.f32.mrb[0].mxu0
        %3572 = vmatprep.mubr.f32.mxu0 0.0
        %3573 = vmatmul.mubr.f32.gmra.mrb[0].mxu0 %v3449
        %v3574 = vpop.f32.mrb[0].mxu0
        %v3575 = vadd.f32 0.0, %v3574
        %v3576 = vpop.f32.mrb[0].mxu0
        %3577 = vmatprep.mubr.f32.mxu0 0.0
        %3578 = vmatmul.mubr.f32.gmra.mrb[0].mxu0 %v3452
        %v3579 = vpop.f32.mrb[0].mxu0
        %v3580 = vadd.f32 0.0, %v3579
        %v3581 = vpop.f32.mrb[0].mxu0
        %3582 = vmatprep.mubr.f32.mxu0 0.0
        %3583 = vmatmul.mubr.f32.gmra.mrb[0].mxu0 %v3455
        %v3584 = vpop.f32.mrb[0].mxu0
        %v3585 = vadd.f32 0.0, %v3584
        %v3586 = vpop.f32.mrb[0].mxu0
        %3587 = vmatprep.mubr.f32.mxu0 0.0
        %3588 = vmatmul.mubr.f32.gmra.mrb[0].mxu0 %v3458
        %v3589 = vpop.f32.mrb[0].mxu0
        %v3590 = vadd.f32 0.0, %v3589
        %v3591 = vpop.f32.mrb[0].mxu0
        %3592 = vmatprep.mubr.f32.mxu0 0.0
        %3593 = vmatmul.mubr.f32.gmra.mrb[0].mxu0 %v3461
        %v3594 = vpop.f32.mrb[0].mxu0
        %v3595 = vadd.f32 0.0, %v3594
        %v3596 = vpop.f32.mrb[0].mxu0
        %3597 = vmatprep.mubr.f32.mxu0 0.0
        %3598 = vmatmul.mubr.f32.gmra.mrb[0].mxu0 %v3464
        %v3599 = vpop.f32.mrb[0].mxu0
        %v3600 = vadd.f32 0.0, %v3599
        %v3601 = vpop.f32.mrb[0].mxu0
        %3602 = vmatprep.mubr.f32.mxu0 0.0
        %3603 = vmatmul.mubr.f32.gmra.mrb[0].mxu0 %v3467
        %v3604 = vpop.f32.mrb[0].mxu0
        %v3605 = vadd.f32 0.0, %v3604
        %v3606 = vpop.f32.mrb[0].mxu0
        %3607 = vmatprep.mubr.f32.mxu0 0.0
        %3608 = vmatmul.mubr.f32.gmra.mrb[0].mxu0 %v3470
        %v3609 = vpop.f32.mrb[0].mxu0
        %v3610 = vadd.f32 0.0, %v3609
        %v3611 = vpop.f32.mrb[0].mxu0
        %3612 = vmatprep.mubr.f32.mxu0 0.0
        %3613 = vmatmul.mubr.f32.gmra.mrb[0].mxu0 %v3473
        %v3614 = vpop.f32.mrb[0].mxu0
        %v3615 = vadd.f32 0.0, %v3614
        %v3616 = vpop.f32.mrb[0].mxu0
        %3617 = vmatprep.mubr.f32.mxu0 0.0
        %3618 = vmatmul.mubr.f32.gmra.mrb[0].mxu0 %v3476
        %v3619 = vpop.f32.mrb[0].mxu0
        %v3620 = vadd.f32 0.0, %v3619
        %v3621 = vpop.f32.mrb[0].mxu0
        %3622 = vdwg.mxu0
        %v3623 = vadd.f32 %v2804, %v3545
        %v3624 = vadd.f32 %v2805, %v3550
        %v3625 = vadd.f32 %v2806, %v3555
        %v3626 = vadd.f32 %v2807, %v3560
        %v3627 = vadd.f32 %v2808, %v3565
        %v3628 = vadd.f32 %v2809, %v3570
        %v3629 = vadd.f32 %v2810, %v3575
        %v3630 = vadd.f32 %v2811, %v3580
        %v3631 = vadd.f32 %v2812, %v3585
        %v3632 = vadd.f32 %v2813, %v3590
        %v3633 = vadd.f32 %v2814, %v3595
        %v3634 = vadd.f32 %v2815, %v3600
        %v3635 = vadd.f32 %v2816, %v3605
        %v3636 = vadd.f32 %v2817, %v3610
        %v3637 = vadd.f32 %v2818, %v3615
        %v3638 = vadd.f32 %v2819, %v3620
        %3639 = vrot.lane.b32.xlu0 %v1190, 32
        %v3640 = vpop.permute.xlu0 %3639
        %3641 = vrot.lane.b32.xlu0 %v1191, 32
        %v3642 = vpop.permute.xlu0 %3641
        %3643 = vrot.lane.b32.xlu0 %v1192, 32
        %v3644 = vpop.permute.xlu0 %3643
        %3645 = vrot.lane.b32.xlu0 %v1193, 32
        %v3646 = vpop.permute.xlu0 %3645
        %3647 = vrot.lane.b32.xlu0 %v1194, 32
        %v3648 = vpop.permute.xlu0 %3647
        %3649 = vrot.lane.b32.xlu0 %v1195, 32
        %v3650 = vpop.permute.xlu0 %3649
        %3651 = vrot.lane.b32.xlu0 %v1196, 32
        %v3652 = vpop.permute.xlu0 %3651
        %3653 = vrot.lane.b32.xlu0 %v1197, 32
        %v3654 = vpop.permute.xlu0 %3653
        %3655 = vrot.lane.b32.xlu0 %v1198, 32
        %v3656 = vpop.permute.xlu0 %3655
        %3657 = vrot.lane.b32.xlu0 %v1199, 32
        %v3658 = vpop.permute.xlu0 %3657
        %3659 = vrot.lane.b32.xlu0 %v1200, 32
        %v3660 = vpop.permute.xlu0 %3659
        %3661 = vrot.lane.b32.xlu0 %v1201, 32
        %v3662 = vpop.permute.xlu0 %3661
        %3663 = vrot.lane.b32.xlu0 %v1202, 32
        %v3664 = vpop.permute.xlu0 %3663
        %3665 = vrot.lane.b32.xlu0 %v1203, 32
        %v3666 = vpop.permute.xlu0 %3665
        %3667 = vrot.lane.b32.xlu0 %v1204, 32
        %v3668 = vpop.permute.xlu0 %3667
        %3669 = vrot.lane.b32.xlu0 %v1205, 32
        %v3670 = vpop.permute.xlu0 %3669
        %3671 = vrot.lane.b32.xlu0 %v953, 32
        %v3672 = vpop.permute.xlu0 %3671
        %3673 = vrot.lane.b32.xlu0 %v959, 32
        %v3674 = vpop.permute.xlu0 %3673
        %3675 = vrot.lane.b32.xlu0 %v965, 32
        %v3676 = vpop.permute.xlu0 %3675
        %3677 = vrot.lane.b32.xlu0 %v971, 32
        %v3678 = vpop.permute.xlu0 %3677
        %3679 = vrot.lane.b32.xlu0 %v977, 32
        %v3680 = vpop.permute.xlu0 %3679
        %3681 = vrot.lane.b32.xlu0 %v983, 32
        %v3682 = vpop.permute.xlu0 %3681
        %3683 = vrot.lane.b32.xlu0 %v989, 32
        %v3684 = vpop.permute.xlu0 %3683
        %3685 = vrot.lane.b32.xlu0 %v995, 32
        %v3686 = vpop.permute.xlu0 %3685
        %3687 = vrot.lane.b32.xlu0 %v1001, 32
        %v3688 = vpop.permute.xlu0 %3687
        %3689 = vrot.lane.b32.xlu0 %v1007, 32
        %v3690 = vpop.permute.xlu0 %3689
        %3691 = vrot.lane.b32.xlu0 %v1013, 32
        %v3692 = vpop.permute.xlu0 %3691
        %3693 = vrot.lane.b32.xlu0 %v1019, 32
        %v3694 = vpop.permute.xlu0 %3693
        %3695 = vrot.lane.b32.xlu0 %v1025, 32
        %v3696 = vpop.permute.xlu0 %3695
        %3697 = vrot.lane.b32.xlu0 %v1031, 32
        %v3698 = vpop.permute.xlu0 %3697
        %3699 = vrot.lane.b32.xlu0 %v1037, 32
        %v3700 = vpop.permute.xlu0 %3699
        %3701 = vrot.lane.b32.xlu0 %v1043, 32
        %v3702 = vpop.permute.xlu0 %3701
        %v3703 = vsel %vm1245, %v3640, 0
        %v3705 = vsel %vm1245, %v3642, 0
        %v3707 = vsel %vm1245, %v3644, 0
        %v3709 = vsel %vm1245, %v3646, 0
        %v3711 = vsel %vm1245, %v3648, 0
        %v3713 = vsel %vm1245, %v3650, 0
        %v3715 = vsel %vm1245, %v3652, 0
        %v3717 = vsel %vm1245, %v3654, 0
        %v3719 = vsel %vm1245, %v3656, 0
        %v3721 = vsel %vm1245, %v3658, 0
        %v3723 = vsel %vm1245, %v3660, 0
        %v3725 = vsel %vm1245, %v3662, 0
        %v3727 = vsel %vm1245, %v3664, 0
        %v3729 = vsel %vm1245, %v3666, 0
        %v3731 = vsel %vm1245, %v3668, 0
        %v3733 = vsel %vm1245, %v3670, 0
        %v3735 = vsel %vm1245, %v3672, 0
        %v3737 = vsel %vm1245, %v3674, 0
        %v3739 = vsel %vm1245, %v3676, 0
        %v3741 = vsel %vm1245, %v3678, 0
        %v3743 = vsel %vm1245, %v3680, 0
        %v3745 = vsel %vm1245, %v3682, 0
        %v3747 = vsel %vm1245, %v3684, 0
        %v3749 = vsel %vm1245, %v3686, 0
        %v3751 = vsel %vm1245, %v3688, 0
        %v3753 = vsel %vm1245, %v3690, 0
        %v3755 = vsel %vm1245, %v3692, 0
        %v3757 = vsel %vm1245, %v3694, 0
        %v3759 = vsel %vm1245, %v3696, 0
        %v3761 = vsel %vm1245, %v3698, 0
        %v3763 = vsel %vm1245, %v3700, 0
        %v3765 = vsel %vm1245, %v3702, 0
        %3767 = vmatprep.subr.mxu0 0.0
        %3768 = vmatpush1.xpose.msra.mxu0 %v3735
        %3769 = vmatprep.subr.mxu0 0.0
        %3770 = vmatpush1.xpose.msra.mxu0 %v3737
        %3771 = vmatprep.subr.mxu0 0.0
        %3772 = vmatpush1.xpose.msra.mxu0 %v3739
        %3773 = vmatprep.subr.mxu0 0.0
        %3774 = vmatpush1.xpose.msra.mxu0 %v3741
        %3775 = vmatprep.subr.mxu0 0.0
        %3776 = vmatpush1.xpose.msra.mxu0 %v3743
        %3777 = vmatprep.subr.mxu0 0.0
        %3778 = vmatpush1.xpose.msra.mxu0 %v3745
        %3779 = vmatprep.subr.mxu0 0.0
        %3780 = vmatpush1.xpose.msra.mxu0 %v3747
        %3781 = vmatprep.subr.mxu0 0.0
        %3782 = vmatpush1.xpose.msra.mxu0 %v3749
        %3783 = vmatprep.subr.mxu0 0.0
        %3784 = vmatpush1.xpose.msra.mxu0 %v3751
        %3785 = vmatprep.subr.mxu0 0.0
        %3786 = vmatpush1.xpose.msra.mxu0 %v3753
        %3787 = vmatprep.subr.mxu0 0.0
        %3788 = vmatpush1.xpose.msra.mxu0 %v3755
        %3789 = vmatprep.subr.mxu0 0.0
        %3790 = vmatpush1.xpose.msra.mxu0 %v3757
        %3791 = vmatprep.subr.mxu0 0.0
        %3792 = vmatpush1.xpose.msra.mxu0 %v3759
        %3793 = vmatprep.subr.mxu0 0.0
        %3794 = vmatpush1.xpose.msra.mxu0 %v3761
        %3795 = vmatprep.subr.mxu0 0.0
        %3796 = vmatpush1.xpose.msra.mxu0 %v3763
        %3797 = vmatprep.subr.mxu0 0.0
        %3798 = vmatpush1.xpose.msra.mxu0 %v3765
        %3799 = vmatprep.subr.mxu0 0.0
        %3800 = vmatpush1.xpose.msra.mxu0 0.0
        %3801 = vmatprep.subr.mxu0 0.0
        %3802 = vmatpush1.xpose.msra.mxu0 0.0
        %3803 = vmatprep.subr.mxu0 0.0
        %3804 = vmatpush1.xpose.msra.mxu0 0.0
        %3805 = vmatprep.subr.mxu0 0.0
        %3806 = vmatpush1.xpose.msra.mxu0 0.0
        %3807 = vmatprep.subr.mxu0 0.0
        %3808 = vmatpush1.xpose.msra.mxu0 0.0
        %3809 = vmatprep.subr.mxu0 0.0
        %3810 = vmatpush1.xpose.msra.mxu0 0.0
        %3811 = vmatprep.subr.mxu0 0.0
        %3812 = vmatpush1.xpose.msra.mxu0 0.0
        %3813 = vmatprep.subr.mxu0 0.0
        %3814 = vmatpush1.xpose.msra.mxu0 0.0
        %3815 = vmatprep.subr.mxu0 0.0
        %3816 = vmatpush1.xpose.msra.mxu0 0.0
        %3817 = vmatprep.subr.mxu0 0.0
        %3818 = vmatpush1.xpose.msra.mxu0 0.0
        %3819 = vmatprep.subr.mxu0 0.0
        %3820 = vmatpush1.xpose.msra.mxu0 0.0
        %3821 = vmatprep.subr.mxu0 0.0
        %3822 = vmatpush1.xpose.msra.mxu0 0.0
        %3823 = vmatprep.subr.mxu0 0.0
        %3824 = vmatpush1.xpose.msra.mxu0 0.0
        %3825 = vmatprep.subr.mxu0 0.0
        %3826 = vmatpush1.xpose.msra.mxu0 0.0
        %3827 = vmatprep.subr.mxu0 0.0
        %3828 = vmatpush1.xpose.msra.mxu0 0.0
        %3829 = vmatprep.subr.mxu0 0.0
        %3830 = vmatpush1.xpose.msra.mxu0 0.0
        %3831 = vmatprep.mubr.f32.mxu0 0.0
        %3832 = vmatmul.mubr.f32.gmra.mrb[0].mxu0 %v3703
        %v3833 = vpop.f32.mrb[0].mxu0
        %v3834 = vadd.f32 %v594, %v3833
        %v3835 = vpop.f32.mrb[0].mxu0
        %3836 = vmatprep.mubr.f32.mxu0 0.0
        %3837 = vmatmul.mubr.f32.gmra.mrb[0].mxu0 %v3705
        %v3838 = vpop.f32.mrb[0].mxu0
        %v3839 = vadd.f32 %v594, %v3838
        %v3840 = vpop.f32.mrb[0].mxu0
        %3841 = vmatprep.mubr.f32.mxu0 0.0
        %3842 = vmatmul.mubr.f32.gmra.mrb[0].mxu0 %v3707
        %v3843 = vpop.f32.mrb[0].mxu0
        %v3844 = vadd.f32 %v594, %v3843
        %v3845 = vpop.f32.mrb[0].mxu0
        %3846 = vmatprep.mubr.f32.mxu0 0.0
        %3847 = vmatmul.mubr.f32.gmra.mrb[0].mxu0 %v3709
        %v3848 = vpop.f32.mrb[0].mxu0
        %v3849 = vadd.f32 %v594, %v3848
        %v3850 = vpop.f32.mrb[0].mxu0
        %3851 = vmatprep.mubr.f32.mxu0 0.0
        %3852 = vmatmul.mubr.f32.gmra.mrb[0].mxu0 %v3711
        %v3853 = vpop.f32.mrb[0].mxu0
        %v3854 = vadd.f32 %v594, %v3853
        %v3855 = vpop.f32.mrb[0].mxu0
        %3856 = vmatprep.mubr.f32.mxu0 0.0
        %3857 = vmatmul.mubr.f32.gmra.mrb[0].mxu0 %v3713
        %v3858 = vpop.f32.mrb[0].mxu0
        %v3859 = vadd.f32 %v594, %v3858
        %v3860 = vpop.f32.mrb[0].mxu0
        %3861 = vmatprep.mubr.f32.mxu0 0.0
        %3862 = vmatmul.mubr.f32.gmra.mrb[0].mxu0 %v3715
        %v3863 = vpop.f32.mrb[0].mxu0
        %v3864 = vadd.f32 %v594, %v3863
        %v3865 = vpop.f32.mrb[0].mxu0
        %3866 = vmatprep.mubr.f32.mxu0 0.0
        %3867 = vmatmul.mubr.f32.gmra.mrb[0].mxu0 %v3717
        %v3868 = vpop.f32.mrb[0].mxu0
        %v3869 = vadd.f32 %v594, %v3868
        %v3870 = vpop.f32.mrb[0].mxu0
        %3871 = vmatprep.mubr.f32.mxu0 0.0
        %3872 = vmatmul.mubr.f32.gmra.mrb[0].mxu0 %v3719
        %v3873 = vpop.f32.mrb[0].mxu0
        %v3874 = vadd.f32 %v594, %v3873
        %v3875 = vpop.f32.mrb[0].mxu0
        %3876 = vmatprep.mubr.f32.mxu0 0.0
        %3877 = vmatmul.mubr.f32.gmra.mrb[0].mxu0 %v3721
        %v3878 = vpop.f32.mrb[0].mxu0
        %v3879 = vadd.f32 %v594, %v3878
        %v3880 = vpop.f32.mrb[0].mxu0
        %3881 = vmatprep.mubr.f32.mxu0 0.0
        %3882 = vmatmul.mubr.f32.gmra.mrb[0].mxu0 %v3723
        %v3883 = vpop.f32.mrb[0].mxu0
        %v3884 = vadd.f32 %v594, %v3883
        %v3885 = vpop.f32.mrb[0].mxu0
        %3886 = vmatprep.mubr.f32.mxu0 0.0
        %3887 = vmatmul.mubr.f32.gmra.mrb[0].mxu0 %v3725
        %v3888 = vpop.f32.mrb[0].mxu0
        %v3889 = vadd.f32 %v594, %v3888
        %v3890 = vpop.f32.mrb[0].mxu0
        %3891 = vmatprep.mubr.f32.mxu0 0.0
        %3892 = vmatmul.mubr.f32.gmra.mrb[0].mxu0 %v3727
        %v3893 = vpop.f32.mrb[0].mxu0
        %v3894 = vadd.f32 %v594, %v3893
        %v3895 = vpop.f32.mrb[0].mxu0
        %3896 = vmatprep.mubr.f32.mxu0 0.0
        %3897 = vmatmul.mubr.f32.gmra.mrb[0].mxu0 %v3729
        %v3898 = vpop.f32.mrb[0].mxu0
        %v3899 = vadd.f32 %v594, %v3898
        %v3900 = vpop.f32.mrb[0].mxu0
        %3901 = vmatprep.mubr.f32.mxu0 0.0
        %3902 = vmatmul.mubr.f32.gmra.mrb[0].mxu0 %v3731
        %v3903 = vpop.f32.mrb[0].mxu0
        %v3904 = vadd.f32 %v594, %v3903
        %v3905 = vpop.f32.mrb[0].mxu0
        %3906 = vmatprep.mubr.f32.mxu0 0.0
        %3907 = vmatmul.mubr.f32.gmra.mrb[0].mxu0 %v3733
        %v3908 = vpop.f32.mrb[0].mxu0
        %v3909 = vadd.f32 %v594, %v3908
        %v3910 = vpop.f32.mrb[0].mxu0
        %3911 = vdwg.mxu0
        %3912 = vmax.xlane.f32.xlu0 %v3834
        %v3913 = vpop.xlane.xlu0 %3912
        %3914 = vmax.xlane.f32.xlu0 %v3839
        %v3915 = vpop.xlane.xlu0 %3914
        %3916 = vmax.xlane.f32.xlu0 %v3844
        %v3917 = vpop.xlane.xlu0 %3916
        %3918 = vmax.xlane.f32.xlu0 %v3849
        %v3919 = vpop.xlane.xlu0 %3918
        %3920 = vmax.xlane.f32.xlu0 %v3854
        %v3921 = vpop.xlane.xlu0 %3920
        %3922 = vmax.xlane.f32.xlu0 %v3859
        %v3923 = vpop.xlane.xlu0 %3922
        %3924 = vmax.xlane.f32.xlu0 %v3864
        %v3925 = vpop.xlane.xlu0 %3924
        %3926 = vmax.xlane.f32.xlu0 %v3869
        %v3927 = vpop.xlane.xlu0 %3926
        %3928 = vmax.xlane.f32.xlu0 %v3874
        %v3929 = vpop.xlane.xlu0 %3928
        %3930 = vmax.xlane.f32.xlu0 %v3879
        %v3931 = vpop.xlane.xlu0 %3930
        %3932 = vmax.xlane.f32.xlu0 %v3884
        %v3933 = vpop.xlane.xlu0 %3932
        %3934 = vmax.xlane.f32.xlu0 %v3889
        %v3935 = vpop.xlane.xlu0 %3934
        %3936 = vmax.xlane.f32.xlu0 %v3894
        %v3937 = vpop.xlane.xlu0 %3936
        %3938 = vmax.xlane.f32.xlu0 %v3899
        %v3939 = vpop.xlane.xlu0 %3938
        %3940 = vmax.xlane.f32.xlu0 %v3904
        %v3941 = vpop.xlane.xlu0 %3940
        %3942 = vmax.xlane.f32.xlu0 %v3909
        %v3943 = vpop.xlane.xlu0 %3942
        %v3944 = vsub.f32 %v3834, %v3913
        %v3945 = vsub.f32 %v3839, %v3915
        %v3946 = vsub.f32 %v3844, %v3917
        %v3947 = vsub.f32 %v3849, %v3919
        %v3948 = vsub.f32 %v3854, %v3921
        %v3949 = vsub.f32 %v3859, %v3923
        %v3950 = vsub.f32 %v3864, %v3925
        %v3951 = vsub.f32 %v3869, %v3927
        %v3952 = vsub.f32 %v3874, %v3929
        %v3953 = vsub.f32 %v3879, %v3931
        %v3954 = vsub.f32 %v3884, %v3933
        %v3955 = vsub.f32 %v3889, %v3935
        %v3956 = vsub.f32 %v3894, %v3937
        %v3957 = vsub.f32 %v3899, %v3939
        %v3958 = vsub.f32 %v3904, %v3941
        %v3959 = vsub.f32 %v3909, %v3943
        %v3960 = vmul.f32 %v3944, 1.442695
        %v3961 = vpow.pop %v3960
        %v3962 = vmul.f32 %v3945, 1.442695
        %v3963 = vpow.pop %v3962
        %v3964 = vmul.f32 %v3946, 1.442695
        %v3965 = vpow.pop %v3964
        %v3966 = vmul.f32 %v3947, 1.442695
        %v3967 = vpow.pop %v3966
        %v3968 = vmul.f32 %v3948, 1.442695
        %v3969 = vpow.pop %v3968
        %v3970 = vmul.f32 %v3949, 1.442695
        %v3971 = vpow.pop %v3970
        %v3972 = vmul.f32 %v3950, 1.442695
        %v3973 = vpow.pop %v3972
        %v3974 = vmul.f32 %v3951, 1.442695
        %v3975 = vpow.pop %v3974
        %v3976 = vmul.f32 %v3952, 1.442695
        %v3977 = vpow.pop %v3976
        %v3978 = vmul.f32 %v3953, 1.442695
        %v3979 = vpow.pop %v3978
        %v3980 = vmul.f32 %v3954, 1.442695
        %v3981 = vpow.pop %v3980
        %v3982 = vmul.f32 %v3955, 1.442695
        %v3983 = vpow.pop %v3982
        %v3984 = vmul.f32 %v3956, 1.442695
        %v3985 = vpow.pop %v3984
        %v3986 = vmul.f32 %v3957, 1.442695
        %v3987 = vpow.pop %v3986
        %v3988 = vmul.f32 %v3958, 1.442695
        %v3989 = vpow.pop %v3988
        %v3990 = vmul.f32 %v3959, 1.442695
        %v3991 = vpow.pop %v3990
        %3992 = vadd.xlane.f32.xlu0 %v3961
        %v3993 = vpop.xlane.xlu0 %3992
        %3994 = vadd.xlane.f32.xlu0 %v3963
        %v3995 = vpop.xlane.xlu0 %3994
        %3996 = vadd.xlane.f32.xlu0 %v3965
        %v3997 = vpop.xlane.xlu0 %3996
        %3998 = vadd.xlane.f32.xlu0 %v3967
        %v3999 = vpop.xlane.xlu0 %3998
        %4000 = vadd.xlane.f32.xlu0 %v3969
        %v4001 = vpop.xlane.xlu0 %4000
        %4002 = vadd.xlane.f32.xlu0 %v3971
        %v4003 = vpop.xlane.xlu0 %4002
        %4004 = vadd.xlane.f32.xlu0 %v3973
        %v4005 = vpop.xlane.xlu0 %4004
        %4006 = vadd.xlane.f32.xlu0 %v3975
        %v4007 = vpop.xlane.xlu0 %4006
        %4008 = vadd.xlane.f32.xlu0 %v3977
        %v4009 = vpop.xlane.xlu0 %4008
        %4010 = vadd.xlane.f32.xlu0 %v3979
        %v4011 = vpop.xlane.xlu0 %4010
        %4012 = vadd.xlane.f32.xlu0 %v3981
        %v4013 = vpop.xlane.xlu0 %4012
        %4014 = vadd.xlane.f32.xlu0 %v3983
        %v4015 = vpop.xlane.xlu0 %4014
        %4016 = vadd.xlane.f32.xlu0 %v3985
        %v4017 = vpop.xlane.xlu0 %4016
        %4018 = vadd.xlane.f32.xlu0 %v3987
        %v4019 = vpop.xlane.xlu0 %4018
        %4020 = vadd.xlane.f32.xlu0 %v3989
        %v4021 = vpop.xlane.xlu0 %4020
        %4022 = vadd.xlane.f32.xlu0 %v3991
        %v4023 = vpop.xlane.xlu0 %4022
        %v4024 = vrcp.pop %v3993
        %v4025 = vrcp.pop %v3995
        %v4026 = vrcp.pop %v3997
        %v4027 = vrcp.pop %v3999
        %v4028 = vrcp.pop %v4001
        %v4029 = vrcp.pop %v4003
        %v4030 = vrcp.pop %v4005
        %v4031 = vrcp.pop %v4007
        %v4032 = vrcp.pop %v4009
        %v4033 = vrcp.pop %v4011
        %v4034 = vrcp.pop %v4013
        %v4035 = vrcp.pop %v4015
        %v4036 = vrcp.pop %v4017
        %v4037 = vrcp.pop %v4019
        %v4038 = vrcp.pop %v4021
        %v4039 = vrcp.pop %v4023
        %4040 = vrot.lane.b32.xlu0 %v1112, 32
        %v4041 = vpop.permute.xlu0 %4040
        %4042 = vrot.lane.b32.xlu0 %v1117, 32
        %v4043 = vpop.permute.xlu0 %4042
        %4044 = vrot.lane.b32.xlu0 %v1122, 32
        %v4045 = vpop.permute.xlu0 %4044
        %4046 = vrot.lane.b32.xlu0 %v1127, 32
        %v4047 = vpop.permute.xlu0 %4046
        %4048 = vrot.lane.b32.xlu0 %v1132, 32
        %v4049 = vpop.permute.xlu0 %4048
        %4050 = vrot.lane.b32.xlu0 %v1137, 32
        %v4051 = vpop.permute.xlu0 %4050
        %4052 = vrot.lane.b32.xlu0 %v1142, 32
        %v4053 = vpop.permute.xlu0 %4052
        %4054 = vrot.lane.b32.xlu0 %v1147, 32
        %v4055 = vpop.permute.xlu0 %4054
        %4056 = vrot.lane.b32.xlu0 %v1152, 32
        %v4057 = vpop.permute.xlu0 %4056
        %4058 = vrot.lane.b32.xlu0 %v1157, 32
        %v4059 = vpop.permute.xlu0 %4058
        %4060 = vrot.lane.b32.xlu0 %v1162, 32
        %v4061 = vpop.permute.xlu0 %4060
        %4062 = vrot.lane.b32.xlu0 %v1167, 32
        %v4063 = vpop.permute.xlu0 %4062
        %4064 = vrot.lane.b32.xlu0 %v1172, 32
        %v4065 = vpop.permute.xlu0 %4064
        %4066 = vrot.lane.b32.xlu0 %v1177, 32
        %v4067 = vpop.permute.xlu0 %4066
        %4068 = vrot.lane.b32.xlu0 %v1182, 32
        %v4069 = vpop.permute.xlu0 %4068
        %4070 = vrot.lane.b32.xlu0 %v1187, 32
        %v4071 = vpop.permute.xlu0 %4070
        %4088 = vmatprep.subr.mxu0 0.0
        %4089 = vmatpush1.msra.mxu0 %v4041
        %4090 = vmatprep.subr.mxu0 0.0
        %4091 = vmatpush1.msra.mxu0 %v4043
        %4092 = vmatprep.subr.mxu0 0.0
        %4093 = vmatpush1.msra.mxu0 %v4045
        %4094 = vmatprep.subr.mxu0 0.0
        %4095 = vmatpush1.msra.mxu0 %v4047
        %4096 = vmatprep.subr.mxu0 0.0
        %4097 = vmatpush1.msra.mxu0 %v4049
        %4098 = vmatprep.subr.mxu0 0.0
        %4099 = vmatpush1.msra.mxu0 %v4051
        %4100 = vmatprep.subr.mxu0 0.0
        %4101 = vmatpush1.msra.mxu0 %v4053
        %4102 = vmatprep.subr.mxu0 0.0
        %4103 = vmatpush1.msra.mxu0 %v4055
        %4104 = vmatprep.subr.mxu0 0.0
        %4105 = vmatpush1.msra.mxu0 %v4057
        %4106 = vmatprep.subr.mxu0 0.0
        %4107 = vmatpush1.msra.mxu0 %v4059
        %4108 = vmatprep.subr.mxu0 0.0
        %4109 = vmatpush1.msra.mxu0 %v4061
        %4110 = vmatprep.subr.mxu0 0.0
        %4111 = vmatpush1.msra.mxu0 %v4063
        %4112 = vmatprep.subr.mxu0 0.0
        %4113 = vmatpush1.msra.mxu0 %v4065
        %4114 = vmatprep.subr.mxu0 0.0
        %4115 = vmatpush1.msra.mxu0 %v4067
        %4116 = vmatprep.subr.mxu0 0.0
        %4117 = vmatpush1.msra.mxu0 %v4069
        %4118 = vmatprep.subr.mxu0 0.0
        %4119 = vmatpush1.msra.mxu0 %v4071
        %4120 = vmatprep.subr.mxu0 0.0
        %4121 = vmatpush1.msra.mxu0 0.0
        %4122 = vmatprep.subr.mxu0 0.0
        %4123 = vmatpush1.msra.mxu0 0.0
        %4124 = vmatprep.subr.mxu0 0.0
        %4125 = vmatpush1.msra.mxu0 0.0
        %4126 = vmatprep.subr.mxu0 0.0
        %4127 = vmatpush1.msra.mxu0 0.0
        %4128 = vmatprep.subr.mxu0 0.0
        %4129 = vmatpush1.msra.mxu0 0.0
        %4130 = vmatprep.subr.mxu0 0.0
        %4131 = vmatpush1.msra.mxu0 0.0
        %4132 = vmatprep.subr.mxu0 0.0
        %4133 = vmatpush1.msra.mxu0 0.0
        %4134 = vmatprep.subr.mxu0 0.0
        %4135 = vmatpush1.msra.mxu0 0.0
        %4136 = vmatprep.subr.mxu0 0.0
        %4137 = vmatpush1.msra.mxu0 0.0
        %4138 = vmatprep.subr.mxu0 0.0
        %4139 = vmatpush1.msra.mxu0 0.0
        %4140 = vmatprep.subr.mxu0 0.0
        %4141 = vmatpush1.msra.mxu0 0.0
        %4142 = vmatprep.subr.mxu0 0.0
        %4143 = vmatpush1.msra.mxu0 0.0
        %4144 = vmatprep.subr.mxu0 0.0
        %4145 = vmatpush1.msra.mxu0 0.0
        %4146 = vmatprep.subr.mxu0 0.0
        %4147 = vmatpush1.msra.mxu0 0.0
        %4148 = vmatprep.subr.mxu0 0.0
        %4149 = vmatpush1.msra.mxu0 0.0
        %4150 = vmatprep.subr.mxu0 0.0
        %4151 = vmatpush1.msra.mxu0 0.0
        %4152 = vmatprep.mubr.f32.mxu0 0.0
        %4153 = vmatmul.mubr.f32.gmra.mrb[0].mxu0 %v3961
        %v4154 = vpop.f32.mrb[0].mxu0
        %v4155 = vadd.f32 0.0, %v4154
        %v4156 = vpop.f32.mrb[0].mxu0
        %4157 = vmatprep.mubr.f32.mxu0 0.0
        %4158 = vmatmul.mubr.f32.gmra.mrb[0].mxu0 %v3963
        %v4159 = vpop.f32.mrb[0].mxu0
        %v4160 = vadd.f32 0.0, %v4159
        %v4161 = vpop.f32.mrb[0].mxu0
        %4162 = vmatprep.mubr.f32.mxu0 0.0
        %4163 = vmatmul.mubr.f32.gmra.mrb[0].mxu0 %v3965
        %v4164 = vpop.f32.mrb[0].mxu0
        %v4165 = vadd.f32 0.0, %v4164
        %v4166 = vpop.f32.mrb[0].mxu0
        %4167 = vmatprep.mubr.f32.mxu0 0.0
        %4168 = vmatmul.mubr.f32.gmra.mrb[0].mxu0 %v3967
        %v4169 = vpop.f32.mrb[0].mxu0
        %v4170 = vadd.f32 0.0, %v4169
        %v4171 = vpop.f32.mrb[0].mxu0
        %4172 = vmatprep.mubr.f32.mxu0 0.0
        %4173 = vmatmul.mubr.f32.gmra.mrb[0].mxu0 %v3969
        %v4174 = vpop.f32.mrb[0].mxu0
        %v4175 = vadd.f32 0.0, %v4174
        %v4176 = vpop.f32.mrb[0].mxu0
        %4177 = vmatprep.mubr.f32.mxu0 0.0
        %4178 = vmatmul.mubr.f32.gmra.mrb[0].mxu0 %v3971
        %v4179 = vpop.f32.mrb[0].mxu0
        %v4180 = vadd.f32 0.0, %v4179
        %v4181 = vpop.f32.mrb[0].mxu0
        %4182 = vmatprep.mubr.f32.mxu0 0.0
        %4183 = vmatmul.mubr.f32.gmra.mrb[0].mxu0 %v3973
        %v4184 = vpop.f32.mrb[0].mxu0
        %v4185 = vadd.f32 0.0, %v4184
        %v4186 = vpop.f32.mrb[0].mxu0
        %4187 = vmatprep.mubr.f32.mxu0 0.0
        %4188 = vmatmul.mubr.f32.gmra.mrb[0].mxu0 %v3975
        %v4189 = vpop.f32.mrb[0].mxu0
        %v4190 = vadd.f32 0.0, %v4189
        %v4191 = vpop.f32.mrb[0].mxu0
        %4192 = vmatprep.mubr.f32.mxu0 0.0
        %4193 = vmatmul.mubr.f32.gmra.mrb[0].mxu0 %v3977
        %v4194 = vpop.f32.mrb[0].mxu0
        %v4195 = vadd.f32 0.0, %v4194
        %v4196 = vpop.f32.mrb[0].mxu0
        %4197 = vmatprep.mubr.f32.mxu0 0.0
        %4198 = vmatmul.mubr.f32.gmra.mrb[0].mxu0 %v3979
        %v4199 = vpop.f32.mrb[0].mxu0
        %v4200 = vadd.f32 0.0, %v4199
        %v4201 = vpop.f32.mrb[0].mxu0
        %4202 = vmatprep.mubr.f32.mxu0 0.0
        %4203 = vmatmul.mubr.f32.gmra.mrb[0].mxu0 %v3981
        %v4204 = vpop.f32.mrb[0].mxu0
        %v4205 = vadd.f32 0.0, %v4204
        %v4206 = vpop.f32.mrb[0].mxu0
        %4207 = vmatprep.mubr.f32.mxu0 0.0
        %4208 = vmatmul.mubr.f32.gmra.mrb[0].mxu0 %v3983
        %v4209 = vpop.f32.mrb[0].mxu0
        %v4210 = vadd.f32 0.0, %v4209
        %v4211 = vpop.f32.mrb[0].mxu0
        %4212 = vmatprep.mubr.f32.mxu0 0.0
        %4213 = vmatmul.mubr.f32.gmra.mrb[0].mxu0 %v3985
        %v4214 = vpop.f32.mrb[0].mxu0
        %v4215 = vadd.f32 0.0, %v4214
        %v4216 = vpop.f32.mrb[0].mxu0
        %4217 = vmatprep.mubr.f32.mxu0 0.0
        %4218 = vmatmul.mubr.f32.gmra.mrb[0].mxu0 %v3987
        %v4219 = vpop.f32.mrb[0].mxu0
        %v4220 = vadd.f32 0.0, %v4219
        %v4221 = vpop.f32.mrb[0].mxu0
        %4222 = vmatprep.mubr.f32.mxu0 0.0
        %4223 = vmatmul.mubr.f32.gmra.mrb[0].mxu0 %v3989
        %v4224 = vpop.f32.mrb[0].mxu0
        %v4225 = vadd.f32 0.0, %v4224
        %v4226 = vpop.f32.mrb[0].mxu0
        %4227 = vmatprep.mubr.f32.mxu0 0.0
        %4228 = vmatmul.mubr.f32.gmra.mrb[0].mxu0 %v3991
        %v4229 = vpop.f32.mrb[0].mxu0
        %v4230 = vadd.f32 0.0, %v4229
        %v4231 = vpop.f32.mrb[0].mxu0
        %4232 = vdwg.mxu0
        %v4233 = vmul.f32 %v4155, %v4024
        %v4234 = vmul.f32 %v4160, %v4025
        %v4235 = vmul.f32 %v4165, %v4026
        %v4236 = vmul.f32 %v4170, %v4027
        %v4237 = vmul.f32 %v4175, %v4028
        %v4238 = vmul.f32 %v4180, %v4029
        %v4239 = vmul.f32 %v4185, %v4030
        %v4240 = vmul.f32 %v4190, %v4031
        %v4241 = vmul.f32 %v4195, %v4032
        %v4242 = vmul.f32 %v4200, %v4033
        %v4243 = vmul.f32 %v4205, %v4034
        %v4244 = vmul.f32 %v4210, %v4035
        %v4245 = vmul.f32 %v4215, %v4036
        %v4246 = vmul.f32 %v4220, %v4037
        %v4247 = vmul.f32 %v4225, %v4038
        %v4248 = vmul.f32 %v4230, %v4039
        %v4250 = vsel %vm1245, %v4233, 0
        %v4253 = vsel %vm1245, %v4234, 0
        %v4256 = vsel %vm1245, %v4235, 0
        %v4259 = vsel %vm1245, %v4236, 0
        %v4262 = vsel %vm1245, %v4237, 0
        %v4265 = vsel %vm1245, %v4238, 0
        %v4268 = vsel %vm1245, %v4239, 0
        %v4271 = vsel %vm1245, %v4240, 0
        %v4274 = vsel %vm1245, %v4241, 0
        %v4277 = vsel %vm1245, %v4242, 0
        %v4280 = vsel %vm1245, %v4243, 0
        %v4283 = vsel %vm1245, %v4244, 0
        %v4286 = vsel %vm1245, %v4245, 0
        %v4289 = vsel %vm1245, %v4246, 0
        %v4292 = vsel %vm1245, %v4247, 0
        %v4295 = vsel %vm1245, %v4248, 0
        %4297 = vmatprep.subr.mxu0 0.0
        %4298 = vmatpush1.msra.mxu0 %v1218
        %4299 = vmatprep.subr.mxu0 0.0
        %4300 = vmatpush1.msra.mxu0 %v1219
        %4301 = vmatprep.subr.mxu0 0.0
        %4302 = vmatpush1.msra.mxu0 %v1220
        %4303 = vmatprep.subr.mxu0 0.0
        %4304 = vmatpush1.msra.mxu0 %v1221
        %4305 = vmatprep.subr.mxu0 0.0
        %4306 = vmatpush1.msra.mxu0 0.0
        %4307 = vmatprep.subr.mxu0 0.0
        %4308 = vmatpush1.msra.mxu0 0.0
        %4309 = vmatprep.subr.mxu0 0.0
        %4310 = vmatpush1.msra.mxu0 0.0
        %4311 = vmatprep.subr.mxu0 0.0
        %4312 = vmatpush1.msra.mxu0 0.0
        %4313 = vmatprep.subr.mxu0 0.0
        %4314 = vmatpush1.msra.mxu0 0.0
        %4315 = vmatprep.subr.mxu0 0.0
        %4316 = vmatpush1.msra.mxu0 0.0
        %4317 = vmatprep.subr.mxu0 0.0
        %4318 = vmatpush1.msra.mxu0 0.0
        %4319 = vmatprep.subr.mxu0 0.0
        %4320 = vmatpush1.msra.mxu0 0.0
        %4321 = vmatprep.subr.mxu0 0.0
        %4322 = vmatpush1.msra.mxu0 0.0
        %4323 = vmatprep.subr.mxu0 0.0
        %4324 = vmatpush1.msra.mxu0 0.0
        %4325 = vmatprep.subr.mxu0 0.0
        %4326 = vmatpush1.msra.mxu0 0.0
        %4327 = vmatprep.subr.mxu0 0.0
        %4328 = vmatpush1.msra.mxu0 0.0
        %4329 = vmatprep.subr.mxu0 0.0
        %4330 = vmatpush1.msra.mxu0 0.0
        %4331 = vmatprep.subr.mxu0 0.0
        %4332 = vmatpush1.msra.mxu0 0.0
        %4333 = vmatprep.subr.mxu0 0.0
        %4334 = vmatpush1.msra.mxu0 0.0
        %4335 = vmatprep.subr.mxu0 0.0
        %4336 = vmatpush1.msra.mxu0 0.0
        %4337 = vmatprep.subr.mxu0 0.0
        %4338 = vmatpush1.msra.mxu0 0.0
        %4339 = vmatprep.subr.mxu0 0.0
        %4340 = vmatpush1.msra.mxu0 0.0
        %4341 = vmatprep.subr.mxu0 0.0
        %4342 = vmatpush1.msra.mxu0 0.0
        %4343 = vmatprep.subr.mxu0 0.0
        %4344 = vmatpush1.msra.mxu0 0.0
        %4345 = vmatprep.subr.mxu0 0.0
        %4346 = vmatpush1.msra.mxu0 0.0
        %4347 = vmatprep.subr.mxu0 0.0
        %4348 = vmatpush1.msra.mxu0 0.0
        %4349 = vmatprep.subr.mxu0 0.0
        %4350 = vmatpush1.msra.mxu0 0.0
        %4351 = vmatprep.subr.mxu0 0.0
        %4352 = vmatpush1.msra.mxu0 0.0
        %4353 = vmatprep.subr.mxu0 0.0
        %4354 = vmatpush1.msra.mxu0 0.0
        %4355 = vmatprep.subr.mxu0 0.0
        %4356 = vmatpush1.msra.mxu0 0.0
        %4357 = vmatprep.subr.mxu0 0.0
        %4358 = vmatpush1.msra.mxu0 0.0
        %4359 = vmatprep.subr.mxu0 0.0
        %4360 = vmatpush1.msra.mxu0 0.0
        %4361 = vmatprep.mubr.f32.mxu0 0.0
        %4362 = vmatmul.mubr.f32.gmra.mrb[0].mxu0 %v4250
        %v4363 = vpop.f32.mrb[0].mxu0
        %v4364 = vadd.f32 0.0, %v4363
        %v4365 = vpop.f32.mrb[0].mxu0
        %4366 = vmatprep.mubr.f32.mxu0 0.0
        %4367 = vmatmul.mubr.f32.gmra.mrb[0].mxu0 %v4253
        %v4368 = vpop.f32.mrb[0].mxu0
        %v4369 = vadd.f32 0.0, %v4368
        %v4370 = vpop.f32.mrb[0].mxu0
        %4371 = vmatprep.mubr.f32.mxu0 0.0
        %4372 = vmatmul.mubr.f32.gmra.mrb[0].mxu0 %v4256
        %v4373 = vpop.f32.mrb[0].mxu0
        %v4374 = vadd.f32 0.0, %v4373
        %v4375 = vpop.f32.mrb[0].mxu0
        %4376 = vmatprep.mubr.f32.mxu0 0.0
        %4377 = vmatmul.mubr.f32.gmra.mrb[0].mxu0 %v4259
        %v4378 = vpop.f32.mrb[0].mxu0
        %v4379 = vadd.f32 0.0, %v4378
        %v4380 = vpop.f32.mrb[0].mxu0
        %4381 = vmatprep.mubr.f32.mxu0 0.0
        %4382 = vmatmul.mubr.f32.gmra.mrb[0].mxu0 %v4262
        %v4383 = vpop.f32.mrb[0].mxu0
        %v4384 = vadd.f32 0.0, %v4383
        %v4385 = vpop.f32.mrb[0].mxu0
        %4386 = vmatprep.mubr.f32.mxu0 0.0
        %4387 = vmatmul.mubr.f32.gmra.mrb[0].mxu0 %v4265
        %v4388 = vpop.f32.mrb[0].mxu0
        %v4389 = vadd.f32 0.0, %v4388
        %v4390 = vpop.f32.mrb[0].mxu0
        %4391 = vmatprep.mubr.f32.mxu0 0.0
        %4392 = vmatmul.mubr.f32.gmra.mrb[0].mxu0 %v4268
        %v4393 = vpop.f32.mrb[0].mxu0
        %v4394 = vadd.f32 0.0, %v4393
        %v4395 = vpop.f32.mrb[0].mxu0
        %4396 = vmatprep.mubr.f32.mxu0 0.0
        %4397 = vmatmul.mubr.f32.gmra.mrb[0].mxu0 %v4271
        %v4398 = vpop.f32.mrb[0].mxu0
        %v4399 = vadd.f32 0.0, %v4398
        %v4400 = vpop.f32.mrb[0].mxu0
        %4401 = vmatprep.mubr.f32.mxu0 0.0
        %4402 = vmatmul.mubr.f32.gmra.mrb[0].mxu0 %v4274
        %v4403 = vpop.f32.mrb[0].mxu0
        %v4404 = vadd.f32 0.0, %v4403
        %v4405 = vpop.f32.mrb[0].mxu0
        %4406 = vmatprep.mubr.f32.mxu0 0.0
        %4407 = vmatmul.mubr.f32.gmra.mrb[0].mxu0 %v4277
        %v4408 = vpop.f32.mrb[0].mxu0
        %v4409 = vadd.f32 0.0, %v4408
        %v4410 = vpop.f32.mrb[0].mxu0
        %4411 = vmatprep.mubr.f32.mxu0 0.0
        %4412 = vmatmul.mubr.f32.gmra.mrb[0].mxu0 %v4280
        %v4413 = vpop.f32.mrb[0].mxu0
        %v4414 = vadd.f32 0.0, %v4413
        %v4415 = vpop.f32.mrb[0].mxu0
        %4416 = vmatprep.mubr.f32.mxu0 0.0
        %4417 = vmatmul.mubr.f32.gmra.mrb[0].mxu0 %v4283
        %v4418 = vpop.f32.mrb[0].mxu0
        %v4419 = vadd.f32 0.0, %v4418
        %v4420 = vpop.f32.mrb[0].mxu0
        %4421 = vmatprep.mubr.f32.mxu0 0.0
        %4422 = vmatmul.mubr.f32.gmra.mrb[0].mxu0 %v4286
        %v4423 = vpop.f32.mrb[0].mxu0
        %v4424 = vadd.f32 0.0, %v4423
        %v4425 = vpop.f32.mrb[0].mxu0
        %4426 = vmatprep.mubr.f32.mxu0 0.0
        %4427 = vmatmul.mubr.f32.gmra.mrb[0].mxu0 %v4289
        %v4428 = vpop.f32.mrb[0].mxu0
        %v4429 = vadd.f32 0.0, %v4428
        %v4430 = vpop.f32.mrb[0].mxu0
        %4431 = vmatprep.mubr.f32.mxu0 0.0
        %4432 = vmatmul.mubr.f32.gmra.mrb[0].mxu0 %v4292
        %v4433 = vpop.f32.mrb[0].mxu0
        %v4434 = vadd.f32 0.0, %v4433
        %v4435 = vpop.f32.mrb[0].mxu0
        %4436 = vmatprep.mubr.f32.mxu0 0.0
        %4437 = vmatmul.mubr.f32.gmra.mrb[0].mxu0 %v4295
        %v4438 = vpop.f32.mrb[0].mxu0
        %v4439 = vadd.f32 0.0, %v4438
        %v4440 = vpop.f32.mrb[0].mxu0
        %4441 = vdwg.mxu0
        %v4442 = vadd.f32 %v3623, %v4364
        %v4443 = vadd.f32 %v3624, %v4369
        %v4444 = vadd.f32 %v3625, %v4374
        %v4445 = vadd.f32 %v3626, %v4379
        %v4446 = vadd.f32 %v3627, %v4384
        %v4447 = vadd.f32 %v3628, %v4389
        %v4448 = vadd.f32 %v3629, %v4394
        %v4449 = vadd.f32 %v3630, %v4399
        %v4450 = vadd.f32 %v3631, %v4404
        %v4451 = vadd.f32 %v3632, %v4409
        %v4452 = vadd.f32 %v3633, %v4414
        %v4453 = vadd.f32 %v3634, %v4419
        %v4454 = vadd.f32 %v3635, %v4424
        %v4455 = vadd.f32 %v3636, %v4429
        %v4456 = vadd.f32 %v3637, %v4434
        %v4457 = vadd.f32 %v3638, %v4439
        %v4458 = vld [vmem:[%s8] sm:$0x1]
        %v4459 = vld [vmem:[%s9] sm:$0x1]
        %4460 = vadd.xlane.f32.xlu0 %v4442
        %v4461 = vpop.xlane.xlu0 %4460
        %4462 = vadd.xlane.f32.xlu0 %v4443
        %v4463 = vpop.xlane.xlu0 %4462
        %4464 = vadd.xlane.f32.xlu0 %v4444
        %v4465 = vpop.xlane.xlu0 %4464
        %4466 = vadd.xlane.f32.xlu0 %v4445
        %v4467 = vpop.xlane.xlu0 %4466
        %4468 = vadd.xlane.f32.xlu0 %v4446
        %v4469 = vpop.xlane.xlu0 %4468
        %4470 = vadd.xlane.f32.xlu0 %v4447
        %v4471 = vpop.xlane.xlu0 %4470
        %4472 = vadd.xlane.f32.xlu0 %v4448
        %v4473 = vpop.xlane.xlu0 %4472
        %4474 = vadd.xlane.f32.xlu0 %v4449
        %v4475 = vpop.xlane.xlu0 %4474
        %4476 = vadd.xlane.f32.xlu0 %v4450
        %v4477 = vpop.xlane.xlu0 %4476
        %4478 = vadd.xlane.f32.xlu0 %v4451
        %v4479 = vpop.xlane.xlu0 %4478
        %4480 = vadd.xlane.f32.xlu0 %v4452
        %v4481 = vpop.xlane.xlu0 %4480
        %4482 = vadd.xlane.f32.xlu0 %v4453
        %v4483 = vpop.xlane.xlu0 %4482
        %4484 = vadd.xlane.f32.xlu0 %v4454
        %v4485 = vpop.xlane.xlu0 %4484
        %4486 = vadd.xlane.f32.xlu0 %v4455
        %v4487 = vpop.xlane.xlu0 %4486
        %4488 = vadd.xlane.f32.xlu0 %v4456
        %v4489 = vpop.xlane.xlu0 %4488
        %4490 = vadd.xlane.f32.xlu0 %v4457
        %v4491 = vpop.xlane.xlu0 %4490
        %v4492 = vmul.f32 %v4461, %v630
        %v4493 = vmul.f32 %v4463, %v630
        %v4494 = vmul.f32 %v4465, %v630
        %v4495 = vmul.f32 %v4467, %v630
        %v4496 = vmul.f32 %v4469, %v630
        %v4497 = vmul.f32 %v4471, %v630
        %v4498 = vmul.f32 %v4473, %v630
        %v4499 = vmul.f32 %v4475, %v630
        %v4500 = vmul.f32 %v4477, %v630
        %v4501 = vmul.f32 %v4479, %v630
        %v4502 = vmul.f32 %v4481, %v630
        %v4503 = vmul.f32 %v4483, %v630
        %v4504 = vmul.f32 %v4485, %v630
        %v4505 = vmul.f32 %v4487, %v630
        %v4506 = vmul.f32 %v4489, %v630
        %v4507 = vmul.f32 %v4491, %v630
        %v4508 = vsub.f32 %v4442, %v4492
        %v4509 = vsub.f32 %v4443, %v4493
        %v4510 = vsub.f32 %v4444, %v4494
        %v4511 = vsub.f32 %v4445, %v4495
        %v4512 = vsub.f32 %v4446, %v4496
        %v4513 = vsub.f32 %v4447, %v4497
        %v4514 = vsub.f32 %v4448, %v4498
        %v4515 = vsub.f32 %v4449, %v4499
        %v4516 = vsub.f32 %v4450, %v4500
        %v4517 = vsub.f32 %v4451, %v4501
        %v4518 = vsub.f32 %v4452, %v4502
        %v4519 = vsub.f32 %v4453, %v4503
        %v4520 = vsub.f32 %v4454, %v4504
        %v4521 = vsub.f32 %v4455, %v4505
        %v4522 = vsub.f32 %v4456, %v4506
        %v4523 = vsub.f32 %v4457, %v4507
        %v4524 = vmul.f32 %v4508, %v4508
        %v4525 = vmul.f32 %v4509, %v4509
        %v4526 = vmul.f32 %v4510, %v4510
        %v4527 = vmul.f32 %v4511, %v4511
        %v4528 = vmul.f32 %v4512, %v4512
        %v4529 = vmul.f32 %v4513, %v4513
        %v4530 = vmul.f32 %v4514, %v4514
        %v4531 = vmul.f32 %v4515, %v4515
        %v4532 = vmul.f32 %v4516, %v4516
        %v4533 = vmul.f32 %v4517, %v4517
        %v4534 = vmul.f32 %v4518, %v4518
        %v4535 = vmul.f32 %v4519, %v4519
        %v4536 = vmul.f32 %v4520, %v4520
        %v4537 = vmul.f32 %v4521, %v4521
        %v4538 = vmul.f32 %v4522, %v4522
        %v4539 = vmul.f32 %v4523, %v4523
        %4540 = vadd.xlane.f32.xlu0 %v4524
        %v4541 = vpop.xlane.xlu0 %4540
        %4542 = vadd.xlane.f32.xlu0 %v4525
        %v4543 = vpop.xlane.xlu0 %4542
        %4544 = vadd.xlane.f32.xlu0 %v4526
        %v4545 = vpop.xlane.xlu0 %4544
        %4546 = vadd.xlane.f32.xlu0 %v4527
        %v4547 = vpop.xlane.xlu0 %4546
        %4548 = vadd.xlane.f32.xlu0 %v4528
        %v4549 = vpop.xlane.xlu0 %4548
        %4550 = vadd.xlane.f32.xlu0 %v4529
        %v4551 = vpop.xlane.xlu0 %4550
        %4552 = vadd.xlane.f32.xlu0 %v4530
        %v4553 = vpop.xlane.xlu0 %4552
        %4554 = vadd.xlane.f32.xlu0 %v4531
        %v4555 = vpop.xlane.xlu0 %4554
        %4556 = vadd.xlane.f32.xlu0 %v4532
        %v4557 = vpop.xlane.xlu0 %4556
        %4558 = vadd.xlane.f32.xlu0 %v4533
        %v4559 = vpop.xlane.xlu0 %4558
        %4560 = vadd.xlane.f32.xlu0 %v4534
        %v4561 = vpop.xlane.xlu0 %4560
        %4562 = vadd.xlane.f32.xlu0 %v4535
        %v4563 = vpop.xlane.xlu0 %4562
        %4564 = vadd.xlane.f32.xlu0 %v4536
        %v4565 = vpop.xlane.xlu0 %4564
        %4566 = vadd.xlane.f32.xlu0 %v4537
        %v4567 = vpop.xlane.xlu0 %4566
        %4568 = vadd.xlane.f32.xlu0 %v4538
        %v4569 = vpop.xlane.xlu0 %4568
        %4570 = vadd.xlane.f32.xlu0 %v4539
        %v4571 = vpop.xlane.xlu0 %4570
        %v4572 = vmul.f32 %v4541, %v630
        %v4573 = vmul.f32 %v4543, %v630
        %v4574 = vmul.f32 %v4545, %v630
        %v4575 = vmul.f32 %v4547, %v630
        %v4576 = vmul.f32 %v4549, %v630
        %v4577 = vmul.f32 %v4551, %v630
        %v4578 = vmul.f32 %v4553, %v630
        %v4579 = vmul.f32 %v4555, %v630
        %v4580 = vmul.f32 %v4557, %v630
        %v4581 = vmul.f32 %v4559, %v630
        %v4582 = vmul.f32 %v4561, %v630
        %v4583 = vmul.f32 %v4563, %v630
        %v4584 = vmul.f32 %v4565, %v630
        %v4585 = vmul.f32 %v4567, %v630
        %v4586 = vmul.f32 %v4569, %v630
        %v4587 = vmul.f32 %v4571, %v630
        %v4588 = vadd.f32 %v4572, 1e-05
        %v4589 = vadd.f32 %v4573, 1e-05
        %v4590 = vadd.f32 %v4574, 1e-05
        %v4591 = vadd.f32 %v4575, 1e-05
        %v4592 = vadd.f32 %v4576, 1e-05
        %v4593 = vadd.f32 %v4577, 1e-05
        %v4594 = vadd.f32 %v4578, 1e-05
        %v4595 = vadd.f32 %v4579, 1e-05
        %v4596 = vadd.f32 %v4580, 1e-05
        %v4597 = vadd.f32 %v4581, 1e-05
        %v4598 = vadd.f32 %v4582, 1e-05
        %v4599 = vadd.f32 %v4583, 1e-05
        %v4600 = vadd.f32 %v4584, 1e-05
        %v4601 = vadd.f32 %v4585, 1e-05
        %v4602 = vadd.f32 %v4586, 1e-05
        %v4603 = vadd.f32 %v4587, 1e-05
        %v4604 = vrsqrt.pop %v4588
        %v4605 = vrsqrt.pop %v4589
        %v4606 = vrsqrt.pop %v4590
        %v4607 = vrsqrt.pop %v4591
        %v4608 = vrsqrt.pop %v4592
        %v4609 = vrsqrt.pop %v4593
        %v4610 = vrsqrt.pop %v4594
        %v4611 = vrsqrt.pop %v4595
        %v4612 = vrsqrt.pop %v4596
        %v4613 = vrsqrt.pop %v4597
        %v4614 = vrsqrt.pop %v4598
        %v4615 = vrsqrt.pop %v4599
        %v4616 = vrsqrt.pop %v4600
        %v4617 = vrsqrt.pop %v4601
        %v4618 = vrsqrt.pop %v4602
        %v4619 = vrsqrt.pop %v4603
        %v4620 = vmul.f32 %v4508, %v4604
        %v4621 = vmul.f32 %v4509, %v4605
        %v4622 = vmul.f32 %v4510, %v4606
        %v4623 = vmul.f32 %v4511, %v4607
        %v4624 = vmul.f32 %v4512, %v4608
        %v4625 = vmul.f32 %v4513, %v4609
        %v4626 = vmul.f32 %v4514, %v4610
        %v4627 = vmul.f32 %v4515, %v4611
        %v4628 = vmul.f32 %v4516, %v4612
        %v4629 = vmul.f32 %v4517, %v4613
        %v4630 = vmul.f32 %v4518, %v4614
        %v4631 = vmul.f32 %v4519, %v4615
        %v4632 = vmul.f32 %v4520, %v4616
        %v4633 = vmul.f32 %v4521, %v4617
        %v4634 = vmul.f32 %v4522, %v4618
        %v4635 = vmul.f32 %v4523, %v4619
        %v4637 = vlaneseq
        %v4638 = vshrl.u32 %v4637, 7
        %v4639 = vsub.s32 0, %v4638
        %v4640 = vrot.slane %v4458, %v4639
        %v4642 = vmul.f32 %v4620, %v4640
        %v4643 = vmul.f32 %v4621, %v4640
        %v4644 = vmul.f32 %v4622, %v4640
        %v4645 = vmul.f32 %v4623, %v4640
        %v4646 = vmul.f32 %v4624, %v4640
        %v4647 = vmul.f32 %v4625, %v4640
        %v4648 = vmul.f32 %v4626, %v4640
        %v4649 = vmul.f32 %v4627, %v4640
        %v4650 = vmul.f32 %v4628, %v4640
        %v4651 = vmul.f32 %v4629, %v4640
        %v4652 = vmul.f32 %v4630, %v4640
        %v4653 = vmul.f32 %v4631, %v4640
        %v4654 = vmul.f32 %v4632, %v4640
        %v4655 = vmul.f32 %v4633, %v4640
        %v4656 = vmul.f32 %v4634, %v4640
        %v4657 = vmul.f32 %v4635, %v4640
        %v4659 = vlaneseq
        %v4660 = vshrl.u32 %v4659, 7
        %v4661 = vsub.s32 0, %v4660
        %v4662 = vrot.slane %v4459, %v4661
        %v4664 = vadd.f32 %v4642, %v4662
        %v4665 = vadd.f32 %v4643, %v4662
        %v4666 = vadd.f32 %v4644, %v4662
        %v4667 = vadd.f32 %v4645, %v4662
        %v4668 = vadd.f32 %v4646, %v4662
        %v4669 = vadd.f32 %v4647, %v4662
        %v4670 = vadd.f32 %v4648, %v4662
        %v4671 = vadd.f32 %v4649, %v4662
        %v4672 = vadd.f32 %v4650, %v4662
        %v4673 = vadd.f32 %v4651, %v4662
        %v4674 = vadd.f32 %v4652, %v4662
        %v4675 = vadd.f32 %v4653, %v4662
        %v4676 = vadd.f32 %v4654, %v4662
        %v4677 = vadd.f32 %v4655, %v4662
        %v4678 = vadd.f32 %v4656, %v4662
        %v4679 = vadd.f32 %v4657, %v4662
        %v4680 = vld [vmem:[#allocation10] sm:$0xff]
        %v4681 = vld [vmem:[#allocation10 + $0x8] sm:$0xff]
        %v4682 = vld [vmem:[#allocation10 + $0x10] sm:$0xff]
        %v4683 = vld [vmem:[#allocation10 + $0x18] sm:$0xff]
        %v4684 = vld [vmem:[#allocation10 + $0x20] sm:$0xff]
        %v4685 = vld [vmem:[#allocation10 + $0x28] sm:$0xff]
        %v4686 = vld [vmem:[#allocation10 + $0x30] sm:$0xff]
        %v4687 = vld [vmem:[#allocation10 + $0x38] sm:$0xff]
        %v4688 = vld [vmem:[#allocation10 + $0x40] sm:$0xff]
        %v4689 = vld [vmem:[#allocation10 + $0x48] sm:$0xff]
        %v4690 = vld [vmem:[#allocation10 + $0x50] sm:$0xff]
        %v4691 = vld [vmem:[#allocation10 + $0x58] sm:$0xff]
        %v4692 = vld [vmem:[#allocation10 + $0x60] sm:$0xff]
        %v4693 = vld [vmem:[#allocation10 + $0x68] sm:$0xff]
        %v4694 = vld [vmem:[#allocation10 + $0x70] sm:$0xff]
        %v4695 = vld [vmem:[#allocation10 + $0x78] sm:$0xff]
        %v4696 = vld [vmem:[#allocation10 + $0x80] sm:$0xff]
        %v4697 = vld [vmem:[#allocation10 + $0x88] sm:$0xff]
        %v4698 = vld [vmem:[#allocation10 + $0x90] sm:$0xff]
        %v4699 = vld [vmem:[#allocation10 + $0x98] sm:$0xff]
        %v4700 = vld [vmem:[#allocation10 + $0xa0] sm:$0xff]
        %v4701 = vld [vmem:[#allocation10 + $0xa8] sm:$0xff]
        %v4702 = vld [vmem:[#allocation10 + $0xb0] sm:$0xff]
        %v4703 = vld [vmem:[#allocation10 + $0xb8] sm:$0xff]
        %v4704 = vld [vmem:[#allocation10 + $0xc0] sm:$0xff]
        %v4705 = vld [vmem:[#allocation10 + $0xc8] sm:$0xff]
        %v4706 = vld [vmem:[#allocation10 + $0xd0] sm:$0xff]
        %v4707 = vld [vmem:[#allocation10 + $0xd8] sm:$0xff]
        %v4708 = vld [vmem:[#allocation10 + $0xe0] sm:$0xff]
        %v4709 = vld [vmem:[#allocation10 + $0xe8] sm:$0xff]
        %v4710 = vld [vmem:[#allocation10 + $0xf0] sm:$0xff]
        %v4711 = vld [vmem:[#allocation10 + $0xf8] sm:$0xff]
        %v4712 = vld [vmem:[%s11] sm:$0x3]
        %v4714 = vlaneseq
        %v4715 = vshrl.u32 %v4714, 7
        %v4716 = vsub.s32 0, %v4715
        %v4717 = vrot.slane %v4712, %v4716
        %v4718 = vlaneseq
        %v4719 = vshrl.u32 %v4718, 7
        %v4720 = vsub.s32 1, %v4719
        %v4721 = vrot.slane %v4712, %v4720
        %4724 = vmatprep.subr.mxu0 %v4681
        %4725 = vmatpush1.msra.mxu0 %v4680
        %4726 = vmatprep.subr.mxu0 %v4683
        %4727 = vmatpush1.msra.mxu0 %v4682
        %4728 = vmatprep.subr.mxu0 %v4685
        %4729 = vmatpush1.msra.mxu0 %v4684
        %4730 = vmatprep.subr.mxu0 %v4687
        %4731 = vmatpush1.msra.mxu0 %v4686
        %4732 = vmatprep.subr.mxu0 %v4689
        %4733 = vmatpush1.msra.mxu0 %v4688
        %4734 = vmatprep.subr.mxu0 %v4691
        %4735 = vmatpush1.msra.mxu0 %v4690
        %4736 = vmatprep.subr.mxu0 %v4693
        %4737 = vmatpush1.msra.mxu0 %v4692
        %4738 = vmatprep.subr.mxu0 %v4695
        %4739 = vmatpush1.msra.mxu0 %v4694
        %4740 = vmatprep.subr.mxu0 %v4697
        %4741 = vmatpush1.msra.mxu0 %v4696
        %4742 = vmatprep.subr.mxu0 %v4699
        %4743 = vmatpush1.msra.mxu0 %v4698
        %4744 = vmatprep.subr.mxu0 %v4701
        %4745 = vmatpush1.msra.mxu0 %v4700
        %4746 = vmatprep.subr.mxu0 %v4703
        %4747 = vmatpush1.msra.mxu0 %v4702
        %4748 = vmatprep.subr.mxu0 %v4705
        %4749 = vmatpush1.msra.mxu0 %v4704
        %4750 = vmatprep.subr.mxu0 %v4707
        %4751 = vmatpush1.msra.mxu0 %v4706
        %4752 = vmatprep.subr.mxu0 %v4709
        %4753 = vmatpush1.msra.mxu0 %v4708
        %4754 = vmatprep.subr.mxu0 %v4711
        %4755 = vmatpush1.msra.mxu0 %v4710
        %4756 = vmatprep.subr.mxu0 0.0
        %4757 = vmatpush1.msra.mxu0 0.0
        %4758 = vmatprep.subr.mxu0 0.0
        %4759 = vmatpush1.msra.mxu0 0.0
        %4760 = vmatprep.subr.mxu0 0.0
        %4761 = vmatpush1.msra.mxu0 0.0
        %4762 = vmatprep.subr.mxu0 0.0
        %4763 = vmatpush1.msra.mxu0 0.0
        %4764 = vmatprep.subr.mxu0 0.0
        %4765 = vmatpush1.msra.mxu0 0.0
        %4766 = vmatprep.subr.mxu0 0.0
        %4767 = vmatpush1.msra.mxu0 0.0
        %4768 = vmatprep.subr.mxu0 0.0
        %4769 = vmatpush1.msra.mxu0 0.0
        %4770 = vmatprep.subr.mxu0 0.0
        %4771 = vmatpush1.msra.mxu0 0.0
        %4772 = vmatprep.subr.mxu0 0.0
        %4773 = vmatpush1.msra.mxu0 0.0
        %4774 = vmatprep.subr.mxu0 0.0
        %4775 = vmatpush1.msra.mxu0 0.0
        %4776 = vmatprep.subr.mxu0 0.0
        %4777 = vmatpush1.msra.mxu0 0.0
        %4778 = vmatprep.subr.mxu0 0.0
        %4779 = vmatpush1.msra.mxu0 0.0
        %4780 = vmatprep.subr.mxu0 0.0
        %4781 = vmatpush1.msra.mxu0 0.0
        %4782 = vmatprep.subr.mxu0 0.0
        %4783 = vmatpush1.msra.mxu0 0.0
        %4784 = vmatprep.subr.mxu0 0.0
        %4785 = vmatpush1.msra.mxu0 0.0
        %4786 = vmatprep.subr.mxu0 0.0
        %4787 = vmatpush1.msra.mxu0 0.0
        %4788 = vmatprep.mubr.f32.mxu0 0.0
        %4789 = vmatmul.mubr.f32.gmra.mrb[0].mxu0 %v4664
        %v4790 = vpop.f32.mrb[0].mxu0
        %v4791 = vadd.f32 %v4717, %v4790
        %v4792 = vpop.f32.mrb[0].mxu0
        %v4793 = vadd.f32 %v4721, %v4792
        %4794 = vmatprep.mubr.f32.mxu0 0.0
        %4795 = vmatmul.mubr.f32.gmra.mrb[0].mxu0 %v4665
        %v4796 = vpop.f32.mrb[0].mxu0
        %v4797 = vadd.f32 %v4717, %v4796
        %v4798 = vpop.f32.mrb[0].mxu0
        %v4799 = vadd.f32 %v4721, %v4798
        %4800 = vmatprep.mubr.f32.mxu0 0.0
        %4801 = vmatmul.mubr.f32.gmra.mrb[0].mxu0 %v4666
        %v4802 = vpop.f32.mrb[0].mxu0
        %v4803 = vadd.f32 %v4717, %v4802
        %v4804 = vpop.f32.mrb[0].mxu0
        %v4805 = vadd.f32 %v4721, %v4804
        %4806 = vmatprep.mubr.f32.mxu0 0.0
        %4807 = vmatmul.mubr.f32.gmra.mrb[0].mxu0 %v4667
        %v4808 = vpop.f32.mrb[0].mxu0
        %v4809 = vadd.f32 %v4717, %v4808
        %v4810 = vpop.f32.mrb[0].mxu0
        %v4811 = vadd.f32 %v4721, %v4810
        %4812 = vmatprep.mubr.f32.mxu0 0.0
        %4813 = vmatmul.mubr.f32.gmra.mrb[0].mxu0 %v4668
        %v4814 = vpop.f32.mrb[0].mxu0
        %v4815 = vadd.f32 %v4717, %v4814
        %v4816 = vpop.f32.mrb[0].mxu0
        %v4817 = vadd.f32 %v4721, %v4816
        %4818 = vmatprep.mubr.f32.mxu0 0.0
        %4819 = vmatmul.mubr.f32.gmra.mrb[0].mxu0 %v4669
        %v4820 = vpop.f32.mrb[0].mxu0
        %v4821 = vadd.f32 %v4717, %v4820
        %v4822 = vpop.f32.mrb[0].mxu0
        %v4823 = vadd.f32 %v4721, %v4822
        %4824 = vmatprep.mubr.f32.mxu0 0.0
        %4825 = vmatmul.mubr.f32.gmra.mrb[0].mxu0 %v4670
        %v4826 = vpop.f32.mrb[0].mxu0
        %v4827 = vadd.f32 %v4717, %v4826
        %v4828 = vpop.f32.mrb[0].mxu0
        %v4829 = vadd.f32 %v4721, %v4828
        %4830 = vmatprep.mubr.f32.mxu0 0.0
        %4831 = vmatmul.mubr.f32.gmra.mrb[0].mxu0 %v4671
        %v4832 = vpop.f32.mrb[0].mxu0
        %v4833 = vadd.f32 %v4717, %v4832
        %v4834 = vpop.f32.mrb[0].mxu0
        %v4835 = vadd.f32 %v4721, %v4834
        %4836 = vmatprep.mubr.f32.mxu0 0.0
        %4837 = vmatmul.mubr.f32.gmra.mrb[0].mxu0 %v4672
        %v4838 = vpop.f32.mrb[0].mxu0
        %v4839 = vadd.f32 %v4717, %v4838
        %v4840 = vpop.f32.mrb[0].mxu0
        %v4841 = vadd.f32 %v4721, %v4840
        %4842 = vmatprep.mubr.f32.mxu0 0.0
        %4843 = vmatmul.mubr.f32.gmra.mrb[0].mxu0 %v4673
        %v4844 = vpop.f32.mrb[0].mxu0
        %v4845 = vadd.f32 %v4717, %v4844
        %v4846 = vpop.f32.mrb[0].mxu0
        %v4847 = vadd.f32 %v4721, %v4846
        %4848 = vmatprep.mubr.f32.mxu0 0.0
        %4849 = vmatmul.mubr.f32.gmra.mrb[0].mxu0 %v4674
        %v4850 = vpop.f32.mrb[0].mxu0
        %v4851 = vadd.f32 %v4717, %v4850
        %v4852 = vpop.f32.mrb[0].mxu0
        %v4853 = vadd.f32 %v4721, %v4852
        %4854 = vmatprep.mubr.f32.mxu0 0.0
        %4855 = vmatmul.mubr.f32.gmra.mrb[0].mxu0 %v4675
        %v4856 = vpop.f32.mrb[0].mxu0
        %v4857 = vadd.f32 %v4717, %v4856
        %v4858 = vpop.f32.mrb[0].mxu0
        %v4859 = vadd.f32 %v4721, %v4858
        %4860 = vmatprep.mubr.f32.mxu0 0.0
        %4861 = vmatmul.mubr.f32.gmra.mrb[0].mxu0 %v4676
        %v4862 = vpop.f32.mrb[0].mxu0
        %v4863 = vadd.f32 %v4717, %v4862
        %v4864 = vpop.f32.mrb[0].mxu0
        %v4865 = vadd.f32 %v4721, %v4864
        %4866 = vmatprep.mubr.f32.mxu0 0.0
        %4867 = vmatmul.mubr.f32.gmra.mrb[0].mxu0 %v4677
        %v4868 = vpop.f32.mrb[0].mxu0
        %v4869 = vadd.f32 %v4717, %v4868
        %v4870 = vpop.f32.mrb[0].mxu0
        %v4871 = vadd.f32 %v4721, %v4870
        %4872 = vmatprep.mubr.f32.mxu0 0.0
        %4873 = vmatmul.mubr.f32.gmra.mrb[0].mxu0 %v4678
        %v4874 = vpop.f32.mrb[0].mxu0
        %v4875 = vadd.f32 %v4717, %v4874
        %v4876 = vpop.f32.mrb[0].mxu0
        %v4877 = vadd.f32 %v4721, %v4876
        %4878 = vmatprep.mubr.f32.mxu0 0.0
        %4879 = vmatmul.mubr.f32.gmra.mrb[0].mxu0 %v4679
        %v4880 = vpop.f32.mrb[0].mxu0
        %v4881 = vadd.f32 %v4717, %v4880
        %v4882 = vpop.f32.mrb[0].mxu0
        %v4883 = vadd.f32 %v4721, %v4882
        %4884 = vdwg.mxu0
        %vm4885 = vcmp.gt.f32.partialorder %v4791, 20.0
        %vm4886 = vcmp.gt.f32.partialorder %v4793, 20.0
        %vm4887 = vcmp.gt.f32.partialorder %v4797, 20.0
        %vm4888 = vcmp.gt.f32.partialorder %v4799, 20.0
        %vm4889 = vcmp.gt.f32.partialorder %v4803, 20.0
        %vm4890 = vcmp.gt.f32.partialorder %v4805, 20.0
        %vm4891 = vcmp.gt.f32.partialorder %v4809, 20.0
        %vm4892 = vcmp.gt.f32.partialorder %v4811, 20.0
        %vm4893 = vcmp.gt.f32.partialorder %v4815, 20.0
        %vm4894 = vcmp.gt.f32.partialorder %v4817, 20.0
        %vm4895 = vcmp.gt.f32.partialorder %v4821, 20.0
        %vm4896 = vcmp.gt.f32.partialorder %v4823, 20.0
        %vm4897 = vcmp.gt.f32.partialorder %v4827, 20.0
        %vm4898 = vcmp.gt.f32.partialorder %v4829, 20.0
        %vm4899 = vcmp.gt.f32.partialorder %v4833, 20.0
        %vm4900 = vcmp.gt.f32.partialorder %v4835, 20.0
        %vm4901 = vcmp.gt.f32.partialorder %v4839, 20.0
        %vm4902 = vcmp.gt.f32.partialorder %v4841, 20.0
        %vm4903 = vcmp.gt.f32.partialorder %v4845, 20.0
        %vm4904 = vcmp.gt.f32.partialorder %v4847, 20.0
        %vm4905 = vcmp.gt.f32.partialorder %v4851, 20.0
        %vm4906 = vcmp.gt.f32.partialorder %v4853, 20.0
        %vm4907 = vcmp.gt.f32.partialorder %v4857, 20.0
        %vm4908 = vcmp.gt.f32.partialorder %v4859, 20.0
        %vm4909 = vcmp.gt.f32.partialorder %v4863, 20.0
        %vm4910 = vcmp.gt.f32.partialorder %v4865, 20.0
        %vm4911 = vcmp.gt.f32.partialorder %v4869, 20.0
        %vm4912 = vcmp.gt.f32.partialorder %v4871, 20.0
        %vm4913 = vcmp.gt.f32.partialorder %v4875, 20.0
        %vm4914 = vcmp.gt.f32.partialorder %v4877, 20.0
        %vm4915 = vcmp.gt.f32.partialorder %v4881, 20.0
        %vm4916 = vcmp.gt.f32.partialorder %v4883, 20.0
        %v4917 = vsel %vm4885, 0.0, %v4791
        %v4918 = vsel %vm4886, 0.0, %v4793
        %v4919 = vsel %vm4887, 0.0, %v4797
        %v4920 = vsel %vm4888, 0.0, %v4799
        %v4921 = vsel %vm4889, 0.0, %v4803
        %v4922 = vsel %vm4890, 0.0, %v4805
        %v4923 = vsel %vm4891, 0.0, %v4809
        %v4924 = vsel %vm4892, 0.0, %v4811
        %v4925 = vsel %vm4893, 0.0, %v4815
        %v4926 = vsel %vm4894, 0.0, %v4817
        %v4927 = vsel %vm4895, 0.0, %v4821
        %v4928 = vsel %vm4896, 0.0, %v4823
        %v4929 = vsel %vm4897, 0.0, %v4827
        %v4930 = vsel %vm4898, 0.0, %v4829
        %v4931 = vsel %vm4899, 0.0, %v4833
        %v4932 = vsel %vm4900, 0.0, %v4835
        %v4933 = vsel %vm4901, 0.0, %v4839
        %v4934 = vsel %vm4902, 0.0, %v4841
        %v4935 = vsel %vm4903, 0.0, %v4845
        %v4936 = vsel %vm4904, 0.0, %v4847
        %v4937 = vsel %vm4905, 0.0, %v4851
        %v4938 = vsel %vm4906, 0.0, %v4853
        %v4939 = vsel %vm4907, 0.0, %v4857
        %v4940 = vsel %vm4908, 0.0, %v4859
        %v4941 = vsel %vm4909, 0.0, %v4863
        %v4942 = vsel %vm4910, 0.0, %v4865
        %v4943 = vsel %vm4911, 0.0, %v4869
        %v4944 = vsel %vm4912, 0.0, %v4871
        %v4945 = vsel %vm4913, 0.0, %v4875
        %v4946 = vsel %vm4914, 0.0, %v4877
        %v4947 = vsel %vm4915, 0.0, %v4881
        %v4948 = vsel %vm4916, 0.0, %v4883
        %v4949 = vmul.f32 %v4917, 1.442695
        %v4950 = vpow.pop %v4949
        %v4951 = vmul.f32 %v4918, 1.442695
        %v4952 = vpow.pop %v4951
        %v4953 = vmul.f32 %v4919, 1.442695
        %v4954 = vpow.pop %v4953
        %v4955 = vmul.f32 %v4920, 1.442695
        %v4956 = vpow.pop %v4955
        %v4957 = vmul.f32 %v4921, 1.442695
        %v4958 = vpow.pop %v4957
        %v4959 = vmul.f32 %v4922, 1.442695
        %v4960 = vpow.pop %v4959
        %v4961 = vmul.f32 %v4923, 1.442695
        %v4962 = vpow.pop %v4961
        %v4963 = vmul.f32 %v4924, 1.442695
        %v4964 = vpow.pop %v4963
        %v4965 = vmul.f32 %v4925, 1.442695
        %v4966 = vpow.pop %v4965
        %v4967 = vmul.f32 %v4926, 1.442695
        %v4968 = vpow.pop %v4967
        %v4969 = vmul.f32 %v4927, 1.442695
        %v4970 = vpow.pop %v4969
        %v4971 = vmul.f32 %v4928, 1.442695
        %v4972 = vpow.pop %v4971
        %v4973 = vmul.f32 %v4929, 1.442695
        %v4974 = vpow.pop %v4973
        %v4975 = vmul.f32 %v4930, 1.442695
        %v4976 = vpow.pop %v4975
        %v4977 = vmul.f32 %v4931, 1.442695
        %v4978 = vpow.pop %v4977
        %v4979 = vmul.f32 %v4932, 1.442695
        %v4980 = vpow.pop %v4979
        %v4981 = vmul.f32 %v4933, 1.442695
        %v4982 = vpow.pop %v4981
        %v4983 = vmul.f32 %v4934, 1.442695
        %v4984 = vpow.pop %v4983
        %v4985 = vmul.f32 %v4935, 1.442695
        %v4986 = vpow.pop %v4985
        %v4987 = vmul.f32 %v4936, 1.442695
        %v4988 = vpow.pop %v4987
        %v4989 = vmul.f32 %v4937, 1.442695
        %v4990 = vpow.pop %v4989
        %v4991 = vmul.f32 %v4938, 1.442695
        %v4992 = vpow.pop %v4991
        %v4993 = vmul.f32 %v4939, 1.442695
        %v4994 = vpow.pop %v4993
        %v4995 = vmul.f32 %v4940, 1.442695
        %v4996 = vpow.pop %v4995
        %v4997 = vmul.f32 %v4941, 1.442695
        %v4998 = vpow.pop %v4997
        %v4999 = vmul.f32 %v4942, 1.442695
        %v5000 = vpow.pop %v4999
        %v5001 = vmul.f32 %v4943, 1.442695
        %v5002 = vpow.pop %v5001
        %v5003 = vmul.f32 %v4944, 1.442695
        %v5004 = vpow.pop %v5003
        %v5005 = vmul.f32 %v4945, 1.442695
        %v5006 = vpow.pop %v5005
        %v5007 = vmul.f32 %v4946, 1.442695
        %v5008 = vpow.pop %v5007
        %v5009 = vmul.f32 %v4947, 1.442695
        %v5010 = vpow.pop %v5009
        %v5011 = vmul.f32 %v4948, 1.442695
        %v5012 = vpow.pop %v5011
        %v5013 = vadd.f32 %v4950, 1.0
        %v5014 = vadd.f32 %v4952, 1.0
        %v5015 = vadd.f32 %v4954, 1.0
        %v5016 = vadd.f32 %v4956, 1.0
        %v5017 = vadd.f32 %v4958, 1.0
        %v5018 = vadd.f32 %v4960, 1.0
        %v5019 = vadd.f32 %v4962, 1.0
        %v5020 = vadd.f32 %v4964, 1.0
        %v5021 = vadd.f32 %v4966, 1.0
        %v5022 = vadd.f32 %v4968, 1.0
        %v5023 = vadd.f32 %v4970, 1.0
        %v5024 = vadd.f32 %v4972, 1.0
        %v5025 = vadd.f32 %v4974, 1.0
        %v5026 = vadd.f32 %v4976, 1.0
        %v5027 = vadd.f32 %v4978, 1.0
        %v5028 = vadd.f32 %v4980, 1.0
        %v5029 = vadd.f32 %v4982, 1.0
        %v5030 = vadd.f32 %v4984, 1.0
        %v5031 = vadd.f32 %v4986, 1.0
        %v5032 = vadd.f32 %v4988, 1.0
        %v5033 = vadd.f32 %v4990, 1.0
        %v5034 = vadd.f32 %v4992, 1.0
        %v5035 = vadd.f32 %v4994, 1.0
        %v5036 = vadd.f32 %v4996, 1.0
        %v5037 = vadd.f32 %v4998, 1.0
        %v5038 = vadd.f32 %v5000, 1.0
        %v5039 = vadd.f32 %v5002, 1.0
        %v5040 = vadd.f32 %v5004, 1.0
        %v5041 = vadd.f32 %v5006, 1.0
        %v5042 = vadd.f32 %v5008, 1.0
        %v5043 = vadd.f32 %v5010, 1.0
        %v5044 = vadd.f32 %v5012, 1.0
        %v5045 = vlog2.pop %v5013
        %v5046 = vmul.f32 %v5045, 0.6931472
        %v5047 = vlog2.pop %v5014
        %v5048 = vmul.f32 %v5047, 0.6931472
        %v5049 = vlog2.pop %v5015
        %v5050 = vmul.f32 %v5049, 0.6931472
        %v5051 = vlog2.pop %v5016
        %v5052 = vmul.f32 %v5051, 0.6931472
        %v5053 = vlog2.pop %v5017
        %v5054 = vmul.f32 %v5053, 0.6931472
        %v5055 = vlog2.pop %v5018
        %v5056 = vmul.f32 %v5055, 0.6931472
        %v5057 = vlog2.pop %v5019
        %v5058 = vmul.f32 %v5057, 0.6931472
        %v5059 = vlog2.pop %v5020
        %v5060 = vmul.f32 %v5059, 0.6931472
        %v5061 = vlog2.pop %v5021
        %v5062 = vmul.f32 %v5061, 0.6931472
        %v5063 = vlog2.pop %v5022
        %v5064 = vmul.f32 %v5063, 0.6931472
        %v5065 = vlog2.pop %v5023
        %v5066 = vmul.f32 %v5065, 0.6931472
        %v5067 = vlog2.pop %v5024
        %v5068 = vmul.f32 %v5067, 0.6931472
        %v5069 = vlog2.pop %v5025
        %v5070 = vmul.f32 %v5069, 0.6931472
        %v5071 = vlog2.pop %v5026
        %v5072 = vmul.f32 %v5071, 0.6931472
        %v5073 = vlog2.pop %v5027
        %v5074 = vmul.f32 %v5073, 0.6931472
        %v5075 = vlog2.pop %v5028
        %v5076 = vmul.f32 %v5075, 0.6931472
        %v5077 = vlog2.pop %v5029
        %v5078 = vmul.f32 %v5077, 0.6931472
        %v5079 = vlog2.pop %v5030
        %v5080 = vmul.f32 %v5079, 0.6931472
        %v5081 = vlog2.pop %v5031
        %v5082 = vmul.f32 %v5081, 0.6931472
        %v5083 = vlog2.pop %v5032
        %v5084 = vmul.f32 %v5083, 0.6931472
        %v5085 = vlog2.pop %v5033
        %v5086 = vmul.f32 %v5085, 0.6931472
        %v5087 = vlog2.pop %v5034
        %v5088 = vmul.f32 %v5087, 0.6931472
        %v5089 = vlog2.pop %v5035
        %v5090 = vmul.f32 %v5089, 0.6931472
        %v5091 = vlog2.pop %v5036
        %v5092 = vmul.f32 %v5091, 0.6931472
        %v5093 = vlog2.pop %v5037
        %v5094 = vmul.f32 %v5093, 0.6931472
        %v5095 = vlog2.pop %v5038
        %v5096 = vmul.f32 %v5095, 0.6931472
        %v5097 = vlog2.pop %v5039
        %v5098 = vmul.f32 %v5097, 0.6931472
        %v5099 = vlog2.pop %v5040
        %v5100 = vmul.f32 %v5099, 0.6931472
        %v5101 = vlog2.pop %v5041
        %v5102 = vmul.f32 %v5101, 0.6931472
        %v5103 = vlog2.pop %v5042
        %v5104 = vmul.f32 %v5103, 0.6931472
        %v5105 = vlog2.pop %v5043
        %v5106 = vmul.f32 %v5105, 0.6931472
        %v5107 = vlog2.pop %v5044
        %v5108 = vmul.f32 %v5107, 0.6931472
        %v5109 = vsel %vm4885, %v4791, %v5046
        %v5110 = vsel %vm4886, %v4793, %v5048
        %v5111 = vsel %vm4887, %v4797, %v5050
        %v5112 = vsel %vm4888, %v4799, %v5052
        %v5113 = vsel %vm4889, %v4803, %v5054
        %v5114 = vsel %vm4890, %v4805, %v5056
        %v5115 = vsel %vm4891, %v4809, %v5058
        %v5116 = vsel %vm4892, %v4811, %v5060
        %v5117 = vsel %vm4893, %v4815, %v5062
        %v5118 = vsel %vm4894, %v4817, %v5064
        %v5119 = vsel %vm4895, %v4821, %v5066
        %v5120 = vsel %vm4896, %v4823, %v5068
        %v5121 = vsel %vm4897, %v4827, %v5070
        %v5122 = vsel %vm4898, %v4829, %v5072
        %v5123 = vsel %vm4899, %v4833, %v5074
        %v5124 = vsel %vm4900, %v4835, %v5076
        %v5125 = vsel %vm4901, %v4839, %v5078
        %v5126 = vsel %vm4902, %v4841, %v5080
        %v5127 = vsel %vm4903, %v4845, %v5082
        %v5128 = vsel %vm4904, %v4847, %v5084
        %v5129 = vsel %vm4905, %v4851, %v5086
        %v5130 = vsel %vm4906, %v4853, %v5088
        %v5131 = vsel %vm4907, %v4857, %v5090
        %v5132 = vsel %vm4908, %v4859, %v5092
        %v5133 = vsel %vm4909, %v4863, %v5094
        %v5134 = vsel %vm4910, %v4865, %v5096
        %v5135 = vsel %vm4911, %v4869, %v5098
        %v5136 = vsel %vm4912, %v4871, %v5100
        %v5137 = vsel %vm4913, %v4875, %v5102
        %v5138 = vsel %vm4914, %v4877, %v5104
        %v5139 = vsel %vm4915, %v4881, %v5106
        %v5140 = vsel %vm4916, %v4883, %v5108
        %v5141 = vtanh.pop %v5109
        %v5142 = vtanh.pop %v5110
        %v5143 = vtanh.pop %v5111
        %v5144 = vtanh.pop %v5112
        %v5145 = vtanh.pop %v5113
        %v5146 = vtanh.pop %v5114
        %v5147 = vtanh.pop %v5115
        %v5148 = vtanh.pop %v5116
        %v5149 = vtanh.pop %v5117
        %v5150 = vtanh.pop %v5118
        %v5151 = vtanh.pop %v5119
        %v5152 = vtanh.pop %v5120
        %v5153 = vtanh.pop %v5121
        %v5154 = vtanh.pop %v5122
        %v5155 = vtanh.pop %v5123
        %v5156 = vtanh.pop %v5124
        %v5157 = vtanh.pop %v5125
        %v5158 = vtanh.pop %v5126
        %v5159 = vtanh.pop %v5127
        %v5160 = vtanh.pop %v5128
        %v5161 = vtanh.pop %v5129
        %v5162 = vtanh.pop %v5130
        %v5163 = vtanh.pop %v5131
        %v5164 = vtanh.pop %v5132
        %v5165 = vtanh.pop %v5133
        %v5166 = vtanh.pop %v5134
        %v5167 = vtanh.pop %v5135
        %v5168 = vtanh.pop %v5136
        %v5169 = vtanh.pop %v5137
        %v5170 = vtanh.pop %v5138
        %v5171 = vtanh.pop %v5139
        %v5172 = vtanh.pop %v5140
        %v5173 = vmul.f32 %v4791, %v5141
        %v5174 = vmul.f32 %v4793, %v5142
        %v5175 = vmul.f32 %v4797, %v5143
        %v5176 = vmul.f32 %v4799, %v5144
        %v5177 = vmul.f32 %v4803, %v5145
        %v5178 = vmul.f32 %v4805, %v5146
        %v5179 = vmul.f32 %v4809, %v5147
        %v5180 = vmul.f32 %v4811, %v5148
        %v5181 = vmul.f32 %v4815, %v5149
        %v5182 = vmul.f32 %v4817, %v5150
        %v5183 = vmul.f32 %v4821, %v5151
        %v5184 = vmul.f32 %v4823, %v5152
        %v5185 = vmul.f32 %v4827, %v5153
        %v5186 = vmul.f32 %v4829, %v5154
        %v5187 = vmul.f32 %v4833, %v5155
        %v5188 = vmul.f32 %v4835, %v5156
        %v5189 = vmul.f32 %v4839, %v5157
        %v5190 = vmul.f32 %v4841, %v5158
        %v5191 = vmul.f32 %v4845, %v5159
        %v5192 = vmul.f32 %v4847, %v5160
        %v5193 = vmul.f32 %v4851, %v5161
        %v5194 = vmul.f32 %v4853, %v5162
        %v5195 = vmul.f32 %v4857, %v5163
        %v5196 = vmul.f32 %v4859, %v5164
        %v5197 = vmul.f32 %v4863, %v5165
        %v5198 = vmul.f32 %v4865, %v5166
        %v5199 = vmul.f32 %v4869, %v5167
        %v5200 = vmul.f32 %v4871, %v5168
        %v5201 = vmul.f32 %v4875, %v5169
        %v5202 = vmul.f32 %v4877, %v5170
        %v5203 = vmul.f32 %v4881, %v5171
        %v5204 = vmul.f32 %v4883, %v5172
        %v5205 = vld [vmem:[#allocation11] sm:$0xff]
        %v5206 = vld [vmem:[#allocation11 + $0x8] sm:$0xff]
        %v5207 = vld [vmem:[#allocation11 + $0x10] sm:$0xff]
        %v5208 = vld [vmem:[#allocation11 + $0x18] sm:$0xff]
        %v5209 = vld [vmem:[#allocation11 + $0x20] sm:$0xff]
        %v5210 = vld [vmem:[#allocation11 + $0x28] sm:$0xff]
        %v5211 = vld [vmem:[#allocation11 + $0x30] sm:$0xff]
        %v5212 = vld [vmem:[#allocation11 + $0x38] sm:$0xff]
        %v5213 = vld [vmem:[#allocation11 + $0x40] sm:$0xff]
        %v5214 = vld [vmem:[#allocation11 + $0x48] sm:$0xff]
        %v5215 = vld [vmem:[#allocation11 + $0x50] sm:$0xff]
        %v5216 = vld [vmem:[#allocation11 + $0x58] sm:$0xff]
        %v5217 = vld [vmem:[#allocation11 + $0x60] sm:$0xff]
        %v5218 = vld [vmem:[#allocation11 + $0x68] sm:$0xff]
        %v5219 = vld [vmem:[#allocation11 + $0x70] sm:$0xff]
        %v5220 = vld [vmem:[#allocation11 + $0x78] sm:$0xff]
        %v5221 = vld [vmem:[#allocation11 + $0x80] sm:$0xff]
        %v5222 = vld [vmem:[#allocation11 + $0x88] sm:$0xff]
        %v5223 = vld [vmem:[#allocation11 + $0x90] sm:$0xff]
        %v5224 = vld [vmem:[#allocation11 + $0x98] sm:$0xff]
        %v5225 = vld [vmem:[#allocation11 + $0xa0] sm:$0xff]
        %v5226 = vld [vmem:[#allocation11 + $0xa8] sm:$0xff]
        %v5227 = vld [vmem:[#allocation11 + $0xb0] sm:$0xff]
        %v5228 = vld [vmem:[#allocation11 + $0xb8] sm:$0xff]
        %v5229 = vld [vmem:[#allocation11 + $0xc0] sm:$0xff]
        %v5230 = vld [vmem:[#allocation11 + $0xc8] sm:$0xff]
        %v5231 = vld [vmem:[#allocation11 + $0xd0] sm:$0xff]
        %v5232 = vld [vmem:[#allocation11 + $0xd8] sm:$0xff]
        %v5233 = vld [vmem:[#allocation11 + $0xe0] sm:$0xff]
        %v5234 = vld [vmem:[#allocation11 + $0xe8] sm:$0xff]
        %v5235 = vld [vmem:[#allocation11 + $0xf0] sm:$0xff]
        %v5236 = vld [vmem:[#allocation11 + $0xf8] sm:$0xff]
        %v5237 = vld [vmem:[%s13] sm:$0x1]
        %v5239 = vlaneseq
        %v5240 = vshrl.u32 %v5239, 7
        %v5241 = vsub.s32 0, %v5240
        %v5242 = vrot.slane %v5237, %v5241
        %5244 = vmatprep.subr.mxu0 0.0
        %5245 = vmatpush1.msra.mxu0 %v5205
        %5246 = vmatprep.subr.mxu0 0.0
        %5247 = vmatpush1.msra.mxu0 %v5206
        %5248 = vmatprep.subr.mxu0 0.0
        %5249 = vmatpush1.msra.mxu0 %v5207
        %5250 = vmatprep.subr.mxu0 0.0
        %5251 = vmatpush1.msra.mxu0 %v5208
        %5252 = vmatprep.subr.mxu0 0.0
        %5253 = vmatpush1.msra.mxu0 %v5209
        %5254 = vmatprep.subr.mxu0 0.0
        %5255 = vmatpush1.msra.mxu0 %v5210
        %5256 = vmatprep.subr.mxu0 0.0
        %5257 = vmatpush1.msra.mxu0 %v5211
        %5258 = vmatprep.subr.mxu0 0.0
        %5259 = vmatpush1.msra.mxu0 %v5212
        %5260 = vmatprep.subr.mxu0 0.0
        %5261 = vmatpush1.msra.mxu0 %v5213
        %5262 = vmatprep.subr.mxu0 0.0
        %5263 = vmatpush1.msra.mxu0 %v5214
        %5264 = vmatprep.subr.mxu0 0.0
        %5265 = vmatpush1.msra.mxu0 %v5215
        %5266 = vmatprep.subr.mxu0 0.0
        %5267 = vmatpush1.msra.mxu0 %v5216
        %5268 = vmatprep.subr.mxu0 0.0
        %5269 = vmatpush1.msra.mxu0 %v5217
        %5270 = vmatprep.subr.mxu0 0.0
        %5271 = vmatpush1.msra.mxu0 %v5218
        %5272 = vmatprep.subr.mxu0 0.0
        %5273 = vmatpush1.msra.mxu0 %v5219
        %5274 = vmatprep.subr.mxu0 0.0
        %5275 = vmatpush1.msra.mxu0 %v5220
        %5276 = vmatprep.subr.mxu0 0.0
        %5277 = vmatpush1.msra.mxu0 %v5221
        %5278 = vmatprep.subr.mxu0 0.0
        %5279 = vmatpush1.msra.mxu0 %v5222
        %5280 = vmatprep.subr.mxu0 0.0
        %5281 = vmatpush1.msra.mxu0 %v5223
        %5282 = vmatprep.subr.mxu0 0.0
        %5283 = vmatpush1.msra.mxu0 %v5224
        %5284 = vmatprep.subr.mxu0 0.0
        %5285 = vmatpush1.msra.mxu0 %v5225
        %5286 = vmatprep.subr.mxu0 0.0
        %5287 = vmatpush1.msra.mxu0 %v5226
        %5288 = vmatprep.subr.mxu0 0.0
        %5289 = vmatpush1.msra.mxu0 %v5227
        %5290 = vmatprep.subr.mxu0 0.0
        %5291 = vmatpush1.msra.mxu0 %v5228
        %5292 = vmatprep.subr.mxu0 0.0
        %5293 = vmatpush1.msra.mxu0 %v5229
        %5294 = vmatprep.subr.mxu0 0.0
        %5295 = vmatpush1.msra.mxu0 %v5230
        %5296 = vmatprep.subr.mxu0 0.0
        %5297 = vmatpush1.msra.mxu0 %v5231
        %5298 = vmatprep.subr.mxu0 0.0
        %5299 = vmatpush1.msra.mxu0 %v5232
        %5300 = vmatprep.subr.mxu0 0.0
        %5301 = vmatpush1.msra.mxu0 %v5233
        %5302 = vmatprep.subr.mxu0 0.0
        %5303 = vmatpush1.msra.mxu0 %v5234
        %5304 = vmatprep.subr.mxu0 0.0
        %5305 = vmatpush1.msra.mxu0 %v5235
        %5306 = vmatprep.subr.mxu0 0.0
        %5307 = vmatpush1.msra.mxu0 %v5236
        %5308 = vmatprep.mubr.f32.mxu0 %v5174
        %5309 = vmatmul.mubr.f32.gmra.mrb[0].mxu0 %v5173
        %v5310 = vpop.f32.mrb[0].mxu0
        %v5311 = vadd.f32 %v5242, %v5310
        %v5312 = vpop.f32.mrb[0].mxu0
        %5313 = vmatprep.mubr.f32.mxu0 %v5176
        %5314 = vmatmul.mubr.f32.gmra.mrb[0].mxu0 %v5175
        %v5315 = vpop.f32.mrb[0].mxu0
        %v5316 = vadd.f32 %v5242, %v5315
        %v5317 = vpop.f32.mrb[0].mxu0
        %5318 = vmatprep.mubr.f32.mxu0 %v5178
        %5319 = vmatmul.mubr.f32.gmra.mrb[0].mxu0 %v5177
        %v5320 = vpop.f32.mrb[0].mxu0
        %v5321 = vadd.f32 %v5242, %v5320
        %v5322 = vpop.f32.mrb[0].mxu0
        %5323 = vmatprep.mubr.f32.mxu0 %v5180
        %5324 = vmatmul.mubr.f32.gmra.mrb[0].mxu0 %v5179
        %v5325 = vpop.f32.mrb[0].mxu0
        %v5326 = vadd.f32 %v5242, %v5325
        %v5327 = vpop.f32.mrb[0].mxu0
        %5328 = vmatprep.mubr.f32.mxu0 %v5182
        %5329 = vmatmul.mubr.f32.gmra.mrb[0].mxu0 %v5181
        %v5330 = vpop.f32.mrb[0].mxu0
        %v5331 = vadd.f32 %v5242, %v5330
        %v5332 = vpop.f32.mrb[0].mxu0
        %5333 = vmatprep.mubr.f32.mxu0 %v5184
        %5334 = vmatmul.mubr.f32.gmra.mrb[0].mxu0 %v5183
        %v5335 = vpop.f32.mrb[0].mxu0
        %v5336 = vadd.f32 %v5242, %v5335
        %v5337 = vpop.f32.mrb[0].mxu0
        %5338 = vmatprep.mubr.f32.mxu0 %v5186
        %5339 = vmatmul.mubr.f32.gmra.mrb[0].mxu0 %v5185
        %v5340 = vpop.f32.mrb[0].mxu0
        %v5341 = vadd.f32 %v5242, %v5340
        %v5342 = vpop.f32.mrb[0].mxu0
        %5343 = vmatprep.mubr.f32.mxu0 %v5188
        %5344 = vmatmul.mubr.f32.gmra.mrb[0].mxu0 %v5187
        %v5345 = vpop.f32.mrb[0].mxu0
        %v5346 = vadd.f32 %v5242, %v5345
        %v5347 = vpop.f32.mrb[0].mxu0
        %5348 = vmatprep.mubr.f32.mxu0 %v5190
        %5349 = vmatmul.mubr.f32.gmra.mrb[0].mxu0 %v5189
        %v5350 = vpop.f32.mrb[0].mxu0
        %v5351 = vadd.f32 %v5242, %v5350
        %v5352 = vpop.f32.mrb[0].mxu0
        %5353 = vmatprep.mubr.f32.mxu0 %v5192
        %5354 = vmatmul.mubr.f32.gmra.mrb[0].mxu0 %v5191
        %v5355 = vpop.f32.mrb[0].mxu0
        %v5356 = vadd.f32 %v5242, %v5355
        %v5357 = vpop.f32.mrb[0].mxu0
        %5358 = vmatprep.mubr.f32.mxu0 %v5194
        %5359 = vmatmul.mubr.f32.gmra.mrb[0].mxu0 %v5193
        %v5360 = vpop.f32.mrb[0].mxu0
        %v5361 = vadd.f32 %v5242, %v5360
        %v5362 = vpop.f32.mrb[0].mxu0
        %5363 = vmatprep.mubr.f32.mxu0 %v5196
        %5364 = vmatmul.mubr.f32.gmra.mrb[0].mxu0 %v5195
        %v5365 = vpop.f32.mrb[0].mxu0
        %v5366 = vadd.f32 %v5242, %v5365
        %v5367 = vpop.f32.mrb[0].mxu0
        %5368 = vmatprep.mubr.f32.mxu0 %v5198
        %5369 = vmatmul.mubr.f32.gmra.mrb[0].mxu0 %v5197
        %v5370 = vpop.f32.mrb[0].mxu0
        %v5371 = vadd.f32 %v5242, %v5370
        %v5372 = vpop.f32.mrb[0].mxu0
        %5373 = vmatprep.mubr.f32.mxu0 %v5200
        %5374 = vmatmul.mubr.f32.gmra.mrb[0].mxu0 %v5199
        %v5375 = vpop.f32.mrb[0].mxu0
        %v5376 = vadd.f32 %v5242, %v5375
        %v5377 = vpop.f32.mrb[0].mxu0
        %5378 = vmatprep.mubr.f32.mxu0 %v5202
        %5379 = vmatmul.mubr.f32.gmra.mrb[0].mxu0 %v5201
        %v5380 = vpop.f32.mrb[0].mxu0
        %v5381 = vadd.f32 %v5242, %v5380
        %v5382 = vpop.f32.mrb[0].mxu0
        %5383 = vmatprep.mubr.f32.mxu0 %v5204
        %5384 = vmatmul.mubr.f32.gmra.mrb[0].mxu0 %v5203
        %v5385 = vpop.f32.mrb[0].mxu0
        %v5386 = vadd.f32 %v5242, %v5385
        %v5387 = vpop.f32.mrb[0].mxu0
        %5388 = vdwg.mxu0
        %v5389 = vadd.f32 %v4442, %v5311
        %v5390 = vadd.f32 %v4443, %v5316
        %v5391 = vadd.f32 %v4444, %v5321
        %v5392 = vadd.f32 %v4445, %v5326
        %v5393 = vadd.f32 %v4446, %v5331
        %v5394 = vadd.f32 %v4447, %v5336
        %v5395 = vadd.f32 %v4448, %v5341
        %v5396 = vadd.f32 %v4449, %v5346
        %v5397 = vadd.f32 %v4450, %v5351
        %v5398 = vadd.f32 %v4451, %v5356
        %v5399 = vadd.f32 %v4452, %v5361
        %v5400 = vadd.f32 %v4453, %v5366
        %v5401 = vadd.f32 %v4454, %v5371
        %v5402 = vadd.f32 %v4455, %v5376
        %v5403 = vadd.f32 %v4456, %v5381
        %v5404 = vadd.f32 %v4457, %v5386
        %5405 = vst [vmem:[%s567] sm:$0xff] %v5389
        %5406 = vst [vmem:[%s567 + $0x8] sm:$0xff] %v5390
        %5407 = vst [vmem:[%s567 + $0x10] sm:$0xff] %v5391
        %5408 = vst [vmem:[%s567 + $0x18] sm:$0xff] %v5392
        %5409 = vst [vmem:[%s567 + $0x20] sm:$0xff] %v5393
        %5410 = vst [vmem:[%s567 + $0x28] sm:$0xff] %v5394
        %5411 = vst [vmem:[%s567 + $0x30] sm:$0xff] %v5395
        %5412 = vst [vmem:[%s567 + $0x38] sm:$0xff] %v5396
        %5413 = vst [vmem:[%s567 + $0x40] sm:$0xff] %v5397
        %5414 = vst [vmem:[%s567 + $0x48] sm:$0xff] %v5398
        %5415 = vst [vmem:[%s567 + $0x50] sm:$0xff] %v5399
        %5416 = vst [vmem:[%s567 + $0x58] sm:$0xff] %v5400
        %5417 = vst [vmem:[%s567 + $0x60] sm:$0xff] %v5401
        %5418 = vst [vmem:[%s567 + $0x68] sm:$0xff] %v5402
        %5419 = vst [vmem:[%s567 + $0x70] sm:$0xff] %v5403
        %5420 = vst [vmem:[%s567 + $0x78] sm:$0xff] %v5404
        %s5421 = sand.u32 %s346, 1
        %s5422 = scalar_lea.sflag [#allocation4], %s5421
        %s5423 = sand.u32 %s346, 1
        %s5424 = smul.addr %s5423, 128
        %s5425 = scalar_lea.vmem [#allocation13], %s5424
        // Predicated region
        $region101: #{tpu_custom_call.1} parent=75 // pred_check
          %p5426 = pneg %p356
        $region102: #{tpu_custom_call.1} parent=75 // pred_check_branch
          %5428 = sbr.rel (%p5426) target = $region104
        $region103: #{tpu_custom_call.1} parent=75 // pred_region
          %s5430 = ssub.s32 2048, 2048
          %5431 = vsyncadd %s5422, %s5430
          %s5432 = smul.addr %s34, 16
          %s5433 = smul.addr %s5432, 128
          %s5434 = scalar_lea.hbm %s14, %s5433
          %s5435 = sshll.u32 %s5425, 4
          %s5436 = int_to_ptr.vmem [resolvable:$true] %s5435
          %5441 = dma.vmem_to_hbm [thread:$0]  %s5436, 2048, %s5434, %s5422, 128, 128, 8
        $region104: #{tpu_custom_call.1} parent=75 // pred_fallthru
          _
      $region76: #{tpu_custom_call.1} parent=5 // pred_fallthru
        _
      %p5442 = scmp.le.s32.totalorder 2, %s29
      // Predicated region
      $region105: #{tpu_custom_call.1} parent=5 // pred_check
        %p5443 = pneg %p5442
      $region106: #{tpu_custom_call.1} parent=5 // pred_check_branch
        %5445 = sbr.rel (%p5443) target = $region108
      $region107: #{tpu_custom_call.1} parent=5 // pred_region
        %s5446 = ssub.s32 %s29, 2
        // Predicated region
        $region109: #{tpu_custom_call.1} parent=107 // pred_check
          %p5447 = pneg %p362
        $region110: #{tpu_custom_call.1} parent=107 // pred_check_branch
          %5449 = sbr.rel (%p5447) target = $region112
        $region111: #{tpu_custom_call.1} parent=107 // pred_region
          %s5450 = sand.u32 %s347, 1
          %s5451 = scalar_lea.sflag [#allocation4], %s5450
          %s5452 = sand.u32 %s347, 1
          %s5453 = smul.addr %s5452, 128
          %s5454 = scalar_lea.vmem [#allocation13], %s5453
          %5455 = dma.done %s5451, 2048
        $region112: #{tpu_custom_call.1} parent=107 // pred_fallthru
          _
      $region108: #{tpu_custom_call.1} parent=5 // pred_fallthru
        _
    $region6: #{tpu_custom_call.1} parent=1 // loop_footer
      %s33 = sadd.s32 1, %s29
    $region7: #{tpu_custom_call.1} parent=1 // loop_footer_branch
      %28 = sbr.rel target = $region3
    $region8: #{tpu_custom_call.1} parent=1 // loop_exit
      _
    %5456 = vsyncpa [#allocation3], 1
    %s5457 = scalar_lea.sflag [#allocation3], 1
    %5458 = vsyncpa %s5457, 1
    %5459 = vsyncpa [#allocation6], 1
    %5460 = vsyncpa [#allocation9], 1
    %5461 = vsyncpa [#allocation12], 1
    %5462 = vsyncpa [#allocation4], 1
    %s5463 = scalar_lea.sflag [#allocation4], 1
    %5464 = vsyncpa %s5463, 1

</llo_original>
